<compile_context>
chip_gen: v6e
topology: v6e:2x2x1
jax: 0.10.0
libtpu: 0.0.40
codegen_flags: <defaults>
</compile_context>

<pallas_src>
import functools

import numpy as np
import jax
import jax.numpy as jnp
from jax.experimental import pallas as pl
from jax.experimental.pallas import tpu as pltpu

MAXPAD = 3          # halo of the largest kernel (7 // 2)
KM = 7              # merged kernel size
KTAPS = KM * KM     # 49 taps
KTAPS_PAD = 56      # weight rows padded to a sublane-tile multiple


def pegh_kernel(xpad_ref, w_ref, b_ref, mask_ref, out_ref, roll_ref, *, h, wp, hp):
    """Fused merged-7x7 depthwise conv + occupancy mask + residual (one C tile).

    Flattened channels-last layout: spatial (rows, wp) collapses onto the
    sublane axis (wp is a multiple of 8, so every slab slice below starts on a
    sublane-tile boundary); the channel tile rides the 128-lane axis.

    xpad_ref : (hp*wp, tc)  zero-padded dense grid, flattened (hp = h + 6)
    w_ref    : (56, tc)     merged 7x7 depthwise weights (rows 0..48 valid)
    b_ref    : (8, tc)      merged per-channel bias (row 0 valid)
    mask_ref : (h*wp, 1)    1.0 where the cell holds a point (full-channel sum != 0)
    out_ref  : (h*wp, tc)
    roll_ref : (hp*wp, tc)  VMEM scratch holding the column-shifted padded block
    """
    hwp = h * wp
    npad = hp * wp
    tc = out_ref.shape[-1]

    # Bias folded into the accumulator initializer: one broadcast total.
    acc = jnp.broadcast_to(b_ref[0, :], (hwp, tc))

    for j in range(KM):                       # column offset (outer loop)
        if j == 0:
            src = xpad_ref
        else:
            # One XLU sublane-rotation pass per column offset (6 total),
            # shared by all 7 row offsets of the inner loop.
            roll_ref[...] = pltpu.roll(xpad_ref[...], shift=npad - j, axis=0)
            src = roll_ref
        if j == MAXPAD:
            # The (3,3)-shifted window IS the un-padded dense grid (residual).
            # Stash it in the output VMEM block instead of keeping it live in
            # vregs across the remaining taps of the unroll.
            out_ref[...] = src[MAXPAD * wp: MAXPAD * wp + hwp, :]
        for i in range(KM):                   # row offset (inner loop)
            # i*wp is a multiple of 8 -> aligned sublane-tile read.
            slab = src[i * wp: i * wp + hwp, :]
            acc = acc + slab * w_ref[i * KM + j, :]

    # Zero the conv output at empty cells, add the original dense grid back.
    out_ref[...] = acc * mask_ref[...] + out_ref[...]


def _merge_depthwise_params(w3, w5, w7, b3, b5, b7):
    """Three same-padded, summed depthwise convs == one 7x7 depthwise conv."""
    C = w7.shape[-1]
    wm = w7.reshape(KM, KM, C)
    wm = wm.at[1:6, 1:6, :].add(w5.reshape(5, 5, C))   # 5x5 centered in the 7x7
    wm = wm.at[2:5, 2:5, :].add(w3.reshape(3, 3, C))   # 3x3 centered in the 7x7
    return wm.reshape(KTAPS, C), b3 + b5 + b7


def _vmem_limit_bytes(default=48 * 1024 * 1024):
    """Generation-aware VMEM budget: ~3/4 of physical VMEM, capped at 100 MiB."""
    try:
        cap = getattr(pltpu.get_tpu_info(), "vmem_capacity_bytes", None)
    except Exception:
        cap = None
    if not cap:
        return default          # safe for every generation (<= v7x's 64 MiB)
    return min(int(cap) * 3 // 4, 100 * 1024 * 1024)


def pegh_pallas_dense(x_pad_flat, maskf, w_m, b_m, *, H, W, Wp_al, c_tile=128):
    """Run the fused kernel on the padded, flattened, channels-last dense grid.

    x_pad_flat : ((H+6)*Wp_al, C)  zero-padded dense grid (flattened)
    maskf      : (H*Wp_al, 1)      occupancy mask
    returns    : (H*Wp_al, C)      mask*conv + residual (width-aligned layout)
    """
    Hp = H + 2 * MAXPAD
    hwp = H * Wp_al
    C = x_pad_flat.shape[-1]
    tc = min(c_tile, C)
    assert C % tc == 0, "channel dim must be a multiple of the channel tile"
    assert Wp_al % 8 == 0
    # Roll wrap-around safety: kept output columns never read wrapped data.
    assert Wp_al >= W + 2 * MAXPAD, "aligned width must cover the 7x7 halo"

    vmem_limit = _vmem_limit_bytes()
    # Per-grid-step VMEM estimate: padded grid (x2 buffers) + roll scratch
    # + output (x2 buffers) + weights/bias + mask (lane-padded (hwp,1) tiles).
    est = 4 * tc * (2 * Hp * Wp_al + Hp * Wp_al + 2 * hwp + KTAPS_PAD + 8) \
        + 2 * 512 * hwp
    xpad_spec = pl.BlockSpec((Hp * Wp_al, tc), lambda c: (0, c))
    if est > int(0.85 * vmem_limit):
        # Stopgap for mid-size grids: single-buffer the dominant input (the
        # kernel is several-x compute-bound over HBM, so the exposed DMA is
        # comparatively cheap).
        # TODO(synk): proper fix for very large extents is H-halo tiling (row
        # tiles with a 6-row overlap via manual DMA); not implemented here.
        xpad_spec = pl.BlockSpec((Hp * Wp_al, tc), lambda c: (0, c),
                                 pipeline_mode=pl.Buffered(1))

    kernel = functools.partial(pegh_kernel, h=H, wp=Wp_al, hp=Hp)
    return pl.pallas_call(
        kernel,
        out_shape=jax.ShapeDtypeStruct((hwp, C), jnp.float32),
        grid=(C // tc,),
        in_specs=[
            xpad_spec,                                        # padded grid
            pl.BlockSpec((KTAPS_PAD, tc), lambda c: (0, c)),  # merged weights
            pl.BlockSpec((8, tc),         lambda c: (0, c)),  # merged bias
            pl.BlockSpec((hwp, 1),        lambda c: (0, 0)),  # occupancy mask
        ],
        out_specs=pl.BlockSpec((hwp, tc), lambda c: (0, c)),
        scratch_shapes=[pltpu.VMEM((Hp * Wp_al, tc), jnp.float32)],
        compiler_params=pltpu.CompilerParams(
            dimension_semantics=("parallel",),    # v7x: 2 TCs split the C tiles
            vmem_limit_bytes=vmem_limit,
        ),
    )(x_pad_flat, w_m, b_m, maskf)


def pegh_forward(x, pos, w3, w5, w7, b3, b5, b7, *, c_tile=128):
    """Full PEGH forward: shift pos -> scatter -> fused kernel -> sparse gather.

    x   : (1, N, C) float32 point features
    pos : (N, 2)    integer coordinates
    Returns (x_out, out_flat, (H, W, Wp_al)) where
      x_out    : (1, N, C) occupied-cell features in (row, col) lexicographic
                 order (== .to_sparse(2).values())
      out_flat : (H*Wp_al, C) dense mask*conv + residual (width-aligned layout)
    """
    C = x.shape[-1]
    feats = jnp.asarray(x, dtype=jnp.float32).reshape(-1, C)          # (N, C)

    # NOTE: H, W are data-dependent (pos.max()), so each new extent recompiles.
    pos_np = np.asarray(pos)
    pos_np = pos_np - pos_np.min(axis=0)                    # pos - pos.min(0)[0]
    H = int(pos_np[:, 0].max()) + 1
    W = int(pos_np[:, 1].max()) + 1
    Hp = H + 2 * MAXPAD
    Wp_al = ((W + 2 * MAXPAD + 7) // 8) * 8                 # sublane-tile aligned
    hwp = H * Wp_al

    # Merged conv parameters, rows padded to sublane-tile-aligned counts.
    w_m, b_m = _merge_depthwise_params(w3, w5, w7, b3, b5, b7)
    w_m = jnp.pad(w_m, ((0, KTAPS_PAD - KTAPS), (0, 0)))
    b_m = jnp.pad(b_m, ((0, 8 - b_m.shape[0]), (0, 0)))

    # Scatter the point features DIRECTLY into the padded, width-aligned flat
    # buffer (duplicates sum, exactly like sparse_coo_tensor().to_dense()).
    pad_idx_np = (pos_np[:, 0] + MAXPAD) * Wp_al + (pos_np[:, 1] + MAXPAD)
    x_pad_flat = jnp.zeros((Hp * Wp_al, C), jnp.float32).at[
        jnp.asarray(pad_idx_np, dtype=jnp.int32)].add(feats)

    # Occupancy mask = (full-channel sum != 0), built from the N per-point
    # channel sums (no full dense-grid HBM reduction pass).
    out_idx_np = pos_np[:, 0] * Wp_al + pos_np[:, 1]
    cell_sum = jnp.zeros((hwp, 1), jnp.float32).at[
        jnp.asarray(out_idx_np, dtype=jnp.int32)].add(
            jnp.sum(feats, axis=-1, keepdims=True))
    maskf = (cell_sum != 0.0).astype(jnp.float32)

    out_flat = pegh_pallas_dense(x_pad_flat, maskf, w_m, b_m,
                                 H=H, W=W, Wp_al=Wp_al, c_tile=c_tile)

    # Gather occupied cells straight from the flat output in (row, col)
    # lexicographic order — what .to_sparse(2).values() returns.
    # TODO(synk): to_sparse(2) would additionally drop cells whose output row is
    # exactly all-zero (data-dependent output length); not replicated here.
    order = np.lexsort((pos_np[:, 1], pos_np[:, 0]))
    gather_idx = jnp.asarray(out_idx_np[order], dtype=jnp.int32)
    x_out = out_flat[gather_idx][None]                               # (1, N, C)
    return x_out, out_flat, (H, W, Wp_al)


def pegh_reference(x_dense, w3, w5, w7, b3, b5, b7):
    """Pure-JAX reference with the ORIGINAL (un-merged) 3-conv semantics."""
    H, W, C = x_dense.shape
    x_pad = jnp.pad(x_dense, ((MAXPAD, MAXPAD), (MAXPAD, MAXPAD), (0, 0)))
    acc = jnp.zeros((H, W, C), jnp.float32)
    for K, w, b in ((3, w3, b3), (5, w5, b5), (7, w7, b7)):
        off = MAXPAD - K // 2
        for i in range(K):
            for j in range(K):
                acc = acc + x_pad[off + i: off + i + H,
                                  off + j: off + j + W, :] * w[i * K + j, :]
        acc = acc + b[0, :]
    mask = jnp.sum(x_dense, axis=-1, keepdims=True) != 0.0
    return jnp.where(mask, acc, 0.0) + x_dense


if __name__ == "__main__":
    # ---- small, deterministic problem -------------------------------------
    DIM = 256   # channels (PyTorch default 512; reduced, still >= 2 channel tiles)
    N = 8       # number of sparse points
    GRID = 8    # spatial extent of the (shifted) position grid

    key = jax.random.PRNGKey(0)
    k_x, k_pos, k_w3, k_w5, k_w7, k_b3, k_b5, k_b7 = jax.random.split(key, 8)

    # x: (1, N, DIM) point features;  pos: (N, 2) integer coordinates (unique)
    x = jax.random.normal(k_x, (1, N, DIM), dtype=jnp.float32)
    flat = jax.random.choice(k_pos, GRID * GRID, shape=(N,), replace=False)
    pos = jnp.stack([flat // GRID, flat % GRID], axis=-1).astype(jnp.int32)

    # depthwise-conv parameters (shapes match nn.Conv2d(dim, dim, K, groups=dim))
    w3 = 0.05 * jax.random.normal(k_w3, (3 * 3, DIM), dtype=jnp.float32)
    w5 = 0.05 * jax.random.normal(k_w5, (5 * 5, DIM), dtype=jnp.float32)
    w7 = 0.05 * jax.random.normal(k_w7, (7 * 7, DIM), dtype=jnp.float32)
    b3 = 0.01 * jax.random.normal(k_b3, (1, DIM), dtype=jnp.float32)
    b5 = 0.01 * jax.random.normal(k_b5, (1, DIM), dtype=jnp.float32)
    b7 = 0.01 * jax.random.normal(k_b7, (1, DIM), dtype=jnp.float32)

    # ---- Pallas forward (scatter -> fused kernel -> gather) ---------------
    x_out, out_flat, (H, W, Wp_al) = pegh_forward(x, pos, w3, w5, w7, b3, b5, b7)
    x_out = jax.block_until_ready(x_out)

    # ---- validate against a pure-JAX reference of the original module -----
    pos_np = np.asarray(pos)
    pos_np = pos_np - pos_np.min(axis=0)
    x_dense = jnp.zeros((H, W, DIM), jnp.float32).at[
        pos_np[:, 0], pos_np[:, 1]].add(x[0])               # duplicates sum (COO)
    ref_dense = np.asarray(pegh_reference(x_dense, w3, w5, w7, b3, b5, b7))

    # dense grid (conv merge reorders FP adds -> tiny diffs)
    out_dense = np.asarray(out_flat).reshape(H, Wp_al, DIM)[:, :W, :]
    np.testing.assert_allclose(out_dense, ref_dense, rtol=1e-4, atol=1e-5)

    # gathered sparse values (the module's actual output, lexicographic order)
    order = np.lexsort((pos_np[:, 1], pos_np[:, 0]))
    sorted_pos = pos_np[order]
    ref_out = ref_dense[sorted_pos[:, 0], sorted_pos[:, 1], :][None]
    np.testing.assert_allclose(np.asarray(x_out), ref_out, rtol=1e-4, atol=1e-5)

    assert x_out.shape == (1, N, DIM)
    print("KERNEL_OK")
</pallas_src>

<mosaic_0001>
module attributes {stable_mosaic.version = 11 : i64} {
  func.func @pegh_kernel(%arg0: i32, %arg1: memref<224x128xf32, #tpu.memory_space<vmem>>, %arg2: memref<56x128xf32, #tpu.memory_space<vmem>>, %arg3: memref<8x128xf32, #tpu.memory_space<vmem>>, %arg4: memref<128x1xf32, #tpu.memory_space<vmem>>, %arg5: memref<128x128xf32, #tpu.memory_space<vmem>>, %arg6: memref<224x128xf32, #tpu.memory_space<vmem>>) attributes {dimension_semantics = [#tpu.dimension_semantics<parallel>], iteration_bounds = array<i64: 2>, scalar_prefetch = 0 : i64, scratch_operands = 1 : i64, tpu.core_type = #tpu.core_type<tc>, window_params = [{transform_indices = @transform_0, window_bounds = array<i64: 224, 128>}, {transform_indices = @transform_1, window_bounds = array<i64: 56, 128>}, {transform_indices = @transform_2, window_bounds = array<i64: 8, 128>}, {pipeline_mode = #tpu.pipeline_mode<synchronous>, transform_indices = @transform_3, window_bounds = array<i64: 128, 1>}, {transform_indices = @transform_4, window_bounds = array<i64: 128, 128>}]} {
    %c0 = arith.constant 0 : index
    %c0_0 = arith.constant 0 : index
    %0 = vector.load %arg3[%c0, %c0_0] : memref<8x128xf32, #tpu.memory_space<vmem>>, vector<1x128xf32>
    %1 = vector.shape_cast %0 : vector<1x128xf32> to vector<128xf32>
    %2 = vector.shape_cast %1 : vector<128xf32> to vector<1x128xf32>
    %3 = vector.broadcast %2 : vector<1x128xf32> to vector<128x128xf32>
    %c0_1 = arith.constant 0 : index
    %c0_2 = arith.constant 0 : index
    %4 = vector.load %arg1[%c0_1, %c0_2] : memref<224x128xf32, #tpu.memory_space<vmem>>, vector<128x128xf32>
    %c0_3 = arith.constant 0 : index
    %c0_4 = arith.constant 0 : index
    %5 = vector.load %arg2[%c0_3, %c0_4] : memref<56x128xf32, #tpu.memory_space<vmem>>, vector<1x128xf32>
    %6 = vector.shape_cast %5 : vector<1x128xf32> to vector<128xf32>
    %7 = vector.shape_cast %6 : vector<128xf32> to vector<1x128xf32>
    %8 = vector.broadcast %7 : vector<1x128xf32> to vector<128x128xf32>
    %9 = arith.mulf %4, %8 : vector<128x128xf32>
    %10 = arith.addf %3, %9 : vector<128x128xf32>
    %c16 = arith.constant 16 : index
    %c0_5 = arith.constant 0 : index
    %11 = vector.load %arg1[%c16, %c0_5] : memref<224x128xf32, #tpu.memory_space<vmem>>, vector<128x128xf32>
    %c7 = arith.constant 7 : index
    %c0_6 = arith.constant 0 : index
    %12 = vector.load %arg2[%c7, %c0_6] : memref<56x128xf32, #tpu.memory_space<vmem>>, vector<1x128xf32>
    %13 = vector.shape_cast %12 : vector<1x128xf32> to vector<128xf32>
    %14 = vector.shape_cast %13 : vector<128xf32> to vector<1x128xf32>
    %15 = vector.broadcast %14 : vector<1x128xf32> to vector<128x128xf32>
    %16 = arith.mulf %11, %15 : vector<128x128xf32>
    %17 = arith.addf %10, %16 : vector<128x128xf32>
    %c32 = arith.constant 32 : index
    %c0_7 = arith.constant 0 : index
    %18 = vector.load %arg1[%c32, %c0_7] : memref<224x128xf32, #tpu.memory_space<vmem>>, vector<128x128xf32>
    %c14 = arith.constant 14 : index
    %c0_8 = arith.constant 0 : index
    %19 = vector.load %arg2[%c14, %c0_8] : memref<56x128xf32, #tpu.memory_space<vmem>>, vector<1x128xf32>
    %20 = vector.shape_cast %19 : vector<1x128xf32> to vector<128xf32>
    %21 = vector.shape_cast %20 : vector<128xf32> to vector<1x128xf32>
    %22 = vector.broadcast %21 : vector<1x128xf32> to vector<128x128xf32>
    %23 = arith.mulf %18, %22 : vector<128x128xf32>
    %24 = arith.addf %17, %23 : vector<128x128xf32>
    %c48 = arith.constant 48 : index
    %c0_9 = arith.constant 0 : index
    %25 = vector.load %arg1[%c48, %c0_9] : memref<224x128xf32, #tpu.memory_space<vmem>>, vector<128x128xf32>
    %c21 = arith.constant 21 : index
    %c0_10 = arith.constant 0 : index
    %26 = vector.load %arg2[%c21, %c0_10] : memref<56x128xf32, #tpu.memory_space<vmem>>, vector<1x128xf32>
    %27 = vector.shape_cast %26 : vector<1x128xf32> to vector<128xf32>
    %28 = vector.shape_cast %27 : vector<128xf32> to vector<1x128xf32>
    %29 = vector.broadcast %28 : vector<1x128xf32> to vector<128x128xf32>
    %30 = arith.mulf %25, %29 : vector<128x128xf32>
    %31 = arith.addf %24, %30 : vector<128x128xf32>
    %c64 = arith.constant 64 : index
    %c0_11 = arith.constant 0 : index
    %32 = vector.load %arg1[%c64, %c0_11] : memref<224x128xf32, #tpu.memory_space<vmem>>, vector<128x128xf32>
    %c28 = arith.constant 28 : index
    %c0_12 = arith.constant 0 : index
    %33 = vector.load %arg2[%c28, %c0_12] : memref<56x128xf32, #tpu.memory_space<vmem>>, vector<1x128xf32>
    %34 = vector.shape_cast %33 : vector<1x128xf32> to vector<128xf32>
    %35 = vector.shape_cast %34 : vector<128xf32> to vector<1x128xf32>
    %36 = vector.broadcast %35 : vector<1x128xf32> to vector<128x128xf32>
    %37 = arith.mulf %32, %36 : vector<128x128xf32>
    %38 = arith.addf %31, %37 : vector<128x128xf32>
    %c80 = arith.constant 80 : index
    %c0_13 = arith.constant 0 : index
    %39 = vector.load %arg1[%c80, %c0_13] : memref<224x128xf32, #tpu.memory_space<vmem>>, vector<128x128xf32>
    %c35 = arith.constant 35 : index
    %c0_14 = arith.constant 0 : index
    %40 = vector.load %arg2[%c35, %c0_14] : memref<56x128xf32, #tpu.memory_space<vmem>>, vector<1x128xf32>
    %41 = vector.shape_cast %40 : vector<1x128xf32> to vector<128xf32>
    %42 = vector.shape_cast %41 : vector<128xf32> to vector<1x128xf32>
    %43 = vector.broadcast %42 : vector<1x128xf32> to vector<128x128xf32>
    %44 = arith.mulf %39, %43 : vector<128x128xf32>
    %45 = arith.addf %38, %44 : vector<128x128xf32>
    %c96 = arith.constant 96 : index
    %c0_15 = arith.constant 0 : index
    %46 = vector.load %arg1[%c96, %c0_15] : memref<224x128xf32, #tpu.memory_space<vmem>>, vector<128x128xf32>
    %c42 = arith.constant 42 : index
    %c0_16 = arith.constant 0 : index
    %47 = vector.load %arg2[%c42, %c0_16] : memref<56x128xf32, #tpu.memory_space<vmem>>, vector<1x128xf32>
    %48 = vector.shape_cast %47 : vector<1x128xf32> to vector<128xf32>
    %49 = vector.shape_cast %48 : vector<128xf32> to vector<1x128xf32>
    %50 = vector.broadcast %49 : vector<1x128xf32> to vector<128x128xf32>
    %51 = arith.mulf %46, %50 : vector<128x128xf32>
    %52 = arith.addf %45, %51 : vector<128x128xf32>
    %c0_17 = arith.constant 0 : index
    %c0_18 = arith.constant 0 : index
    %53 = vector.load %arg1[%c0_17, %c0_18] : memref<224x128xf32, #tpu.memory_space<vmem>>, vector<224x128xf32>
    %c223_i32 = arith.constant 223 : i32
    %54 = tpu.dynamic_rotate %53 by %c223_i32 dim 0 : vector<224x128xf32>, i32 -> vector<224x128xf32>
    %c0_19 = arith.constant 0 : index
    %c0_20 = arith.constant 0 : index
    %55 = vector.load %arg6[%c0_19, %c0_20] : memref<224x128xf32, #tpu.memory_space<vmem>>, vector<224x128xf32>
    tpu.vector_store %arg6[%c0_19, %c0_20], %54 {strides = array<i32>} : memref<224x128xf32, #tpu.memory_space<vmem>>, vector<224x128xf32>,
    %c0_21 = arith.constant 0 : index
    %c0_22 = arith.constant 0 : index
    %56 = vector.load %arg6[%c0_21, %c0_22] : memref<224x128xf32, #tpu.memory_space<vmem>>, vector<128x128xf32>
    %c1 = arith.constant 1 : index
    %c0_23 = arith.constant 0 : index
    %57 = vector.load %arg2[%c1, %c0_23] : memref<56x128xf32, #tpu.memory_space<vmem>>, vector<1x128xf32>
    %58 = vector.shape_cast %57 : vector<1x128xf32> to vector<128xf32>
    %59 = vector.shape_cast %58 : vector<128xf32> to vector<1x128xf32>
    %60 = vector.broadcast %59 : vector<1x128xf32> to vector<128x128xf32>
    %61 = arith.mulf %56, %60 : vector<128x128xf32>
    %62 = arith.addf %52, %61 : vector<128x128xf32>
    %c16_24 = arith.constant 16 : index
    %c0_25 = arith.constant 0 : index
    %63 = vector.load %arg6[%c16_24, %c0_25] : memref<224x128xf32, #tpu.memory_space<vmem>>, vector<128x128xf32>
    %c8 = arith.constant 8 : index
    %c0_26 = arith.constant 0 : index
    %64 = vector.load %arg2[%c8, %c0_26] : memref<56x128xf32, #tpu.memory_space<vmem>>, vector<1x128xf32>
    %65 = vector.shape_cast %64 : vector<1x128xf32> to vector<128xf32>
    %66 = vector.shape_cast %65 : vector<128xf32> to vector<1x128xf32>
    %67 = vector.broadcast %66 : vector<1x128xf32> to vector<128x128xf32>
    %68 = arith.mulf %63, %67 : vector<128x128xf32>
    %69 = arith.addf %62, %68 : vector<128x128xf32>
    %c32_27 = arith.constant 32 : index
    %c0_28 = arith.constant 0 : index
    %70 = vector.load %arg6[%c32_27, %c0_28] : memref<224x128xf32, #tpu.memory_space<vmem>>, vector<128x128xf32>
    %c15 = arith.constant 15 : index
    %c0_29 = arith.constant 0 : index
    %71 = vector.load %arg2[%c15, %c0_29] : memref<56x128xf32, #tpu.memory_space<vmem>>, vector<1x128xf32>
    %72 = vector.shape_cast %71 : vector<1x128xf32> to vector<128xf32>
    %73 = vector.shape_cast %72 : vector<128xf32> to vector<1x128xf32>
    %74 = vector.broadcast %73 : vector<1x128xf32> to vector<128x128xf32>
    %75 = arith.mulf %70, %74 : vector<128x128xf32>
    %76 = arith.addf %69, %75 : vector<128x128xf32>
    %c48_30 = arith.constant 48 : index
    %c0_31 = arith.constant 0 : index
    %77 = vector.load %arg6[%c48_30, %c0_31] : memref<224x128xf32, #tpu.memory_space<vmem>>, vector<128x128xf32>
    %c22 = arith.constant 22 : index
    %c0_32 = arith.constant 0 : index
    %78 = vector.load %arg2[%c22, %c0_32] : memref<56x128xf32, #tpu.memory_space<vmem>>, vector<1x128xf32>
    %79 = vector.shape_cast %78 : vector<1x128xf32> to vector<128xf32>
    %80 = vector.shape_cast %79 : vector<128xf32> to vector<1x128xf32>
    %81 = vector.broadcast %80 : vector<1x128xf32> to vector<128x128xf32>
    %82 = arith.mulf %77, %81 : vector<128x128xf32>
    %83 = arith.addf %76, %82 : vector<128x128xf32>
    %c64_33 = arith.constant 64 : index
    %c0_34 = arith.constant 0 : index
    %84 = vector.load %arg6[%c64_33, %c0_34] : memref<224x128xf32, #tpu.memory_space<vmem>>, vector<128x128xf32>
    %c29 = arith.constant 29 : index
    %c0_35 = arith.constant 0 : index
    %85 = vector.load %arg2[%c29, %c0_35] : memref<56x128xf32, #tpu.memory_space<vmem>>, vector<1x128xf32>
    %86 = vector.shape_cast %85 : vector<1x128xf32> to vector<128xf32>
    %87 = vector.shape_cast %86 : vector<128xf32> to vector<1x128xf32>
    %88 = vector.broadcast %87 : vector<1x128xf32> to vector<128x128xf32>
    %89 = arith.mulf %84, %88 : vector<128x128xf32>
    %90 = arith.addf %83, %89 : vector<128x128xf32>
    %c80_36 = arith.constant 80 : index
    %c0_37 = arith.constant 0 : index
    %91 = vector.load %arg6[%c80_36, %c0_37] : memref<224x128xf32, #tpu.memory_space<vmem>>, vector<128x128xf32>
    %c36 = arith.constant 36 : index
    %c0_38 = arith.constant 0 : index
    %92 = vector.load %arg2[%c36, %c0_38] : memref<56x128xf32, #tpu.memory_space<vmem>>, vector<1x128xf32>
    %93 = vector.shape_cast %92 : vector<1x128xf32> to vector<128xf32>
    %94 = vector.shape_cast %93 : vector<128xf32> to vector<1x128xf32>
    %95 = vector.broadcast %94 : vector<1x128xf32> to vector<128x128xf32>
    %96 = arith.mulf %91, %95 : vector<128x128xf32>
    %97 = arith.addf %90, %96 : vector<128x128xf32>
    %c96_39 = arith.constant 96 : index
    %c0_40 = arith.constant 0 : index
    %98 = vector.load %arg6[%c96_39, %c0_40] : memref<224x128xf32, #tpu.memory_space<vmem>>, vector<128x128xf32>
    %c43 = arith.constant 43 : index
    %c0_41 = arith.constant 0 : index
    %99 = vector.load %arg2[%c43, %c0_41] : memref<56x128xf32, #tpu.memory_space<vmem>>, vector<1x128xf32>
    %100 = vector.shape_cast %99 : vector<1x128xf32> to vector<128xf32>
    %101 = vector.shape_cast %100 : vector<128xf32> to vector<1x128xf32>
    %102 = vector.broadcast %101 : vector<1x128xf32> to vector<128x128xf32>
    %103 = arith.mulf %98, %102 : vector<128x128xf32>
    %104 = arith.addf %97, %103 : vector<128x128xf32>
    %c0_42 = arith.constant 0 : index
    %c0_43 = arith.constant 0 : index
    %105 = vector.load %arg1[%c0_42, %c0_43] : memref<224x128xf32, #tpu.memory_space<vmem>>, vector<224x128xf32>
    %c222_i32 = arith.constant 222 : i32
    %106 = tpu.dynamic_rotate %105 by %c222_i32 dim 0 : vector<224x128xf32>, i32 -> vector<224x128xf32>
    %c0_44 = arith.constant 0 : index
    %c0_45 = arith.constant 0 : index
    %107 = vector.load %arg6[%c0_44, %c0_45] : memref<224x128xf32, #tpu.memory_space<vmem>>, vector<224x128xf32>
    tpu.vector_store %arg6[%c0_44, %c0_45], %106 {strides = array<i32>} : memref<224x128xf32, #tpu.memory_space<vmem>>, vector<224x128xf32>,
    %c0_46 = arith.constant 0 : index
    %c0_47 = arith.constant 0 : index
    %108 = vector.load %arg6[%c0_46, %c0_47] : memref<224x128xf32, #tpu.memory_space<vmem>>, vector<128x128xf32>
    %c2 = arith.constant 2 : index
    %c0_48 = arith.constant 0 : index
    %109 = vector.load %arg2[%c2, %c0_48] : memref<56x128xf32, #tpu.memory_space<vmem>>, vector<1x128xf32>
    %110 = vector.shape_cast %109 : vector<1x128xf32> to vector<128xf32>
    %111 = vector.shape_cast %110 : vector<128xf32> to vector<1x128xf32>
    %112 = vector.broadcast %111 : vector<1x128xf32> to vector<128x128xf32>
    %113 = arith.mulf %108, %112 : vector<128x128xf32>
    %114 = arith.addf %104, %113 : vector<128x128xf32>
    %c16_49 = arith.constant 16 : index
    %c0_50 = arith.constant 0 : index
    %115 = vector.load %arg6[%c16_49, %c0_50] : memref<224x128xf32, #tpu.memory_space<vmem>>, vector<128x128xf32>
    %c9 = arith.constant 9 : index
    %c0_51 = arith.constant 0 : index
    %116 = vector.load %arg2[%c9, %c0_51] : memref<56x128xf32, #tpu.memory_space<vmem>>, vector<1x128xf32>
    %117 = vector.shape_cast %116 : vector<1x128xf32> to vector<128xf32>
    %118 = vector.shape_cast %117 : vector<128xf32> to vector<1x128xf32>
    %119 = vector.broadcast %118 : vector<1x128xf32> to vector<128x128xf32>
    %120 = arith.mulf %115, %119 : vector<128x128xf32>
    %121 = arith.addf %114, %120 : vector<128x128xf32>
    %c32_52 = arith.constant 32 : index
    %c0_53 = arith.constant 0 : index
    %122 = vector.load %arg6[%c32_52, %c0_53] : memref<224x128xf32, #tpu.memory_space<vmem>>, vector<128x128xf32>
    %c16_54 = arith.constant 16 : index
    %c0_55 = arith.constant 0 : index
    %123 = vector.load %arg2[%c16_54, %c0_55] : memref<56x128xf32, #tpu.memory_space<vmem>>, vector<1x128xf32>
    %124 = vector.shape_cast %123 : vector<1x128xf32> to vector<128xf32>
    %125 = vector.shape_cast %124 : vector<128xf32> to vector<1x128xf32>
    %126 = vector.broadcast %125 : vector<1x128xf32> to vector<128x128xf32>
    %127 = arith.mulf %122, %126 : vector<128x128xf32>
    %128 = arith.addf %121, %127 : vector<128x128xf32>
    %c48_56 = arith.constant 48 : index
    %c0_57 = arith.constant 0 : index
    %129 = vector.load %arg6[%c48_56, %c0_57] : memref<224x128xf32, #tpu.memory_space<vmem>>, vector<128x128xf32>
    %c23 = arith.constant 23 : index
    %c0_58 = arith.constant 0 : index
    %130 = vector.load %arg2[%c23, %c0_58] : memref<56x128xf32, #tpu.memory_space<vmem>>, vector<1x128xf32>
    %131 = vector.shape_cast %130 : vector<1x128xf32> to vector<128xf32>
    %132 = vector.shape_cast %131 : vector<128xf32> to vector<1x128xf32>
    %133 = vector.broadcast %132 : vector<1x128xf32> to vector<128x128xf32>
    %134 = arith.mulf %129, %133 : vector<128x128xf32>
    %135 = arith.addf %128, %134 : vector<128x128xf32>
    %c64_59 = arith.constant 64 : index
    %c0_60 = arith.constant 0 : index
    %136 = vector.load %arg6[%c64_59, %c0_60] : memref<224x128xf32, #tpu.memory_space<vmem>>, vector<128x128xf32>
    %c30 = arith.constant 30 : index
    %c0_61 = arith.constant 0 : index
    %137 = vector.load %arg2[%c30, %c0_61] : memref<56x128xf32, #tpu.memory_space<vmem>>, vector<1x128xf32>
    %138 = vector.shape_cast %137 : vector<1x128xf32> to vector<128xf32>
    %139 = vector.shape_cast %138 : vector<128xf32> to vector<1x128xf32>
    %140 = vector.broadcast %139 : vector<1x128xf32> to vector<128x128xf32>
    %141 = arith.mulf %136, %140 : vector<128x128xf32>
    %142 = arith.addf %135, %141 : vector<128x128xf32>
    %c80_62 = arith.constant 80 : index
    %c0_63 = arith.constant 0 : index
    %143 = vector.load %arg6[%c80_62, %c0_63] : memref<224x128xf32, #tpu.memory_space<vmem>>, vector<128x128xf32>
    %c37 = arith.constant 37 : index
    %c0_64 = arith.constant 0 : index
    %144 = vector.load %arg2[%c37, %c0_64] : memref<56x128xf32, #tpu.memory_space<vmem>>, vector<1x128xf32>
    %145 = vector.shape_cast %144 : vector<1x128xf32> to vector<128xf32>
    %146 = vector.shape_cast %145 : vector<128xf32> to vector<1x128xf32>
    %147 = vector.broadcast %146 : vector<1x128xf32> to vector<128x128xf32>
    %148 = arith.mulf %143, %147 : vector<128x128xf32>
    %149 = arith.addf %142, %148 : vector<128x128xf32>
    %c96_65 = arith.constant 96 : index
    %c0_66 = arith.constant 0 : index
    %150 = vector.load %arg6[%c96_65, %c0_66] : memref<224x128xf32, #tpu.memory_space<vmem>>, vector<128x128xf32>
    %c44 = arith.constant 44 : index
    %c0_67 = arith.constant 0 : index
    %151 = vector.load %arg2[%c44, %c0_67] : memref<56x128xf32, #tpu.memory_space<vmem>>, vector<1x128xf32>
    %152 = vector.shape_cast %151 : vector<1x128xf32> to vector<128xf32>
    %153 = vector.shape_cast %152 : vector<128xf32> to vector<1x128xf32>
    %154 = vector.broadcast %153 : vector<1x128xf32> to vector<128x128xf32>
    %155 = arith.mulf %150, %154 : vector<128x128xf32>
    %156 = arith.addf %149, %155 : vector<128x128xf32>
    %c0_68 = arith.constant 0 : index
    %c0_69 = arith.constant 0 : index
    %157 = vector.load %arg1[%c0_68, %c0_69] : memref<224x128xf32, #tpu.memory_space<vmem>>, vector<224x128xf32>
    %c221_i32 = arith.constant 221 : i32
    %158 = tpu.dynamic_rotate %157 by %c221_i32 dim 0 : vector<224x128xf32>, i32 -> vector<224x128xf32>
    %c0_70 = arith.constant 0 : index
    %c0_71 = arith.constant 0 : index
    %159 = vector.load %arg6[%c0_70, %c0_71] : memref<224x128xf32, #tpu.memory_space<vmem>>, vector<224x128xf32>
    tpu.vector_store %arg6[%c0_70, %c0_71], %158 {strides = array<i32>} : memref<224x128xf32, #tpu.memory_space<vmem>>, vector<224x128xf32>,
    %c48_72 = arith.constant 48 : index
    %c0_73 = arith.constant 0 : index
    %160 = vector.load %arg6[%c48_72, %c0_73] : memref<224x128xf32, #tpu.memory_space<vmem>>, vector<128x128xf32>
    %c0_74 = arith.constant 0 : index
    %c0_75 = arith.constant 0 : index
    %161 = vector.load %arg5[%c0_74, %c0_75] : memref<128x128xf32, #tpu.memory_space<vmem>>, vector<128x128xf32>
    tpu.vector_store %arg5[%c0_74, %c0_75], %160 {strides = array<i32>} : memref<128x128xf32, #tpu.memory_space<vmem>>, vector<128x128xf32>,
    %c0_76 = arith.constant 0 : index
    %c0_77 = arith.constant 0 : index
    %162 = vector.load %arg6[%c0_76, %c0_77] : memref<224x128xf32, #tpu.memory_space<vmem>>, vector<128x128xf32>
    %c3 = arith.constant 3 : index
    %c0_78 = arith.constant 0 : index
    %163 = vector.load %arg2[%c3, %c0_78] : memref<56x128xf32, #tpu.memory_space<vmem>>, vector<1x128xf32>
    %164 = vector.shape_cast %163 : vector<1x128xf32> to vector<128xf32>
    %165 = vector.shape_cast %164 : vector<128xf32> to vector<1x128xf32>
    %166 = vector.broadcast %165 : vector<1x128xf32> to vector<128x128xf32>
    %167 = arith.mulf %162, %166 : vector<128x128xf32>
    %168 = arith.addf %156, %167 : vector<128x128xf32>
    %c16_79 = arith.constant 16 : index
    %c0_80 = arith.constant 0 : index
    %169 = vector.load %arg6[%c16_79, %c0_80] : memref<224x128xf32, #tpu.memory_space<vmem>>, vector<128x128xf32>
    %c10 = arith.constant 10 : index
    %c0_81 = arith.constant 0 : index
    %170 = vector.load %arg2[%c10, %c0_81] : memref<56x128xf32, #tpu.memory_space<vmem>>, vector<1x128xf32>
    %171 = vector.shape_cast %170 : vector<1x128xf32> to vector<128xf32>
    %172 = vector.shape_cast %171 : vector<128xf32> to vector<1x128xf32>
    %173 = vector.broadcast %172 : vector<1x128xf32> to vector<128x128xf32>
    %174 = arith.mulf %169, %173 : vector<128x128xf32>
    %175 = arith.addf %168, %174 : vector<128x128xf32>
    %c32_82 = arith.constant 32 : index
    %c0_83 = arith.constant 0 : index
    %176 = vector.load %arg6[%c32_82, %c0_83] : memref<224x128xf32, #tpu.memory_space<vmem>>, vector<128x128xf32>
    %c17 = arith.constant 17 : index
    %c0_84 = arith.constant 0 : index
    %177 = vector.load %arg2[%c17, %c0_84] : memref<56x128xf32, #tpu.memory_space<vmem>>, vector<1x128xf32>
    %178 = vector.shape_cast %177 : vector<1x128xf32> to vector<128xf32>
    %179 = vector.shape_cast %178 : vector<128xf32> to vector<1x128xf32>
    %180 = vector.broadcast %179 : vector<1x128xf32> to vector<128x128xf32>
    %181 = arith.mulf %176, %180 : vector<128x128xf32>
    %182 = arith.addf %175, %181 : vector<128x128xf32>
    %c48_85 = arith.constant 48 : index
    %c0_86 = arith.constant 0 : index
    %183 = vector.load %arg6[%c48_85, %c0_86] : memref<224x128xf32, #tpu.memory_space<vmem>>, vector<128x128xf32>
    %c24 = arith.constant 24 : index
    %c0_87 = arith.constant 0 : index
    %184 = vector.load %arg2[%c24, %c0_87] : memref<56x128xf32, #tpu.memory_space<vmem>>, vector<1x128xf32>
    %185 = vector.shape_cast %184 : vector<1x128xf32> to vector<128xf32>
    %186 = vector.shape_cast %185 : vector<128xf32> to vector<1x128xf32>
    %187 = vector.broadcast %186 : vector<1x128xf32> to vector<128x128xf32>
    %188 = arith.mulf %183, %187 : vector<128x128xf32>
    %189 = arith.addf %182, %188 : vector<128x128xf32>
    %c64_88 = arith.constant 64 : index
    %c0_89 = arith.constant 0 : index
    %190 = vector.load %arg6[%c64_88, %c0_89] : memref<224x128xf32, #tpu.memory_space<vmem>>, vector<128x128xf32>
    %c31 = arith.constant 31 : index
    %c0_90 = arith.constant 0 : index
    %191 = vector.load %arg2[%c31, %c0_90] : memref<56x128xf32, #tpu.memory_space<vmem>>, vector<1x128xf32>
    %192 = vector.shape_cast %191 : vector<1x128xf32> to vector<128xf32>
    %193 = vector.shape_cast %192 : vector<128xf32> to vector<1x128xf32>
    %194 = vector.broadcast %193 : vector<1x128xf32> to vector<128x128xf32>
    %195 = arith.mulf %190, %194 : vector<128x128xf32>
    %196 = arith.addf %189, %195 : vector<128x128xf32>
    %c80_91 = arith.constant 80 : index
    %c0_92 = arith.constant 0 : index
    %197 = vector.load %arg6[%c80_91, %c0_92] : memref<224x128xf32, #tpu.memory_space<vmem>>, vector<128x128xf32>
    %c38 = arith.constant 38 : index
    %c0_93 = arith.constant 0 : index
    %198 = vector.load %arg2[%c38, %c0_93] : memref<56x128xf32, #tpu.memory_space<vmem>>, vector<1x128xf32>
    %199 = vector.shape_cast %198 : vector<1x128xf32> to vector<128xf32>
    %200 = vector.shape_cast %199 : vector<128xf32> to vector<1x128xf32>
    %201 = vector.broadcast %200 : vector<1x128xf32> to vector<128x128xf32>
    %202 = arith.mulf %197, %201 : vector<128x128xf32>
    %203 = arith.addf %196, %202 : vector<128x128xf32>
    %c96_94 = arith.constant 96 : index
    %c0_95 = arith.constant 0 : index
    %204 = vector.load %arg6[%c96_94, %c0_95] : memref<224x128xf32, #tpu.memory_space<vmem>>, vector<128x128xf32>
    %c45 = arith.constant 45 : index
    %c0_96 = arith.constant 0 : index
    %205 = vector.load %arg2[%c45, %c0_96] : memref<56x128xf32, #tpu.memory_space<vmem>>, vector<1x128xf32>
    %206 = vector.shape_cast %205 : vector<1x128xf32> to vector<128xf32>
    %207 = vector.shape_cast %206 : vector<128xf32> to vector<1x128xf32>
    %208 = vector.broadcast %207 : vector<1x128xf32> to vector<128x128xf32>
    %209 = arith.mulf %204, %208 : vector<128x128xf32>
    %210 = arith.addf %203, %209 : vector<128x128xf32>
    %c0_97 = arith.constant 0 : index
    %c0_98 = arith.constant 0 : index
    %211 = vector.load %arg1[%c0_97, %c0_98] : memref<224x128xf32, #tpu.memory_space<vmem>>, vector<224x128xf32>
    %c220_i32 = arith.constant 220 : i32
    %212 = tpu.dynamic_rotate %211 by %c220_i32 dim 0 : vector<224x128xf32>, i32 -> vector<224x128xf32>
    %c0_99 = arith.constant 0 : index
    %c0_100 = arith.constant 0 : index
    %213 = vector.load %arg6[%c0_99, %c0_100] : memref<224x128xf32, #tpu.memory_space<vmem>>, vector<224x128xf32>
    tpu.vector_store %arg6[%c0_99, %c0_100], %212 {strides = array<i32>} : memref<224x128xf32, #tpu.memory_space<vmem>>, vector<224x128xf32>,
    %c0_101 = arith.constant 0 : index
    %c0_102 = arith.constant 0 : index
    %214 = vector.load %arg6[%c0_101, %c0_102] : memref<224x128xf32, #tpu.memory_space<vmem>>, vector<128x128xf32>
    %c4 = arith.constant 4 : index
    %c0_103 = arith.constant 0 : index
    %215 = vector.load %arg2[%c4, %c0_103] : memref<56x128xf32, #tpu.memory_space<vmem>>, vector<1x128xf32>
    %216 = vector.shape_cast %215 : vector<1x128xf32> to vector<128xf32>
    %217 = vector.shape_cast %216 : vector<128xf32> to vector<1x128xf32>
    %218 = vector.broadcast %217 : vector<1x128xf32> to vector<128x128xf32>
    %219 = arith.mulf %214, %218 : vector<128x128xf32>
    %220 = arith.addf %210, %219 : vector<128x128xf32>
    %c16_104 = arith.constant 16 : index
    %c0_105 = arith.constant 0 : index
    %221 = vector.load %arg6[%c16_104, %c0_105] : memref<224x128xf32, #tpu.memory_space<vmem>>, vector<128x128xf32>
    %c11 = arith.constant 11 : index
    %c0_106 = arith.constant 0 : index
    %222 = vector.load %arg2[%c11, %c0_106] : memref<56x128xf32, #tpu.memory_space<vmem>>, vector<1x128xf32>
    %223 = vector.shape_cast %222 : vector<1x128xf32> to vector<128xf32>
    %224 = vector.shape_cast %223 : vector<128xf32> to vector<1x128xf32>
    %225 = vector.broadcast %224 : vector<1x128xf32> to vector<128x128xf32>
    %226 = arith.mulf %221, %225 : vector<128x128xf32>
    %227 = arith.addf %220, %226 : vector<128x128xf32>
    %c32_107 = arith.constant 32 : index
    %c0_108 = arith.constant 0 : index
    %228 = vector.load %arg6[%c32_107, %c0_108] : memref<224x128xf32, #tpu.memory_space<vmem>>, vector<128x128xf32>
    %c18 = arith.constant 18 : index
    %c0_109 = arith.constant 0 : index
    %229 = vector.load %arg2[%c18, %c0_109] : memref<56x128xf32, #tpu.memory_space<vmem>>, vector<1x128xf32>
    %230 = vector.shape_cast %229 : vector<1x128xf32> to vector<128xf32>
    %231 = vector.shape_cast %230 : vector<128xf32> to vector<1x128xf32>
    %232 = vector.broadcast %231 : vector<1x128xf32> to vector<128x128xf32>
    %233 = arith.mulf %228, %232 : vector<128x128xf32>
    %234 = arith.addf %227, %233 : vector<128x128xf32>
    %c48_110 = arith.constant 48 : index
    %c0_111 = arith.constant 0 : index
    %235 = vector.load %arg6[%c48_110, %c0_111] : memref<224x128xf32, #tpu.memory_space<vmem>>, vector<128x128xf32>
    %c25 = arith.constant 25 : index
    %c0_112 = arith.constant 0 : index
    %236 = vector.load %arg2[%c25, %c0_112] : memref<56x128xf32, #tpu.memory_space<vmem>>, vector<1x128xf32>
    %237 = vector.shape_cast %236 : vector<1x128xf32> to vector<128xf32>
    %238 = vector.shape_cast %237 : vector<128xf32> to vector<1x128xf32>
    %239 = vector.broadcast %238 : vector<1x128xf32> to vector<128x128xf32>
    %240 = arith.mulf %235, %239 : vector<128x128xf32>
    %241 = arith.addf %234, %240 : vector<128x128xf32>
    %c64_113 = arith.constant 64 : index
    %c0_114 = arith.constant 0 : index
    %242 = vector.load %arg6[%c64_113, %c0_114] : memref<224x128xf32, #tpu.memory_space<vmem>>, vector<128x128xf32>
    %c32_115 = arith.constant 32 : index
    %c0_116 = arith.constant 0 : index
    %243 = vector.load %arg2[%c32_115, %c0_116] : memref<56x128xf32, #tpu.memory_space<vmem>>, vector<1x128xf32>
    %244 = vector.shape_cast %243 : vector<1x128xf32> to vector<128xf32>
    %245 = vector.shape_cast %244 : vector<128xf32> to vector<1x128xf32>
    %246 = vector.broadcast %245 : vector<1x128xf32> to vector<128x128xf32>
    %247 = arith.mulf %242, %246 : vector<128x128xf32>
    %248 = arith.addf %241, %247 : vector<128x128xf32>
    %c80_117 = arith.constant 80 : index
    %c0_118 = arith.constant 0 : index
    %249 = vector.load %arg6[%c80_117, %c0_118] : memref<224x128xf32, #tpu.memory_space<vmem>>, vector<128x128xf32>
    %c39 = arith.constant 39 : index
    %c0_119 = arith.constant 0 : index
    %250 = vector.load %arg2[%c39, %c0_119] : memref<56x128xf32, #tpu.memory_space<vmem>>, vector<1x128xf32>
    %251 = vector.shape_cast %250 : vector<1x128xf32> to vector<128xf32>
    %252 = vector.shape_cast %251 : vector<128xf32> to vector<1x128xf32>
    %253 = vector.broadcast %252 : vector<1x128xf32> to vector<128x128xf32>
    %254 = arith.mulf %249, %253 : vector<128x128xf32>
    %255 = arith.addf %248, %254 : vector<128x128xf32>
    %c96_120 = arith.constant 96 : index
    %c0_121 = arith.constant 0 : index
    %256 = vector.load %arg6[%c96_120, %c0_121] : memref<224x128xf32, #tpu.memory_space<vmem>>, vector<128x128xf32>
    %c46 = arith.constant 46 : index
    %c0_122 = arith.constant 0 : index
    %257 = vector.load %arg2[%c46, %c0_122] : memref<56x128xf32, #tpu.memory_space<vmem>>, vector<1x128xf32>
    %258 = vector.shape_cast %257 : vector<1x128xf32> to vector<128xf32>
    %259 = vector.shape_cast %258 : vector<128xf32> to vector<1x128xf32>
    %260 = vector.broadcast %259 : vector<1x128xf32> to vector<128x128xf32>
    %261 = arith.mulf %256, %260 : vector<128x128xf32>
    %262 = arith.addf %255, %261 : vector<128x128xf32>
    %c0_123 = arith.constant 0 : index
    %c0_124 = arith.constant 0 : index
    %263 = vector.load %arg1[%c0_123, %c0_124] : memref<224x128xf32, #tpu.memory_space<vmem>>, vector<224x128xf32>
    %c219_i32 = arith.constant 219 : i32
    %264 = tpu.dynamic_rotate %263 by %c219_i32 dim 0 : vector<224x128xf32>, i32 -> vector<224x128xf32>
    %c0_125 = arith.constant 0 : index
    %c0_126 = arith.constant 0 : index
    %265 = vector.load %arg6[%c0_125, %c0_126] : memref<224x128xf32, #tpu.memory_space<vmem>>, vector<224x128xf32>
    tpu.vector_store %arg6[%c0_125, %c0_126], %264 {strides = array<i32>} : memref<224x128xf32, #tpu.memory_space<vmem>>, vector<224x128xf32>,
    %c0_127 = arith.constant 0 : index
    %c0_128 = arith.constant 0 : index
    %266 = vector.load %arg6[%c0_127, %c0_128] : memref<224x128xf32, #tpu.memory_space<vmem>>, vector<128x128xf32>
    %c5 = arith.constant 5 : index
    %c0_129 = arith.constant 0 : index
    %267 = vector.load %arg2[%c5, %c0_129] : memref<56x128xf32, #tpu.memory_space<vmem>>, vector<1x128xf32>
    %268 = vector.shape_cast %267 : vector<1x128xf32> to vector<128xf32>
    %269 = vector.shape_cast %268 : vector<128xf32> to vector<1x128xf32>
    %270 = vector.broadcast %269 : vector<1x128xf32> to vector<128x128xf32>
    %271 = arith.mulf %266, %270 : vector<128x128xf32>
    %272 = arith.addf %262, %271 : vector<128x128xf32>
    %c16_130 = arith.constant 16 : index
    %c0_131 = arith.constant 0 : index
    %273 = vector.load %arg6[%c16_130, %c0_131] : memref<224x128xf32, #tpu.memory_space<vmem>>, vector<128x128xf32>
    %c12 = arith.constant 12 : index
    %c0_132 = arith.constant 0 : index
    %274 = vector.load %arg2[%c12, %c0_132] : memref<56x128xf32, #tpu.memory_space<vmem>>, vector<1x128xf32>
    %275 = vector.shape_cast %274 : vector<1x128xf32> to vector<128xf32>
    %276 = vector.shape_cast %275 : vector<128xf32> to vector<1x128xf32>
    %277 = vector.broadcast %276 : vector<1x128xf32> to vector<128x128xf32>
    %278 = arith.mulf %273, %277 : vector<128x128xf32>
    %279 = arith.addf %272, %278 : vector<128x128xf32>
    %c32_133 = arith.constant 32 : index
    %c0_134 = arith.constant 0 : index
    %280 = vector.load %arg6[%c32_133, %c0_134] : memref<224x128xf32, #tpu.memory_space<vmem>>, vector<128x128xf32>
    %c19 = arith.constant 19 : index
    %c0_135 = arith.constant 0 : index
    %281 = vector.load %arg2[%c19, %c0_135] : memref<56x128xf32, #tpu.memory_space<vmem>>, vector<1x128xf32>
    %282 = vector.shape_cast %281 : vector<1x128xf32> to vector<128xf32>
    %283 = vector.shape_cast %282 : vector<128xf32> to vector<1x128xf32>
    %284 = vector.broadcast %283 : vector<1x128xf32> to vector<128x128xf32>
    %285 = arith.mulf %280, %284 : vector<128x128xf32>
    %286 = arith.addf %279, %285 : vector<128x128xf32>
    %c48_136 = arith.constant 48 : index
    %c0_137 = arith.constant 0 : index
    %287 = vector.load %arg6[%c48_136, %c0_137] : memref<224x128xf32, #tpu.memory_space<vmem>>, vector<128x128xf32>
    %c26 = arith.constant 26 : index
    %c0_138 = arith.constant 0 : index
    %288 = vector.load %arg2[%c26, %c0_138] : memref<56x128xf32, #tpu.memory_space<vmem>>, vector<1x128xf32>
    %289 = vector.shape_cast %288 : vector<1x128xf32> to vector<128xf32>
    %290 = vector.shape_cast %289 : vector<128xf32> to vector<1x128xf32>
    %291 = vector.broadcast %290 : vector<1x128xf32> to vector<128x128xf32>
    %292 = arith.mulf %287, %291 : vector<128x128xf32>
    %293 = arith.addf %286, %292 : vector<128x128xf32>
    %c64_139 = arith.constant 64 : index
    %c0_140 = arith.constant 0 : index
    %294 = vector.load %arg6[%c64_139, %c0_140] : memref<224x128xf32, #tpu.memory_space<vmem>>, vector<128x128xf32>
    %c33 = arith.constant 33 : index
    %c0_141 = arith.constant 0 : index
    %295 = vector.load %arg2[%c33, %c0_141] : memref<56x128xf32, #tpu.memory_space<vmem>>, vector<1x128xf32>
    %296 = vector.shape_cast %295 : vector<1x128xf32> to vector<128xf32>
    %297 = vector.shape_cast %296 : vector<128xf32> to vector<1x128xf32>
    %298 = vector.broadcast %297 : vector<1x128xf32> to vector<128x128xf32>
    %299 = arith.mulf %294, %298 : vector<128x128xf32>
    %300 = arith.addf %293, %299 : vector<128x128xf32>
    %c80_142 = arith.constant 80 : index
    %c0_143 = arith.constant 0 : index
    %301 = vector.load %arg6[%c80_142, %c0_143] : memref<224x128xf32, #tpu.memory_space<vmem>>, vector<128x128xf32>
    %c40 = arith.constant 40 : index
    %c0_144 = arith.constant 0 : index
    %302 = vector.load %arg2[%c40, %c0_144] : memref<56x128xf32, #tpu.memory_space<vmem>>, vector<1x128xf32>
    %303 = vector.shape_cast %302 : vector<1x128xf32> to vector<128xf32>
    %304 = vector.shape_cast %303 : vector<128xf32> to vector<1x128xf32>
    %305 = vector.broadcast %304 : vector<1x128xf32> to vector<128x128xf32>
    %306 = arith.mulf %301, %305 : vector<128x128xf32>
    %307 = arith.addf %300, %306 : vector<128x128xf32>
    %c96_145 = arith.constant 96 : index
    %c0_146 = arith.constant 0 : index
    %308 = vector.load %arg6[%c96_145, %c0_146] : memref<224x128xf32, #tpu.memory_space<vmem>>, vector<128x128xf32>
    %c47 = arith.constant 47 : index
    %c0_147 = arith.constant 0 : index
    %309 = vector.load %arg2[%c47, %c0_147] : memref<56x128xf32, #tpu.memory_space<vmem>>, vector<1x128xf32>
    %310 = vector.shape_cast %309 : vector<1x128xf32> to vector<128xf32>
    %311 = vector.shape_cast %310 : vector<128xf32> to vector<1x128xf32>
    %312 = vector.broadcast %311 : vector<1x128xf32> to vector<128x128xf32>
    %313 = arith.mulf %308, %312 : vector<128x128xf32>
    %314 = arith.addf %307, %313 : vector<128x128xf32>
    %c0_148 = arith.constant 0 : index
    %c0_149 = arith.constant 0 : index
    %315 = vector.load %arg1[%c0_148, %c0_149] : memref<224x128xf32, #tpu.memory_space<vmem>>, vector<224x128xf32>
    %c218_i32 = arith.constant 218 : i32
    %316 = tpu.dynamic_rotate %315 by %c218_i32 dim 0 : vector<224x128xf32>, i32 -> vector<224x128xf32>
    %c0_150 = arith.constant 0 : index
    %c0_151 = arith.constant 0 : index
    %317 = vector.load %arg6[%c0_150, %c0_151] : memref<224x128xf32, #tpu.memory_space<vmem>>, vector<224x128xf32>
    tpu.vector_store %arg6[%c0_150, %c0_151], %316 {strides = array<i32>} : memref<224x128xf32, #tpu.memory_space<vmem>>, vector<224x128xf32>,
    %c0_152 = arith.constant 0 : index
    %c0_153 = arith.constant 0 : index
    %318 = vector.load %arg6[%c0_152, %c0_153] : memref<224x128xf32, #tpu.memory_space<vmem>>, vector<128x128xf32>
    %c6 = arith.constant 6 : index
    %c0_154 = arith.constant 0 : index
    %319 = vector.load %arg2[%c6, %c0_154] : memref<56x128xf32, #tpu.memory_space<vmem>>, vector<1x128xf32>
    %320 = vector.shape_cast %319 : vector<1x128xf32> to vector<128xf32>
    %321 = vector.shape_cast %320 : vector<128xf32> to vector<1x128xf32>
    %322 = vector.broadcast %321 : vector<1x128xf32> to vector<128x128xf32>
    %323 = arith.mulf %318, %322 : vector<128x128xf32>
    %324 = arith.addf %314, %323 : vector<128x128xf32>
    %c16_155 = arith.constant 16 : index
    %c0_156 = arith.constant 0 : index
    %325 = vector.load %arg6[%c16_155, %c0_156] : memref<224x128xf32, #tpu.memory_space<vmem>>, vector<128x128xf32>
    %c13 = arith.constant 13 : index
    %c0_157 = arith.constant 0 : index
    %326 = vector.load %arg2[%c13, %c0_157] : memref<56x128xf32, #tpu.memory_space<vmem>>, vector<1x128xf32>
    %327 = vector.shape_cast %326 : vector<1x128xf32> to vector<128xf32>
    %328 = vector.shape_cast %327 : vector<128xf32> to vector<1x128xf32>
    %329 = vector.broadcast %328 : vector<1x128xf32> to vector<128x128xf32>
    %330 = arith.mulf %325, %329 : vector<128x128xf32>
    %331 = arith.addf %324, %330 : vector<128x128xf32>
    %c32_158 = arith.constant 32 : index
    %c0_159 = arith.constant 0 : index
    %332 = vector.load %arg6[%c32_158, %c0_159] : memref<224x128xf32, #tpu.memory_space<vmem>>, vector<128x128xf32>
    %c20 = arith.constant 20 : index
    %c0_160 = arith.constant 0 : index
    %333 = vector.load %arg2[%c20, %c0_160] : memref<56x128xf32, #tpu.memory_space<vmem>>, vector<1x128xf32>
    %334 = vector.shape_cast %333 : vector<1x128xf32> to vector<128xf32>
    %335 = vector.shape_cast %334 : vector<128xf32> to vector<1x128xf32>
    %336 = vector.broadcast %335 : vector<1x128xf32> to vector<128x128xf32>
    %337 = arith.mulf %332, %336 : vector<128x128xf32>
    %338 = arith.addf %331, %337 : vector<128x128xf32>
    %c48_161 = arith.constant 48 : index
    %c0_162 = arith.constant 0 : index
    %339 = vector.load %arg6[%c48_161, %c0_162] : memref<224x128xf32, #tpu.memory_space<vmem>>, vector<128x128xf32>
    %c27 = arith.constant 27 : index
    %c0_163 = arith.constant 0 : index
    %340 = vector.load %arg2[%c27, %c0_163] : memref<56x128xf32, #tpu.memory_space<vmem>>, vector<1x128xf32>
    %341 = vector.shape_cast %340 : vector<1x128xf32> to vector<128xf32>
    %342 = vector.shape_cast %341 : vector<128xf32> to vector<1x128xf32>
    %343 = vector.broadcast %342 : vector<1x128xf32> to vector<128x128xf32>
    %344 = arith.mulf %339, %343 : vector<128x128xf32>
    %345 = arith.addf %338, %344 : vector<128x128xf32>
    %c64_164 = arith.constant 64 : index
    %c0_165 = arith.constant 0 : index
    %346 = vector.load %arg6[%c64_164, %c0_165] : memref<224x128xf32, #tpu.memory_space<vmem>>, vector<128x128xf32>
    %c34 = arith.constant 34 : index
    %c0_166 = arith.constant 0 : index
    %347 = vector.load %arg2[%c34, %c0_166] : memref<56x128xf32, #tpu.memory_space<vmem>>, vector<1x128xf32>
    %348 = vector.shape_cast %347 : vector<1x128xf32> to vector<128xf32>
    %349 = vector.shape_cast %348 : vector<128xf32> to vector<1x128xf32>
    %350 = vector.broadcast %349 : vector<1x128xf32> to vector<128x128xf32>
    %351 = arith.mulf %346, %350 : vector<128x128xf32>
    %352 = arith.addf %345, %351 : vector<128x128xf32>
    %c80_167 = arith.constant 80 : index
    %c0_168 = arith.constant 0 : index
    %353 = vector.load %arg6[%c80_167, %c0_168] : memref<224x128xf32, #tpu.memory_space<vmem>>, vector<128x128xf32>
    %c41 = arith.constant 41 : index
    %c0_169 = arith.constant 0 : index
    %354 = vector.load %arg2[%c41, %c0_169] : memref<56x128xf32, #tpu.memory_space<vmem>>, vector<1x128xf32>
    %355 = vector.shape_cast %354 : vector<1x128xf32> to vector<128xf32>
    %356 = vector.shape_cast %355 : vector<128xf32> to vector<1x128xf32>
    %357 = vector.broadcast %356 : vector<1x128xf32> to vector<128x128xf32>
    %358 = arith.mulf %353, %357 : vector<128x128xf32>
    %359 = arith.addf %352, %358 : vector<128x128xf32>
    %c96_170 = arith.constant 96 : index
    %c0_171 = arith.constant 0 : index
    %360 = vector.load %arg6[%c96_170, %c0_171] : memref<224x128xf32, #tpu.memory_space<vmem>>, vector<128x128xf32>
    %c48_172 = arith.constant 48 : index
    %c0_173 = arith.constant 0 : index
    %361 = vector.load %arg2[%c48_172, %c0_173] : memref<56x128xf32, #tpu.memory_space<vmem>>, vector<1x128xf32>
    %362 = vector.shape_cast %361 : vector<1x128xf32> to vector<128xf32>
    %363 = vector.shape_cast %362 : vector<128xf32> to vector<1x128xf32>
    %364 = vector.broadcast %363 : vector<1x128xf32> to vector<128x128xf32>
    %365 = arith.mulf %360, %364 : vector<128x128xf32>
    %366 = arith.addf %359, %365 : vector<128x128xf32>
    %c0_174 = arith.constant 0 : index
    %c0_175 = arith.constant 0 : index
    %367 = vector.load %arg4[%c0_174, %c0_175] : memref<128x1xf32, #tpu.memory_space<vmem>>, vector<128x1xf32>
    %368 = vector.broadcast %367 : vector<128x1xf32> to vector<128x128xf32>
    %369 = arith.mulf %366, %368 : vector<128x128xf32>
    %c0_176 = arith.constant 0 : index
    %c0_177 = arith.constant 0 : index
    %370 = vector.load %arg5[%c0_176, %c0_177] : memref<128x128xf32, #tpu.memory_space<vmem>>, vector<128x128xf32>
    %371 = arith.addf %369, %370 : vector<128x128xf32>
    %c0_178 = arith.constant 0 : index
    %c0_179 = arith.constant 0 : index
    %372 = vector.load %arg5[%c0_178, %c0_179] : memref<128x128xf32, #tpu.memory_space<vmem>>, vector<128x128xf32>
    tpu.vector_store %arg5[%c0_178, %c0_179], %371 {strides = array<i32>} : memref<128x128xf32, #tpu.memory_space<vmem>>, vector<128x128xf32>,
    return
  }
  func.func @transform_0(%arg0: i32) -> (i32, i32) {
    %c0_i32 = arith.constant 0 : i32
    %c0_i32_0 = arith.constant 0 : i32
    return %c0_i32, %arg0 : i32, i32
  }
  func.func @transform_1(%arg0: i32) -> (i32, i32) {
    %c0_i32 = arith.constant 0 : i32
    %c0_i32_0 = arith.constant 0 : i32
    return %c0_i32, %arg0 : i32, i32
  }
  func.func @transform_2(%arg0: i32) -> (i32, i32) {
    %c0_i32 = arith.constant 0 : i32
    %c0_i32_0 = arith.constant 0 : i32
    return %c0_i32, %arg0 : i32, i32
  }
  func.func @transform_3(%arg0: i32) -> (i32, i32) {
    %c0_i32 = arith.constant 0 : i32
    %c0_i32_0 = arith.constant 0 : i32
    %c0_i32_1 = arith.constant 0 : i32
    return %c0_i32, %c0_i32_0 : i32, i32
  }
  func.func @transform_4(%arg0: i32) -> (i32, i32) {
    %c0_i32 = arith.constant 0 : i32
    %c0_i32_0 = arith.constant 0 : i32
    return %c0_i32, %arg0 : i32, i32
  }
}

</mosaic_0001>

<llo_original>
// kernel: tpu_custom_call.1
$region0: #{tpu_custom_call.1}
  #allocation0 [shape = 'u32[]', space=smem, size = 0x4, offset = 0x4, fixed_abs, tag = 'smem constant byte address 0x4 - core index']
  #allocation1 [shape = 'u32[144,128]{1,0:T(1,128)}', space=vmem, size = 0x12000, scoped, tag = 'internal scratch']
  #allocation2 [shape = 'f32[224,128]{1,0:T(8,128)}', space=vmem, size = 0x1c000, scoped, tag = 'scratch operand']
  %s0 = inlined_call_operand.hbm [shape: f32[224,256], index: 0, kind: input, shape index: {}]
  %s1 = inlined_call_operand.vmem [shape: f32[56,256], index: 1, kind: input, shape index: {}]
  %s2 = inlined_call_operand.vmem [shape: f32[8,256], index: 2, kind: input, shape index: {}]
  %s3 = inlined_call_operand.vmem [shape: f32[128,1], index: 3, kind: input, shape index: {}]
  %s4 = inlined_call_operand.hbm [shape: f32[128,256], index: 4, kind: output, shape index: {}]
  %s5 = sld [smem:[#allocation0]]
  $region91: #{tpu_custom_call.1} parent=0
    _
  %s7 = ssub.s32 1, %s5
  %s8 = scalar_select 0, %s7, %s5
  $region1: #{tpu_custom_call.1} parent=0
    #allocation3 [shape = 'u8[229376]{0}', space=vmem, size = 0x38000, scoped, tag = 'input window, operand 0']
    #allocation4 [shape = 's32[2]{0}', space=sflag, size = 0x8, scoped, tag = 'scoped memory for tpu_custom_call.1']
    #allocation5 [shape = 's32[2]{0}', space=sflag, size = 0x8, scoped, tag = 'scoped memory for tpu_custom_call.1']
    #allocation6 [shape = 'u8[57344]{0}', space=vmem, size = 0xe000, scoped, tag = 'input window, operand 1']
    #allocation7 [shape = 'u8[131072]{0}', space=vmem, size = 0x20000, scoped, tag = 'output window, operand 0']
    %9 = vsyncpa [#allocation4], 0
    %s10 = scalar_lea.sflag [#allocation4], 1
    %11 = vsyncpa %s10, 0
    %12 = vsyncpa [#allocation5], 0
    %s13 = scalar_lea.sflag [#allocation5], 1
    %14 = vsyncpa %s13, 0
    loop: start=0, step=1, limit=4
    $region2: #{tpu_custom_call.1} parent=1 // loop_pre_header
      _
    $region3: #{tpu_custom_call.1} parent=1 // loop_header
      %s16 = sphi 0, %s20
      %p17 = scmp.ge.s32.totalorder %s16, 4
      %s26 = sphi 0, %s28
      %s29 = sphi 0, %s26
      %s30 = sphi 0, %s29
      %s46 = sphi 0, %s30
      %s52 = sphi 0, %s54
      %s55 = sphi 0, %s52
      %s56 = sphi 0, %s55
      %s72 = sphi 0, %s56
      %s78 = sphi 0, %s80
      %s81 = sphi 0, %s78
      %s82 = sphi 0, %s81
      %s98 = sphi 0, %s82
      %s102 = sphi 0, %s102
      %s104 = sphi 0, %s102
      %s105 = sphi 0, %s104
      %s119 = sphi 0, %s105
      %s125 = sphi 0, %s127
      %s128 = sphi 0, %s125
      %s129 = sphi 0, %s128
      %s145 = sphi 0, %s129
    $region4: #{tpu_custom_call.1} parent=1 // loop_header_branch
      %19 = sbr.rel (%p17) target = $region8
    $region5: #{tpu_custom_call.1} parent=1 // loop_body
      %s21 = ssub.s32 %s16, 1
      %s22 = ssub.s32 %s16, 2
      %s23 = sadd.s32 %s16, 1
      %s24 = ssub.s32 %s16, %s23
      %p25 = scmp.eq.s32.totalorder %s24, 0
      %s27 = sadd.s32 %s26, 1
      %s28 = scalar_select %p25, %s26, %s27
      %p31 = pneg %p25
      %p32 = scmp.eq.s32.totalorder %s16, 1
      %p33 = por %p31, %p32
      %p34 = scmp.ne.s32.totalorder %s26, %s29
      %p35 = scmp.eq.s32.totalorder %s16, 0
      %p36 = por %p34, %p35
      %p37 = scmp.ne.s32.totalorder %s26, %s29
      %p38 = scmp.eq.s32.totalorder %s21, 1
      %p39 = por %p37, %p38
      %p40 = scmp.ne.s32.totalorder %s29, %s30
      %p41 = scmp.eq.s32.totalorder %s21, 0
      %p42 = por %p40, %p41
      %p43 = scmp.ne.s32.totalorder %s29, %s30
      %p44 = scmp.eq.s32.totalorder %s22, 1
      %p45 = por %p43, %p44
      %p47 = scmp.ne.s32.totalorder %s30, %s46
      %p48 = scmp.eq.s32.totalorder %s22, 0
      %p49 = por %p47, %p48
      %s50 = ssub.s32 %s16, %s23
      %p51 = scmp.eq.s32.totalorder %s50, 0
      %s53 = sadd.s32 %s52, 1
      %s54 = scalar_select %p51, %s52, %s53
      %p57 = pneg %p51
      %p58 = scmp.eq.s32.totalorder %s16, 1
      %p59 = por %p57, %p58
      %p60 = scmp.ne.s32.totalorder %s52, %s55
      %p61 = scmp.eq.s32.totalorder %s16, 0
      %p62 = por %p60, %p61
      %p63 = scmp.ne.s32.totalorder %s52, %s55
      %p64 = scmp.eq.s32.totalorder %s21, 1
      %p65 = por %p63, %p64
      %p66 = scmp.ne.s32.totalorder %s55, %s56
      %p67 = scmp.eq.s32.totalorder %s21, 0
      %p68 = por %p66, %p67
      %p69 = scmp.ne.s32.totalorder %s55, %s56
      %p70 = scmp.eq.s32.totalorder %s22, 1
      %p71 = por %p69, %p70
      %p73 = scmp.ne.s32.totalorder %s56, %s72
      %p74 = scmp.eq.s32.totalorder %s22, 0
      %p75 = por %p73, %p74
      %s76 = ssub.s32 %s16, %s23
      %p77 = scmp.eq.s32.totalorder %s76, 0
      %s79 = sadd.s32 %s78, 1
      %s80 = scalar_select %p77, %s78, %s79
      %p83 = pneg %p77
      %p84 = scmp.eq.s32.totalorder %s16, 1
      %p85 = por %p83, %p84
      %p86 = scmp.ne.s32.totalorder %s78, %s81
      %p87 = scmp.eq.s32.totalorder %s16, 0
      %p88 = por %p86, %p87
      %p89 = scmp.ne.s32.totalorder %s78, %s81
      %p90 = scmp.eq.s32.totalorder %s21, 1
      %p91 = por %p89, %p90
      %p92 = scmp.ne.s32.totalorder %s81, %s82
      %p93 = scmp.eq.s32.totalorder %s21, 0
      %p94 = por %p92, %p93
      %p95 = scmp.ne.s32.totalorder %s81, %s82
      %p96 = scmp.eq.s32.totalorder %s22, 1
      %p97 = por %p95, %p96
      %p99 = scmp.ne.s32.totalorder %s82, %s98
      %p100 = scmp.eq.s32.totalorder %s22, 0
      %p101 = por %p99, %p100
      %s103 = sadd.s32 %s102, 1
      %p106 = scmp.eq.s32.totalorder %s16, 1
      %p107 = scmp.ne.s32.totalorder %s102, %s104
      %p108 = scmp.eq.s32.totalorder %s16, 0
      %p109 = por %p107, %p108
      %p110 = scmp.ne.s32.totalorder %s102, %s104
      %p111 = scmp.eq.s32.totalorder %s21, 1
      %p112 = por %p110, %p111
      %p113 = scmp.ne.s32.totalorder %s104, %s105
      %p114 = scmp.eq.s32.totalorder %s21, 0
      %p115 = por %p113, %p114
      %p116 = scmp.ne.s32.totalorder %s104, %s105
      %p117 = scmp.eq.s32.totalorder %s22, 1
      %p118 = por %p116, %p117
      %p120 = scmp.ne.s32.totalorder %s105, %s119
      %p121 = scmp.eq.s32.totalorder %s22, 0
      %p122 = por %p120, %p121
      %s123 = ssub.s32 %s16, %s23
      %p124 = scmp.eq.s32.totalorder %s123, 0
      %s126 = sadd.s32 %s125, 1
      %s127 = scalar_select %p124, %s125, %s126
      %p130 = pneg %p124
      %p131 = scmp.eq.s32.totalorder %s16, 1
      %p132 = por %p130, %p131
      %p133 = scmp.ne.s32.totalorder %s125, %s128
      %p134 = scmp.eq.s32.totalorder %s16, 0
      %p135 = por %p133, %p134
      %p136 = scmp.ne.s32.totalorder %s125, %s128
      %p137 = scmp.eq.s32.totalorder %s21, 1
      %p138 = por %p136, %p137
      %p139 = scmp.ne.s32.totalorder %s128, %s129
      %p140 = scmp.eq.s32.totalorder %s21, 0
      %p141 = por %p139, %p140
      %p142 = scmp.ne.s32.totalorder %s128, %s129
      %p143 = scmp.eq.s32.totalorder %s22, 1
      %p144 = por %p142, %p143
      %p146 = scmp.ne.s32.totalorder %s129, %s145
      %p147 = scmp.eq.s32.totalorder %s22, 0
      %p148 = por %p146, %p147
      %p149 = scmp.le.s32.totalorder 1, %s16
      %p150 = scmp.lt.s32.totalorder %s16, 3
      %p151 = pnand %p149, %p150
      %p152 = pneg %p151
      // Predicated region
      $region9: #{tpu_custom_call.1} parent=5 // pred_check
        _
      $region10: #{tpu_custom_call.1} parent=5 // pred_check_branch
        %154 = sbr.rel (%p151) target = $region12
      $region11: #{tpu_custom_call.1} parent=5 // pred_region
        %s155 = ssub.s32 %s16, 1
        // Predicated region
        $region13: #{tpu_custom_call.1} parent=11 // pred_check
          %p156 = pneg %p115
        $region14: #{tpu_custom_call.1} parent=11 // pred_check_branch
          %158 = sbr.rel (%p156) target = $region16
        $region15: #{tpu_custom_call.1} parent=11 // pred_region
          _
        $region16: #{tpu_custom_call.1} parent=11 // pred_fallthru
          _
      $region12: #{tpu_custom_call.1} parent=5 // pred_fallthru
        _
      %p159 = scmp.lt.s32.totalorder %s16, 2
      // Predicated region
      $region17: #{tpu_custom_call.1} parent=5 // pred_check
        %p160 = pneg %p159
      $region18: #{tpu_custom_call.1} parent=5 // pred_check_branch
        %162 = sbr.rel (%p160) target = $region20
      $region19: #{tpu_custom_call.1} parent=5 // pred_region
        // Predicated region
        $region21: #{tpu_custom_call.1} parent=19 // pred_check
          %p163 = pneg %p36
        $region22: #{tpu_custom_call.1} parent=19 // pred_check_branch
          %165 = sbr.rel (%p163) target = $region24
        $region23: #{tpu_custom_call.1} parent=19 // pred_region
          %s166 = sand.u32 %s26, 1
          %s167 = scalar_lea.sflag [#allocation4], %s166
          %s168 = sand.u32 %s26, 1
          %s169 = smul.addr %s168, 224
          %s170 = scalar_lea.vmem [#allocation3], %s169
          %s172 = ssub.s32 3584, 3584
          %173 = vsyncadd %s167, %s172
          %s174 = smul.addr %s16, 128
          %s175 = scalar_lea.hbm %s0, %s174
          %s176 = sshll.u32 %s170, 4
          %s177 = int_to_ptr.vmem [resolvable:$true] %s176
          %182 = dma.hbm_to_vmem [thread:$0]  %s175, 3584, %s177, %s167, 256, 128, 8
        $region24: #{tpu_custom_call.1} parent=19 // pred_fallthru
          _
        // Predicated region
        $region25: #{tpu_custom_call.1} parent=19 // pred_check
          %p183 = pneg %p62
        $region26: #{tpu_custom_call.1} parent=19 // pred_check_branch
          %185 = sbr.rel (%p183) target = $region28
        $region27: #{tpu_custom_call.1} parent=19 // pred_region
          %s186 = sand.u32 %s52, 1
          %s187 = sand.u32 %s52, 1
          %s188 = smul.addr %s187, 56
          %s189 = scalar_lea.vmem [#allocation6], %s188
          %s190 = smul.addr %s16, 8
          %s191 = scalar_lea.vmem %s1, %s190
          // Predicated region
          $region29: #{tpu_custom_call.1} parent=27 // pred_check
            _
          $region30: #{tpu_custom_call.1} parent=27 // pred_check_branch
            %193 = sbr.rel (0) target = $region32
          $region31: #{tpu_custom_call.1} parent=27 // pred_region
            // Predicated region
            $region33: #{tpu_custom_call.1} parent=31 // pred_check
              _
            $region34: #{tpu_custom_call.1} parent=31 // pred_check_branch
              %195 = sbr.rel (0) target = $region36
            $region35: #{tpu_custom_call.1} parent=31 // pred_region
              // Predicated region
              $region48: #{tpu_custom_call.1} parent=35 // pred_check
                _
              $region49: #{tpu_custom_call.1} parent=35 // pred_check_branch
                %223 = sbr.rel (0) target = $region51
              $region50: #{tpu_custom_call.1} parent=35 // pred_region
                loop: start=0, step=1, limit=1
                $region52: #{tpu_custom_call.1} parent=50 // loop_pre_header
                  _
                $region53: #{tpu_custom_call.1} parent=50 // loop_header
                  %s225 = sphi 0, %s229
                  %p226 = scmp.ge.s32.totalorder %s225, 1
                  %s230 = sphi %s191, %s191
                  %s231 = sphi %s189, %s189
                $region54: #{tpu_custom_call.1} parent=50 // loop_header_branch
                  %228 = sbr.rel (%p226) target = $region58
                $region55: #{tpu_custom_call.1} parent=50 // loop_body
                  %v232 = vld [vmem:[%s230] sm:$0xff]
                  %233 = vst [vmem:[%s231] sm:$0xff] %v232
                  %v234 = vld [vmem:[%s230 + $0x10] sm:$0xff]
                  %235 = vst [vmem:[%s231 + $0x8] sm:$0xff] %v234
                  %v236 = vld [vmem:[%s230 + $0x20] sm:$0xff]
                  %237 = vst [vmem:[%s231 + $0x10] sm:$0xff] %v236
                  %v238 = vld [vmem:[%s230 + $0x30] sm:$0xff]
                  %239 = vst [vmem:[%s231 + $0x18] sm:$0xff] %v238
                  %v240 = vld [vmem:[%s230 + $0x40] sm:$0xff]
                  %241 = vst [vmem:[%s231 + $0x20] sm:$0xff] %v240
                  %v242 = vld [vmem:[%s230 + $0x50] sm:$0xff]
                  %243 = vst [vmem:[%s231 + $0x28] sm:$0xff] %v242
                  %v244 = vld [vmem:[%s230 + $0x60] sm:$0xff]
                  %245 = vst [vmem:[%s231 + $0x30] sm:$0xff] %v244
                $region56: #{tpu_custom_call.1} parent=50 // loop_footer
                  %s229 = sadd.s32 1, %s225
                $region57: #{tpu_custom_call.1} parent=50 // loop_footer_branch
                  %224 = sbr.rel target = $region53
                $region58: #{tpu_custom_call.1} parent=50 // loop_exit
                  _
              $region51: #{tpu_custom_call.1} parent=35 // pred_fallthru
                _
              // Predicated region
              $region59: #{tpu_custom_call.1} parent=35 // pred_check
                _
              $region60: #{tpu_custom_call.1} parent=35 // pred_check_branch
                %247 = sbr.rel target = $region62
              $region61: #{tpu_custom_call.1} parent=35 // pred_region
                _
              $region62: #{tpu_custom_call.1} parent=35 // pred_fallthru
                _
            $region36: #{tpu_custom_call.1} parent=31 // pred_fallthru
              _
            // Predicated region
            $region37: #{tpu_custom_call.1} parent=31 // pred_check
              _
            $region38: #{tpu_custom_call.1} parent=31 // pred_check_branch
              %197 = sbr.rel target = $region40
            $region39: #{tpu_custom_call.1} parent=31 // pred_region
              %s199 = ssub.s32 256, 1
              loop: start=0, step=1, limit=1
              $region41: #{tpu_custom_call.1} parent=39 // loop_pre_header
                _
              $region42: #{tpu_custom_call.1} parent=39 // loop_header
                %s201 = sphi 0, %s205
                %p202 = scmp.ge.s32.totalorder %s201, 1
                %s206 = sphi %s191, %s191
                %s207 = sphi %s189, %s189
              $region43: #{tpu_custom_call.1} parent=39 // loop_header_branch
                %204 = sbr.rel (%p202) target = $region47
              $region44: #{tpu_custom_call.1} parent=39 // loop_body
                %v208 = vld [vmem:[%s206] sm:%s199]
                %209 = vst [vmem:[%s207] sm:%s199] %v208
                %v210 = vld [vmem:[%s206 + $0x10] sm:%s199]
                %211 = vst [vmem:[%s207 + $0x8] sm:%s199] %v210
                %v212 = vld [vmem:[%s206 + $0x20] sm:%s199]
                %213 = vst [vmem:[%s207 + $0x10] sm:%s199] %v212
                %v214 = vld [vmem:[%s206 + $0x30] sm:%s199]
                %215 = vst [vmem:[%s207 + $0x18] sm:%s199] %v214
                %v216 = vld [vmem:[%s206 + $0x40] sm:%s199]
                %217 = vst [vmem:[%s207 + $0x20] sm:%s199] %v216
                %v218 = vld [vmem:[%s206 + $0x50] sm:%s199]
                %219 = vst [vmem:[%s207 + $0x28] sm:%s199] %v218
                %v220 = vld [vmem:[%s206 + $0x60] sm:%s199]
                %221 = vst [vmem:[%s207 + $0x30] sm:%s199] %v220
              $region45: #{tpu_custom_call.1} parent=39 // loop_footer
                %s205 = sadd.s32 1, %s201
              $region46: #{tpu_custom_call.1} parent=39 // loop_footer_branch
                %200 = sbr.rel target = $region42
              $region47: #{tpu_custom_call.1} parent=39 // loop_exit
                _
            $region40: #{tpu_custom_call.1} parent=31 // pred_fallthru
              _
          $region32: #{tpu_custom_call.1} parent=27 // pred_fallthru
            _
          %248 = vnop
        $region28: #{tpu_custom_call.1} parent=19 // pred_fallthru
          _
        // Predicated region
        $region63: #{tpu_custom_call.1} parent=19 // pred_check
          %p249 = pneg %p88
        $region64: #{tpu_custom_call.1} parent=19 // pred_check_branch
          %251 = sbr.rel (%p249) target = $region66
        $region65: #{tpu_custom_call.1} parent=19 // pred_region
          %p252 = scmp.lt.s32.totalorder %s16, 1
          %s253 = scalar_select %p252, %s16, 1
          %s254 = smul.addr %s253, 8
          %s255 = scalar_lea.vmem %s2, %s254
        $region66: #{tpu_custom_call.1} parent=19 // pred_fallthru
          _
      $region20: #{tpu_custom_call.1} parent=5 // pred_fallthru
        _
      %p256 = scmp.le.s32.totalorder 1, %s16
      %p257 = scmp.lt.s32.totalorder %s16, 3
      %p258 = pnand %p256, %p257
      %p259 = pneg %p258
      // Predicated region
      $region67: #{tpu_custom_call.1} parent=5 // pred_check
        _
      $region68: #{tpu_custom_call.1} parent=5 // pred_check_branch
        %261 = sbr.rel (%p258) target = $region70
      $region69: #{tpu_custom_call.1} parent=5 // pred_region
        %s262 = ssub.s32 %s16, 1
        %s263 = sand.u32 %s29, 1
        %s264 = scalar_lea.sflag [#allocation4], %s263
        %s265 = sand.u32 %s29, 1
        %s266 = smul.addr %s265, 224
        %s267 = scalar_lea.vmem [#allocation3], %s266
        // Predicated region
        $region71: #{tpu_custom_call.1} parent=69 // pred_check
          %p268 = pneg %p42
        $region72: #{tpu_custom_call.1} parent=69 // pred_check_branch
          %270 = sbr.rel (%p268) target = $region74
        $region73: #{tpu_custom_call.1} parent=69 // pred_region
          %271 = dma.done %s264, 3584
        $region74: #{tpu_custom_call.1} parent=69 // pred_fallthru
          _
        %s272 = sand.u32 %s55, 1
        %s273 = sand.u32 %s55, 1
        %s274 = smul.addr %s273, 56
        %s275 = scalar_lea.vmem [#allocation6], %s274
        // Predicated region
        $region75: #{tpu_custom_call.1} parent=69 // pred_check
          %p276 = pneg %p68
        $region76: #{tpu_custom_call.1} parent=69 // pred_check_branch
          %278 = sbr.rel (%p276) target = $region78
        $region77: #{tpu_custom_call.1} parent=69 // pred_region
          _
        $region78: #{tpu_custom_call.1} parent=69 // pred_fallthru
          _
        %s279 = sand.u32 %s29, 1
        %s280 = scalar_lea.sflag [#allocation4], %s279
        %s281 = sand.u32 %s29, 1
        %s282 = smul.addr %s281, 224
        %s283 = scalar_lea.vmem [#allocation3], %s282
        %p284 = pneg %p42
        %p285 = pneg %p39
        %s286 = sand.u32 %s55, 1
        %s287 = sand.u32 %s55, 1
        %s288 = smul.addr %s287, 56
        %s289 = scalar_lea.vmem [#allocation6], %s288
        %p290 = pneg %p68
        %p291 = pneg %p65
        %p292 = scmp.lt.s32.totalorder %s21, 1
        %s293 = scalar_select %p292, %s21, 1
        %s294 = smul.addr %s293, 8
        %s295 = scalar_lea.vmem %s2, %s294
        %p296 = pneg %p94
        %p297 = pneg %p91
        %p298 = pneg %p115
        %p299 = pneg %p112
        %p300 = pneg %p141
        %p301 = pneg %p138
        %s302 = sand.u32 %s128, 1
        %s303 = scalar_lea.sflag [#allocation5], %s302
        %s304 = sand.u32 %s128, 1
        %s305 = smul.addr %s304, 128
        %s306 = scalar_lea.vmem [#allocation7], %s305
        %p307 = scmp.lt.s32.totalorder %s21, 1
        %s308 = scalar_select %p307, %s21, 1
        %s309 = smul.addr %s308, 8
        %s310 = scalar_lea.vmem %s2, %s309
        %v311 = vld [vmem:[%s310] sm:$0x1]
        %v312 = vlaneseq
        %v313 = vshrl.u32 %v312, 7
        %v314 = vsub.s32 0, %v313
        %v315 = vrot.slane %v311, %v314
        %v316 = vld [vmem:[%s267] sm:$0xff]
        %v317 = vld [vmem:[%s267 + $0x8] sm:$0xff]
        %v318 = vld [vmem:[%s267 + $0x10] sm:$0xff]
        %v319 = vld [vmem:[%s267 + $0x18] sm:$0xff]
        %v320 = vld [vmem:[%s267 + $0x20] sm:$0xff]
        %v321 = vld [vmem:[%s267 + $0x28] sm:$0xff]
        %v322 = vld [vmem:[%s267 + $0x30] sm:$0xff]
        %v323 = vld [vmem:[%s267 + $0x38] sm:$0xff]
        %v324 = vld [vmem:[%s267 + $0x40] sm:$0xff]
        %v325 = vld [vmem:[%s267 + $0x48] sm:$0xff]
        %v326 = vld [vmem:[%s267 + $0x50] sm:$0xff]
        %v327 = vld [vmem:[%s267 + $0x58] sm:$0xff]
        %v328 = vld [vmem:[%s267 + $0x60] sm:$0xff]
        %v329 = vld [vmem:[%s267 + $0x68] sm:$0xff]
        %v330 = vld [vmem:[%s267 + $0x70] sm:$0xff]
        %v331 = vld [vmem:[%s267 + $0x78] sm:$0xff]
        %v332 = vld [vmem:[%s275] sm:$0x1]
        %v333 = vlaneseq
        %v334 = vshrl.u32 %v333, 7
        %v335 = vsub.s32 0, %v334
        %v336 = vrot.slane %v332, %v335
        %v337 = vmul.f32 %v316, %v336
        %v338 = vmul.f32 %v317, %v336
        %v339 = vmul.f32 %v318, %v336
        %v340 = vmul.f32 %v319, %v336
        %v341 = vmul.f32 %v320, %v336
        %v342 = vmul.f32 %v321, %v336
        %v343 = vmul.f32 %v322, %v336
        %v344 = vmul.f32 %v323, %v336
        %v345 = vmul.f32 %v324, %v336
        %v346 = vmul.f32 %v325, %v336
        %v347 = vmul.f32 %v326, %v336
        %v348 = vmul.f32 %v327, %v336
        %v349 = vmul.f32 %v328, %v336
        %v350 = vmul.f32 %v329, %v336
        %v351 = vmul.f32 %v330, %v336
        %v352 = vmul.f32 %v331, %v336
        %v353 = vadd.f32 %v315, %v337
        %v354 = vadd.f32 %v315, %v338
        %v355 = vadd.f32 %v315, %v339
        %v356 = vadd.f32 %v315, %v340
        %v357 = vadd.f32 %v315, %v341
        %v358 = vadd.f32 %v315, %v342
        %v359 = vadd.f32 %v315, %v343
        %v360 = vadd.f32 %v315, %v344
        %v361 = vadd.f32 %v315, %v345
        %v362 = vadd.f32 %v315, %v346
        %v363 = vadd.f32 %v315, %v347
        %v364 = vadd.f32 %v315, %v348
        %v365 = vadd.f32 %v315, %v349
        %v366 = vadd.f32 %v315, %v350
        %v367 = vadd.f32 %v315, %v351
        %v368 = vadd.f32 %v315, %v352
        %v369 = vld [vmem:[%s267 + $0x80] sm:$0xff]
        %v370 = vld [vmem:[%s267 + $0x88] sm:$0xff]
        %v371 = vld [vmem:[%s275 + $0x7] sm:$0x1]
        %v372 = vlaneseq
        %v373 = vshrl.u32 %v372, 7
        %v374 = vsub.s32 0, %v373
        %v375 = vrot.slane %v371, %v374
        %v376 = vmul.f32 %v318, %v375
        %v377 = vmul.f32 %v319, %v375
        %v378 = vmul.f32 %v320, %v375
        %v379 = vmul.f32 %v321, %v375
        %v380 = vmul.f32 %v322, %v375
        %v381 = vmul.f32 %v323, %v375
        %v382 = vmul.f32 %v324, %v375
        %v383 = vmul.f32 %v325, %v375
        %v384 = vmul.f32 %v326, %v375
        %v385 = vmul.f32 %v327, %v375
        %v386 = vmul.f32 %v328, %v375
        %v387 = vmul.f32 %v329, %v375
        %v388 = vmul.f32 %v330, %v375
        %v389 = vmul.f32 %v331, %v375
        %v390 = vmul.f32 %v369, %v375
        %v391 = vmul.f32 %v370, %v375
        %v392 = vadd.f32 %v353, %v376
        %v393 = vadd.f32 %v354, %v377
        %v394 = vadd.f32 %v355, %v378
        %v395 = vadd.f32 %v356, %v379
        %v396 = vadd.f32 %v357, %v380
        %v397 = vadd.f32 %v358, %v381
        %v398 = vadd.f32 %v359, %v382
        %v399 = vadd.f32 %v360, %v383
        %v400 = vadd.f32 %v361, %v384
        %v401 = vadd.f32 %v362, %v385
        %v402 = vadd.f32 %v363, %v386
        %v403 = vadd.f32 %v364, %v387
        %v404 = vadd.f32 %v365, %v388
        %v405 = vadd.f32 %v366, %v389
        %v406 = vadd.f32 %v367, %v390
        %v407 = vadd.f32 %v368, %v391
        %v408 = vld [vmem:[%s267 + $0x90] sm:$0xff]
        %v409 = vld [vmem:[%s267 + $0x98] sm:$0xff]
        %v410 = vld [vmem:[%s275 + $0xe] sm:$0x1]
        %v411 = vlaneseq
        %v412 = vshrl.u32 %v411, 7
        %v413 = vsub.s32 0, %v412
        %v414 = vrot.slane %v410, %v413
        %v415 = vmul.f32 %v320, %v414
        %v416 = vmul.f32 %v321, %v414
        %v417 = vmul.f32 %v322, %v414
        %v418 = vmul.f32 %v323, %v414
        %v419 = vmul.f32 %v324, %v414
        %v420 = vmul.f32 %v325, %v414
        %v421 = vmul.f32 %v326, %v414
        %v422 = vmul.f32 %v327, %v414
        %v423 = vmul.f32 %v328, %v414
        %v424 = vmul.f32 %v329, %v414
        %v425 = vmul.f32 %v330, %v414
        %v426 = vmul.f32 %v331, %v414
        %v427 = vmul.f32 %v369, %v414
        %v428 = vmul.f32 %v370, %v414
        %v429 = vmul.f32 %v408, %v414
        %v430 = vmul.f32 %v409, %v414
        %v431 = vadd.f32 %v392, %v415
        %v432 = vadd.f32 %v393, %v416
        %v433 = vadd.f32 %v394, %v417
        %v434 = vadd.f32 %v395, %v418
        %v435 = vadd.f32 %v396, %v419
        %v436 = vadd.f32 %v397, %v420
        %v437 = vadd.f32 %v398, %v421
        %v438 = vadd.f32 %v399, %v422
        %v439 = vadd.f32 %v400, %v423
        %v440 = vadd.f32 %v401, %v424
        %v441 = vadd.f32 %v402, %v425
        %v442 = vadd.f32 %v403, %v426
        %v443 = vadd.f32 %v404, %v427
        %v444 = vadd.f32 %v405, %v428
        %v445 = vadd.f32 %v406, %v429
        %v446 = vadd.f32 %v407, %v430
        %v447 = vld [vmem:[%s267 + $0xa0] sm:$0xff]
        %v448 = vld [vmem:[%s267 + $0xa8] sm:$0xff]
        %v449 = vld [vmem:[%s275 + $0x15] sm:$0x1]
        %v450 = vlaneseq
        %v451 = vshrl.u32 %v450, 7
        %v452 = vsub.s32 0, %v451
        %v453 = vrot.slane %v449, %v452
        %v454 = vmul.f32 %v322, %v453
        %v455 = vmul.f32 %v323, %v453
        %v456 = vmul.f32 %v324, %v453
        %v457 = vmul.f32 %v325, %v453
        %v458 = vmul.f32 %v326, %v453
        %v459 = vmul.f32 %v327, %v453
        %v460 = vmul.f32 %v328, %v453
        %v461 = vmul.f32 %v329, %v453
        %v462 = vmul.f32 %v330, %v453
        %v463 = vmul.f32 %v331, %v453
        %v464 = vmul.f32 %v369, %v453
        %v465 = vmul.f32 %v370, %v453
        %v466 = vmul.f32 %v408, %v453
        %v467 = vmul.f32 %v409, %v453
        %v468 = vmul.f32 %v447, %v453
        %v469 = vmul.f32 %v448, %v453
        %v470 = vadd.f32 %v431, %v454
        %v471 = vadd.f32 %v432, %v455
        %v472 = vadd.f32 %v433, %v456
        %v473 = vadd.f32 %v434, %v457
        %v474 = vadd.f32 %v435, %v458
        %v475 = vadd.f32 %v436, %v459
        %v476 = vadd.f32 %v437, %v460
        %v477 = vadd.f32 %v438, %v461
        %v478 = vadd.f32 %v439, %v462
        %v479 = vadd.f32 %v440, %v463
        %v480 = vadd.f32 %v441, %v464
        %v481 = vadd.f32 %v442, %v465
        %v482 = vadd.f32 %v443, %v466
        %v483 = vadd.f32 %v444, %v467
        %v484 = vadd.f32 %v445, %v468
        %v485 = vadd.f32 %v446, %v469
        %v486 = vld [vmem:[%s267 + $0xb0] sm:$0xff]
        %v487 = vld [vmem:[%s267 + $0xb8] sm:$0xff]
        %v488 = vld [vmem:[%s275 + $0x1c] sm:$0x1]
        %v489 = vlaneseq
        %v490 = vshrl.u32 %v489, 7
        %v491 = vsub.s32 0, %v490
        %v492 = vrot.slane %v488, %v491
        %v493 = vmul.f32 %v324, %v492
        %v494 = vmul.f32 %v325, %v492
        %v495 = vmul.f32 %v326, %v492
        %v496 = vmul.f32 %v327, %v492
        %v497 = vmul.f32 %v328, %v492
        %v498 = vmul.f32 %v329, %v492
        %v499 = vmul.f32 %v330, %v492
        %v500 = vmul.f32 %v331, %v492
        %v501 = vmul.f32 %v369, %v492
        %v502 = vmul.f32 %v370, %v492
        %v503 = vmul.f32 %v408, %v492
        %v504 = vmul.f32 %v409, %v492
        %v505 = vmul.f32 %v447, %v492
        %v506 = vmul.f32 %v448, %v492
        %v507 = vmul.f32 %v486, %v492
        %v508 = vmul.f32 %v487, %v492
        %v509 = vadd.f32 %v470, %v493
        %v510 = vadd.f32 %v471, %v494
        %v511 = vadd.f32 %v472, %v495
        %v512 = vadd.f32 %v473, %v496
        %v513 = vadd.f32 %v474, %v497
        %v514 = vadd.f32 %v475, %v498
        %v515 = vadd.f32 %v476, %v499
        %v516 = vadd.f32 %v477, %v500
        %v517 = vadd.f32 %v478, %v501
        %v518 = vadd.f32 %v479, %v502
        %v519 = vadd.f32 %v480, %v503
        %v520 = vadd.f32 %v481, %v504
        %v521 = vadd.f32 %v482, %v505
        %v522 = vadd.f32 %v483, %v506
        %v523 = vadd.f32 %v484, %v507
        %v524 = vadd.f32 %v485, %v508
        %v525 = vld [vmem:[%s267 + $0xc0] sm:$0xff]
        %v526 = vld [vmem:[%s267 + $0xc8] sm:$0xff]
        %v527 = vld [vmem:[%s275 + $0x23] sm:$0x1]
        %v528 = vlaneseq
        %v529 = vshrl.u32 %v528, 7
        %v530 = vsub.s32 0, %v529
        %v531 = vrot.slane %v527, %v530
        %v532 = vmul.f32 %v326, %v531
        %v533 = vmul.f32 %v327, %v531
        %v534 = vmul.f32 %v328, %v531
        %v535 = vmul.f32 %v329, %v531
        %v536 = vmul.f32 %v330, %v531
        %v537 = vmul.f32 %v331, %v531
        %v538 = vmul.f32 %v369, %v531
        %v539 = vmul.f32 %v370, %v531
        %v540 = vmul.f32 %v408, %v531
        %v541 = vmul.f32 %v409, %v531
        %v542 = vmul.f32 %v447, %v531
        %v543 = vmul.f32 %v448, %v531
        %v544 = vmul.f32 %v486, %v531
        %v545 = vmul.f32 %v487, %v531
        %v546 = vmul.f32 %v525, %v531
        %v547 = vmul.f32 %v526, %v531
        %v548 = vadd.f32 %v509, %v532
        %v549 = vadd.f32 %v510, %v533
        %v550 = vadd.f32 %v511, %v534
        %v551 = vadd.f32 %v512, %v535
        %v552 = vadd.f32 %v513, %v536
        %v553 = vadd.f32 %v514, %v537
        %v554 = vadd.f32 %v515, %v538
        %v555 = vadd.f32 %v516, %v539
        %v556 = vadd.f32 %v517, %v540
        %v557 = vadd.f32 %v518, %v541
        %v558 = vadd.f32 %v519, %v542
        %v559 = vadd.f32 %v520, %v543
        %v560 = vadd.f32 %v521, %v544
        %v561 = vadd.f32 %v522, %v545
        %v562 = vadd.f32 %v523, %v546
        %v563 = vadd.f32 %v524, %v547
        %v564 = vld [vmem:[%s267 + $0x60] sm:$0xff]
        %v565 = vld [vmem:[%s267 + $0x68] sm:$0xff]
        %v566 = vld [vmem:[%s267 + $0x70] sm:$0xff]
        %v567 = vld [vmem:[%s267 + $0x78] sm:$0xff]
        %v568 = vld [vmem:[%s267 + $0x80] sm:$0xff]
        %v569 = vld [vmem:[%s267 + $0x88] sm:$0xff]
        %v570 = vld [vmem:[%s267 + $0x90] sm:$0xff]
        %v571 = vld [vmem:[%s267 + $0x98] sm:$0xff]
        %v572 = vld [vmem:[%s267 + $0xa0] sm:$0xff]
        %v573 = vld [vmem:[%s267 + $0xa8] sm:$0xff]
        %v574 = vld [vmem:[%s267 + $0xb0] sm:$0xff]
        %v575 = vld [vmem:[%s267 + $0xb8] sm:$0xff]
        %v576 = vld [vmem:[%s267 + $0xc0] sm:$0xff]
        %v577 = vld [vmem:[%s267 + $0xc8] sm:$0xff]
        %v578 = vld [vmem:[%s267 + $0xd0] sm:$0xff]
        %v579 = vld [vmem:[%s267 + $0xd8] sm:$0xff]
        %v580 = vld [vmem:[%s275 + $0x2a] sm:$0x1]
        %v581 = vlaneseq
        %v582 = vshrl.u32 %v581, 7
        %v583 = vsub.s32 0, %v582
        %v584 = vrot.slane %v580, %v583
        %v585 = vmul.f32 %v564, %v584
        %v586 = vmul.f32 %v565, %v584
        %v587 = vmul.f32 %v566, %v584
        %v588 = vmul.f32 %v567, %v584
        %v589 = vmul.f32 %v568, %v584
        %v590 = vmul.f32 %v569, %v584
        %v591 = vmul.f32 %v570, %v584
        %v592 = vmul.f32 %v571, %v584
        %v593 = vmul.f32 %v572, %v584
        %v594 = vmul.f32 %v573, %v584
        %v595 = vmul.f32 %v574, %v584
        %v596 = vmul.f32 %v575, %v584
        %v597 = vmul.f32 %v576, %v584
        %v598 = vmul.f32 %v577, %v584
        %v599 = vmul.f32 %v578, %v584
        %v600 = vmul.f32 %v579, %v584
        %v601 = vadd.f32 %v548, %v585
        %v602 = vadd.f32 %v549, %v586
        %v603 = vadd.f32 %v550, %v587
        %v604 = vadd.f32 %v551, %v588
        %v605 = vadd.f32 %v552, %v589
        %v606 = vadd.f32 %v553, %v590
        %v607 = vadd.f32 %v554, %v591
        %v608 = vadd.f32 %v555, %v592
        %v609 = vadd.f32 %v556, %v593
        %v610 = vadd.f32 %v557, %v594
        %v611 = vadd.f32 %v558, %v595
        %v612 = vadd.f32 %v559, %v596
        %v613 = vadd.f32 %v560, %v597
        %v614 = vadd.f32 %v561, %v598
        %v615 = vadd.f32 %v562, %v599
        %v616 = vadd.f32 %v563, %v600
        %v617 = vld [vmem:[%s267] sm:$0xff]
        %v618 = vld [vmem:[%s267 + $0x8] sm:$0xff]
        %v619 = vld [vmem:[%s267 + $0x10] sm:$0xff]
        %v620 = vld [vmem:[%s267 + $0x18] sm:$0xff]
        %v621 = vld [vmem:[%s267 + $0x20] sm:$0xff]
        %v622 = vld [vmem:[%s267 + $0x28] sm:$0xff]
        %v623 = vld [vmem:[%s267 + $0x30] sm:$0xff]
        %v624 = vld [vmem:[%s267 + $0x38] sm:$0xff]
        %v625 = vld [vmem:[%s267 + $0x40] sm:$0xff]
        %v626 = vld [vmem:[%s267 + $0x48] sm:$0xff]
        %v627 = vld [vmem:[%s267 + $0x50] sm:$0xff]
        %v628 = vld [vmem:[%s267 + $0x58] sm:$0xff]
        %v629 = vrot.slane %v617, 1
        %v630 = vrot.slane %v618, 1
        %v631 = vrot.slane %v619, 1
        %v632 = vrot.slane %v620, 1
        %v633 = vrot.slane %v621, 1
        %v634 = vrot.slane %v622, 1
        %v635 = vrot.slane %v623, 1
        %v636 = vrot.slane %v624, 1
        %v637 = vrot.slane %v625, 1
        %v638 = vrot.slane %v626, 1
        %v639 = vrot.slane %v627, 1
        %v640 = vrot.slane %v628, 1
        %v641 = vrot.slane %v564, 1
        %v642 = vrot.slane %v565, 1
        %v643 = vrot.slane %v566, 1
        %v644 = vrot.slane %v567, 1
        %v645 = vrot.slane %v568, 1
        %v646 = vrot.slane %v569, 1
        %v647 = vrot.slane %v570, 1
        %v648 = vrot.slane %v571, 1
        %v649 = vrot.slane %v572, 1
        %v650 = vrot.slane %v573, 1
        %v651 = vrot.slane %v574, 1
        %v652 = vrot.slane %v575, 1
        %v653 = vrot.slane %v576, 1
        %v654 = vrot.slane %v577, 1
        %v655 = vrot.slane %v578, 1
        %v656 = vrot.slane %v579, 1
        %v657 = vlaneseq
        %v658 = vshrl.u32 %v657, 7
        %vm659 = vcmp.lt.s32.totalorder %v658, 7
        %v660 = vsel %vm659, %v655, %v656
        %v661 = vsel %vm659, %v654, %v655
        %v662 = vsel %vm659, %v653, %v654
        %v663 = vsel %vm659, %v652, %v653
        %v664 = vsel %vm659, %v651, %v652
        %v665 = vsel %vm659, %v650, %v651
        %v666 = vsel %vm659, %v649, %v650
        %v667 = vsel %vm659, %v648, %v649
        %v668 = vsel %vm659, %v647, %v648
        %v669 = vsel %vm659, %v646, %v647
        %v670 = vsel %vm659, %v645, %v646
        %v671 = vsel %vm659, %v644, %v645
        %v672 = vsel %vm659, %v643, %v644
        %v673 = vsel %vm659, %v642, %v643
        %v674 = vsel %vm659, %v641, %v642
        %v675 = vsel %vm659, %v640, %v641
        %v676 = vsel %vm659, %v639, %v640
        %v677 = vsel %vm659, %v638, %v639
        %v678 = vsel %vm659, %v637, %v638
        %v679 = vsel %vm659, %v636, %v637
        %v680 = vsel %vm659, %v635, %v636
        %v681 = vsel %vm659, %v634, %v635
        %v682 = vsel %vm659, %v633, %v634
        %v683 = vsel %vm659, %v632, %v633
        %v684 = vsel %vm659, %v631, %v632
        %v685 = vsel %vm659, %v630, %v631
        %v686 = vsel %vm659, %v629, %v630
        %v687 = vsel %vm659, %v656, %v629
        %688 = vst [vmem:[#allocation2] sm:$0xff] %v686
        %689 = vst [vmem:[#allocation2 + $0x8] sm:$0xff] %v685
        %690 = vst [vmem:[#allocation2 + $0x10] sm:$0xff] %v684
        %691 = vst [vmem:[#allocation2 + $0x18] sm:$0xff] %v683
        %692 = vst [vmem:[#allocation2 + $0x20] sm:$0xff] %v682
        %693 = vst [vmem:[#allocation2 + $0x28] sm:$0xff] %v681
        %694 = vst [vmem:[#allocation2 + $0x30] sm:$0xff] %v680
        %695 = vst [vmem:[#allocation2 + $0x38] sm:$0xff] %v679
        %696 = vst [vmem:[#allocation2 + $0x40] sm:$0xff] %v678
        %697 = vst [vmem:[#allocation2 + $0x48] sm:$0xff] %v677
        %698 = vst [vmem:[#allocation2 + $0x50] sm:$0xff] %v676
        %699 = vst [vmem:[#allocation2 + $0x58] sm:$0xff] %v675
        %700 = vst [vmem:[#allocation2 + $0x60] sm:$0xff] %v674
        %701 = vst [vmem:[#allocation2 + $0x68] sm:$0xff] %v673
        %702 = vst [vmem:[#allocation2 + $0x70] sm:$0xff] %v672
        %703 = vst [vmem:[#allocation2 + $0x78] sm:$0xff] %v671
        %704 = vst [vmem:[#allocation2 + $0x80] sm:$0xff] %v670
        %705 = vst [vmem:[#allocation2 + $0x88] sm:$0xff] %v669
        %706 = vst [vmem:[#allocation2 + $0x90] sm:$0xff] %v668
        %707 = vst [vmem:[#allocation2 + $0x98] sm:$0xff] %v667
        %708 = vst [vmem:[#allocation2 + $0xa0] sm:$0xff] %v666
        %709 = vst [vmem:[#allocation2 + $0xa8] sm:$0xff] %v665
        %710 = vst [vmem:[#allocation2 + $0xb0] sm:$0xff] %v664
        %711 = vst [vmem:[#allocation2 + $0xb8] sm:$0xff] %v663
        %712 = vst [vmem:[#allocation2 + $0xc0] sm:$0xff] %v662
        %713 = vst [vmem:[#allocation2 + $0xc8] sm:$0xff] %v661
        %714 = vst [vmem:[#allocation2 + $0xd0] sm:$0xff] %v660
        %715 = vst [vmem:[#allocation2 + $0xd8] sm:$0xff] %v687
        %v716 = vld [vmem:[#allocation2] sm:$0xff]
        %v717 = vld [vmem:[#allocation2 + $0x8] sm:$0xff]
        %v718 = vld [vmem:[#allocation2 + $0x10] sm:$0xff]
        %v719 = vld [vmem:[#allocation2 + $0x18] sm:$0xff]
        %v720 = vld [vmem:[#allocation2 + $0x20] sm:$0xff]
        %v721 = vld [vmem:[#allocation2 + $0x28] sm:$0xff]
        %v722 = vld [vmem:[#allocation2 + $0x30] sm:$0xff]
        %v723 = vld [vmem:[#allocation2 + $0x38] sm:$0xff]
        %v724 = vld [vmem:[#allocation2 + $0x40] sm:$0xff]
        %v725 = vld [vmem:[#allocation2 + $0x48] sm:$0xff]
        %v726 = vld [vmem:[#allocation2 + $0x50] sm:$0xff]
        %v727 = vld [vmem:[#allocation2 + $0x58] sm:$0xff]
        %v728 = vld [vmem:[#allocation2 + $0x60] sm:$0xff]
        %v729 = vld [vmem:[#allocation2 + $0x68] sm:$0xff]
        %v730 = vld [vmem:[#allocation2 + $0x70] sm:$0xff]
        %v731 = vld [vmem:[#allocation2 + $0x78] sm:$0xff]
        %v732 = vld [vmem:[%s275 + $0x1] sm:$0x1]
        %v733 = vlaneseq
        %v734 = vshrl.u32 %v733, 7
        %v735 = vsub.s32 0, %v734
        %v736 = vrot.slane %v732, %v735
        %v737 = vmul.f32 %v716, %v736
        %v738 = vmul.f32 %v717, %v736
        %v739 = vmul.f32 %v718, %v736
        %v740 = vmul.f32 %v719, %v736
        %v741 = vmul.f32 %v720, %v736
        %v742 = vmul.f32 %v721, %v736
        %v743 = vmul.f32 %v722, %v736
        %v744 = vmul.f32 %v723, %v736
        %v745 = vmul.f32 %v724, %v736
        %v746 = vmul.f32 %v725, %v736
        %v747 = vmul.f32 %v726, %v736
        %v748 = vmul.f32 %v727, %v736
        %v749 = vmul.f32 %v728, %v736
        %v750 = vmul.f32 %v729, %v736
        %v751 = vmul.f32 %v730, %v736
        %v752 = vmul.f32 %v731, %v736
        %v753 = vadd.f32 %v601, %v737
        %v754 = vadd.f32 %v602, %v738
        %v755 = vadd.f32 %v603, %v739
        %v756 = vadd.f32 %v604, %v740
        %v757 = vadd.f32 %v605, %v741
        %v758 = vadd.f32 %v606, %v742
        %v759 = vadd.f32 %v607, %v743
        %v760 = vadd.f32 %v608, %v744
        %v761 = vadd.f32 %v609, %v745
        %v762 = vadd.f32 %v610, %v746
        %v763 = vadd.f32 %v611, %v747
        %v764 = vadd.f32 %v612, %v748
        %v765 = vadd.f32 %v613, %v749
        %v766 = vadd.f32 %v614, %v750
        %v767 = vadd.f32 %v615, %v751
        %v768 = vadd.f32 %v616, %v752
        %v769 = vld [vmem:[#allocation2 + $0x80] sm:$0xff]
        %v770 = vld [vmem:[#allocation2 + $0x88] sm:$0xff]
        %v771 = vld [vmem:[%s275 + $0x8] sm:$0x1]
        %v772 = vlaneseq
        %v773 = vshrl.u32 %v772, 7
        %v774 = vsub.s32 0, %v773
        %v775 = vrot.slane %v771, %v774
        %v776 = vmul.f32 %v718, %v775
        %v777 = vmul.f32 %v719, %v775
        %v778 = vmul.f32 %v720, %v775
        %v779 = vmul.f32 %v721, %v775
        %v780 = vmul.f32 %v722, %v775
        %v781 = vmul.f32 %v723, %v775
        %v782 = vmul.f32 %v724, %v775
        %v783 = vmul.f32 %v725, %v775
        %v784 = vmul.f32 %v726, %v775
        %v785 = vmul.f32 %v727, %v775
        %v786 = vmul.f32 %v728, %v775
        %v787 = vmul.f32 %v729, %v775
        %v788 = vmul.f32 %v730, %v775
        %v789 = vmul.f32 %v731, %v775
        %v790 = vmul.f32 %v769, %v775
        %v791 = vmul.f32 %v770, %v775
        %v792 = vadd.f32 %v753, %v776
        %v793 = vadd.f32 %v754, %v777
        %v794 = vadd.f32 %v755, %v778
        %v795 = vadd.f32 %v756, %v779
        %v796 = vadd.f32 %v757, %v780
        %v797 = vadd.f32 %v758, %v781
        %v798 = vadd.f32 %v759, %v782
        %v799 = vadd.f32 %v760, %v783
        %v800 = vadd.f32 %v761, %v784
        %v801 = vadd.f32 %v762, %v785
        %v802 = vadd.f32 %v763, %v786
        %v803 = vadd.f32 %v764, %v787
        %v804 = vadd.f32 %v765, %v788
        %v805 = vadd.f32 %v766, %v789
        %v806 = vadd.f32 %v767, %v790
        %v807 = vadd.f32 %v768, %v791
        %v808 = vld [vmem:[#allocation2 + $0x90] sm:$0xff]
        %v809 = vld [vmem:[#allocation2 + $0x98] sm:$0xff]
        %v810 = vld [vmem:[%s275 + $0xf] sm:$0x1]
        %v811 = vlaneseq
        %v812 = vshrl.u32 %v811, 7
        %v813 = vsub.s32 0, %v812
        %v814 = vrot.slane %v810, %v813
        %v815 = vmul.f32 %v720, %v814
        %v816 = vmul.f32 %v721, %v814
        %v817 = vmul.f32 %v722, %v814
        %v818 = vmul.f32 %v723, %v814
        %v819 = vmul.f32 %v724, %v814
        %v820 = vmul.f32 %v725, %v814
        %v821 = vmul.f32 %v726, %v814
        %v822 = vmul.f32 %v727, %v814
        %v823 = vmul.f32 %v728, %v814
        %v824 = vmul.f32 %v729, %v814
        %v825 = vmul.f32 %v730, %v814
        %v826 = vmul.f32 %v731, %v814
        %v827 = vmul.f32 %v769, %v814
        %v828 = vmul.f32 %v770, %v814
        %v829 = vmul.f32 %v808, %v814
        %v830 = vmul.f32 %v809, %v814
        %v831 = vadd.f32 %v792, %v815
        %v832 = vadd.f32 %v793, %v816
        %v833 = vadd.f32 %v794, %v817
        %v834 = vadd.f32 %v795, %v818
        %v835 = vadd.f32 %v796, %v819
        %v836 = vadd.f32 %v797, %v820
        %v837 = vadd.f32 %v798, %v821
        %v838 = vadd.f32 %v799, %v822
        %v839 = vadd.f32 %v800, %v823
        %v840 = vadd.f32 %v801, %v824
        %v841 = vadd.f32 %v802, %v825
        %v842 = vadd.f32 %v803, %v826
        %v843 = vadd.f32 %v804, %v827
        %v844 = vadd.f32 %v805, %v828
        %v845 = vadd.f32 %v806, %v829
        %v846 = vadd.f32 %v807, %v830
        %v847 = vld [vmem:[#allocation2 + $0xa0] sm:$0xff]
        %v848 = vld [vmem:[#allocation2 + $0xa8] sm:$0xff]
        %v849 = vld [vmem:[%s275 + $0x16] sm:$0x1]
        %v850 = vlaneseq
        %v851 = vshrl.u32 %v850, 7
        %v852 = vsub.s32 0, %v851
        %v853 = vrot.slane %v849, %v852
        %v854 = vmul.f32 %v722, %v853
        %v855 = vmul.f32 %v723, %v853
        %v856 = vmul.f32 %v724, %v853
        %v857 = vmul.f32 %v725, %v853
        %v858 = vmul.f32 %v726, %v853
        %v859 = vmul.f32 %v727, %v853
        %v860 = vmul.f32 %v728, %v853
        %v861 = vmul.f32 %v729, %v853
        %v862 = vmul.f32 %v730, %v853
        %v863 = vmul.f32 %v731, %v853
        %v864 = vmul.f32 %v769, %v853
        %v865 = vmul.f32 %v770, %v853
        %v866 = vmul.f32 %v808, %v853
        %v867 = vmul.f32 %v809, %v853
        %v868 = vmul.f32 %v847, %v853
        %v869 = vmul.f32 %v848, %v853
        %v870 = vadd.f32 %v831, %v854
        %v871 = vadd.f32 %v832, %v855
        %v872 = vadd.f32 %v833, %v856
        %v873 = vadd.f32 %v834, %v857
        %v874 = vadd.f32 %v835, %v858
        %v875 = vadd.f32 %v836, %v859
        %v876 = vadd.f32 %v837, %v860
        %v877 = vadd.f32 %v838, %v861
        %v878 = vadd.f32 %v839, %v862
        %v879 = vadd.f32 %v840, %v863
        %v880 = vadd.f32 %v841, %v864
        %v881 = vadd.f32 %v842, %v865
        %v882 = vadd.f32 %v843, %v866
        %v883 = vadd.f32 %v844, %v867
        %v884 = vadd.f32 %v845, %v868
        %v885 = vadd.f32 %v846, %v869
        %v886 = vld [vmem:[#allocation2 + $0xb0] sm:$0xff]
        %v887 = vld [vmem:[#allocation2 + $0xb8] sm:$0xff]
        %v888 = vld [vmem:[%s275 + $0x1d] sm:$0x1]
        %v889 = vlaneseq
        %v890 = vshrl.u32 %v889, 7
        %v891 = vsub.s32 0, %v890
        %v892 = vrot.slane %v888, %v891
        %v893 = vmul.f32 %v724, %v892
        %v894 = vmul.f32 %v725, %v892
        %v895 = vmul.f32 %v726, %v892
        %v896 = vmul.f32 %v727, %v892
        %v897 = vmul.f32 %v728, %v892
        %v898 = vmul.f32 %v729, %v892
        %v899 = vmul.f32 %v730, %v892
        %v900 = vmul.f32 %v731, %v892
        %v901 = vmul.f32 %v769, %v892
        %v902 = vmul.f32 %v770, %v892
        %v903 = vmul.f32 %v808, %v892
        %v904 = vmul.f32 %v809, %v892
        %v905 = vmul.f32 %v847, %v892
        %v906 = vmul.f32 %v848, %v892
        %v907 = vmul.f32 %v886, %v892
        %v908 = vmul.f32 %v887, %v892
        %v909 = vadd.f32 %v870, %v893
        %v910 = vadd.f32 %v871, %v894
        %v911 = vadd.f32 %v872, %v895
        %v912 = vadd.f32 %v873, %v896
        %v913 = vadd.f32 %v874, %v897
        %v914 = vadd.f32 %v875, %v898
        %v915 = vadd.f32 %v876, %v899
        %v916 = vadd.f32 %v877, %v900
        %v917 = vadd.f32 %v878, %v901
        %v918 = vadd.f32 %v879, %v902
        %v919 = vadd.f32 %v880, %v903
        %v920 = vadd.f32 %v881, %v904
        %v921 = vadd.f32 %v882, %v905
        %v922 = vadd.f32 %v883, %v906
        %v923 = vadd.f32 %v884, %v907
        %v924 = vadd.f32 %v885, %v908
        %v925 = vld [vmem:[#allocation2 + $0xc0] sm:$0xff]
        %v926 = vld [vmem:[#allocation2 + $0xc8] sm:$0xff]
        %v927 = vld [vmem:[%s275 + $0x24] sm:$0x1]
        %v928 = vlaneseq
        %v929 = vshrl.u32 %v928, 7
        %v930 = vsub.s32 0, %v929
        %v931 = vrot.slane %v927, %v930
        %v932 = vmul.f32 %v726, %v931
        %v933 = vmul.f32 %v727, %v931
        %v934 = vmul.f32 %v728, %v931
        %v935 = vmul.f32 %v729, %v931
        %v936 = vmul.f32 %v730, %v931
        %v937 = vmul.f32 %v731, %v931
        %v938 = vmul.f32 %v769, %v931
        %v939 = vmul.f32 %v770, %v931
        %v940 = vmul.f32 %v808, %v931
        %v941 = vmul.f32 %v809, %v931
        %v942 = vmul.f32 %v847, %v931
        %v943 = vmul.f32 %v848, %v931
        %v944 = vmul.f32 %v886, %v931
        %v945 = vmul.f32 %v887, %v931
        %v946 = vmul.f32 %v925, %v931
        %v947 = vmul.f32 %v926, %v931
        %v948 = vadd.f32 %v909, %v932
        %v949 = vadd.f32 %v910, %v933
        %v950 = vadd.f32 %v911, %v934
        %v951 = vadd.f32 %v912, %v935
        %v952 = vadd.f32 %v913, %v936
        %v953 = vadd.f32 %v914, %v937
        %v954 = vadd.f32 %v915, %v938
        %v955 = vadd.f32 %v916, %v939
        %v956 = vadd.f32 %v917, %v940
        %v957 = vadd.f32 %v918, %v941
        %v958 = vadd.f32 %v919, %v942
        %v959 = vadd.f32 %v920, %v943
        %v960 = vadd.f32 %v921, %v944
        %v961 = vadd.f32 %v922, %v945
        %v962 = vadd.f32 %v923, %v946
        %v963 = vadd.f32 %v924, %v947
        %v964 = vld [vmem:[#allocation2 + $0x60] sm:$0xff]
        %v965 = vld [vmem:[#allocation2 + $0x68] sm:$0xff]
        %v966 = vld [vmem:[#allocation2 + $0x70] sm:$0xff]
        %v967 = vld [vmem:[#allocation2 + $0x78] sm:$0xff]
        %v968 = vld [vmem:[#allocation2 + $0x80] sm:$0xff]
        %v969 = vld [vmem:[#allocation2 + $0x88] sm:$0xff]
        %v970 = vld [vmem:[#allocation2 + $0x90] sm:$0xff]
        %v971 = vld [vmem:[#allocation2 + $0x98] sm:$0xff]
        %v972 = vld [vmem:[#allocation2 + $0xa0] sm:$0xff]
        %v973 = vld [vmem:[#allocation2 + $0xa8] sm:$0xff]
        %v974 = vld [vmem:[#allocation2 + $0xb0] sm:$0xff]
        %v975 = vld [vmem:[#allocation2 + $0xb8] sm:$0xff]
        %v976 = vld [vmem:[#allocation2 + $0xc0] sm:$0xff]
        %v977 = vld [vmem:[#allocation2 + $0xc8] sm:$0xff]
        %v978 = vld [vmem:[#allocation2 + $0xd0] sm:$0xff]
        %v979 = vld [vmem:[#allocation2 + $0xd8] sm:$0xff]
        %v980 = vld [vmem:[%s275 + $0x2b] sm:$0x1]
        %v981 = vlaneseq
        %v982 = vshrl.u32 %v981, 7
        %v983 = vsub.s32 0, %v982
        %v984 = vrot.slane %v980, %v983
        %v985 = vmul.f32 %v964, %v984
        %v986 = vmul.f32 %v965, %v984
        %v987 = vmul.f32 %v966, %v984
        %v988 = vmul.f32 %v967, %v984
        %v989 = vmul.f32 %v968, %v984
        %v990 = vmul.f32 %v969, %v984
        %v991 = vmul.f32 %v970, %v984
        %v992 = vmul.f32 %v971, %v984
        %v993 = vmul.f32 %v972, %v984
        %v994 = vmul.f32 %v973, %v984
        %v995 = vmul.f32 %v974, %v984
        %v996 = vmul.f32 %v975, %v984
        %v997 = vmul.f32 %v976, %v984
        %v998 = vmul.f32 %v977, %v984
        %v999 = vmul.f32 %v978, %v984
        %v1000 = vmul.f32 %v979, %v984
        %v1001 = vadd.f32 %v948, %v985
        %v1002 = vadd.f32 %v949, %v986
        %v1003 = vadd.f32 %v950, %v987
        %v1004 = vadd.f32 %v951, %v988
        %v1005 = vadd.f32 %v952, %v989
        %v1006 = vadd.f32 %v953, %v990
        %v1007 = vadd.f32 %v954, %v991
        %v1008 = vadd.f32 %v955, %v992
        %v1009 = vadd.f32 %v956, %v993
        %v1010 = vadd.f32 %v957, %v994
        %v1011 = vadd.f32 %v958, %v995
        %v1012 = vadd.f32 %v959, %v996
        %v1013 = vadd.f32 %v960, %v997
        %v1014 = vadd.f32 %v961, %v998
        %v1015 = vadd.f32 %v962, %v999
        %v1016 = vadd.f32 %v963, %v1000
        %v1017 = vld [vmem:[%s267] sm:$0xff]
        %v1018 = vld [vmem:[%s267 + $0x8] sm:$0xff]
        %v1019 = vld [vmem:[%s267 + $0x10] sm:$0xff]
        %v1020 = vld [vmem:[%s267 + $0x18] sm:$0xff]
        %v1021 = vld [vmem:[%s267 + $0x20] sm:$0xff]
        %v1022 = vld [vmem:[%s267 + $0x28] sm:$0xff]
        %v1023 = vld [vmem:[%s267 + $0x30] sm:$0xff]
        %v1024 = vld [vmem:[%s267 + $0x38] sm:$0xff]
        %v1025 = vld [vmem:[%s267 + $0x40] sm:$0xff]
        %v1026 = vld [vmem:[%s267 + $0x48] sm:$0xff]
        %v1027 = vld [vmem:[%s267 + $0x50] sm:$0xff]
        %v1028 = vld [vmem:[%s267 + $0x58] sm:$0xff]
        %v1029 = vld [vmem:[%s267 + $0x60] sm:$0xff]
        %v1030 = vld [vmem:[%s267 + $0x68] sm:$0xff]
        %v1031 = vld [vmem:[%s267 + $0x70] sm:$0xff]
        %v1032 = vld [vmem:[%s267 + $0x78] sm:$0xff]
        %v1033 = vld [vmem:[%s267 + $0x80] sm:$0xff]
        %v1034 = vld [vmem:[%s267 + $0x88] sm:$0xff]
        %v1035 = vld [vmem:[%s267 + $0x90] sm:$0xff]
        %v1036 = vld [vmem:[%s267 + $0x98] sm:$0xff]
        %v1037 = vld [vmem:[%s267 + $0xa0] sm:$0xff]
        %v1038 = vld [vmem:[%s267 + $0xa8] sm:$0xff]
        %v1039 = vld [vmem:[%s267 + $0xb0] sm:$0xff]
        %v1040 = vld [vmem:[%s267 + $0xb8] sm:$0xff]
        %v1041 = vld [vmem:[%s267 + $0xc0] sm:$0xff]
        %v1042 = vld [vmem:[%s267 + $0xc8] sm:$0xff]
        %v1043 = vld [vmem:[%s267 + $0xd0] sm:$0xff]
        %v1044 = vld [vmem:[%s267 + $0xd8] sm:$0xff]
        %v1045 = vrot.slane %v1017, 2
        %v1046 = vrot.slane %v1018, 2
        %v1047 = vrot.slane %v1019, 2
        %v1048 = vrot.slane %v1020, 2
        %v1049 = vrot.slane %v1021, 2
        %v1050 = vrot.slane %v1022, 2
        %v1051 = vrot.slane %v1023, 2
        %v1052 = vrot.slane %v1024, 2
        %v1053 = vrot.slane %v1025, 2
        %v1054 = vrot.slane %v1026, 2
        %v1055 = vrot.slane %v1027, 2
        %v1056 = vrot.slane %v1028, 2
        %v1057 = vrot.slane %v1029, 2
        %v1058 = vrot.slane %v1030, 2
        %v1059 = vrot.slane %v1031, 2
        %v1060 = vrot.slane %v1032, 2
        %v1061 = vrot.slane %v1033, 2
        %v1062 = vrot.slane %v1034, 2
        %v1063 = vrot.slane %v1035, 2
        %v1064 = vrot.slane %v1036, 2
        %v1065 = vrot.slane %v1037, 2
        %v1066 = vrot.slane %v1038, 2
        %v1067 = vrot.slane %v1039, 2
        %v1068 = vrot.slane %v1040, 2
        %v1069 = vrot.slane %v1041, 2
        %v1070 = vrot.slane %v1042, 2
        %v1071 = vrot.slane %v1043, 2
        %v1072 = vrot.slane %v1044, 2
        %vm1073 = vcmp.lt.s32.totalorder %v658, 6
        %v1074 = vsel %vm1073, %v1071, %v1072
        %v1075 = vsel %vm1073, %v1070, %v1071
        %v1076 = vsel %vm1073, %v1069, %v1070
        %v1077 = vsel %vm1073, %v1068, %v1069
        %v1078 = vsel %vm1073, %v1067, %v1068
        %v1079 = vsel %vm1073, %v1066, %v1067
        %v1080 = vsel %vm1073, %v1065, %v1066
        %v1081 = vsel %vm1073, %v1064, %v1065
        %v1082 = vsel %vm1073, %v1063, %v1064
        %v1083 = vsel %vm1073, %v1062, %v1063
        %v1084 = vsel %vm1073, %v1061, %v1062
        %v1085 = vsel %vm1073, %v1060, %v1061
        %v1086 = vsel %vm1073, %v1059, %v1060
        %v1087 = vsel %vm1073, %v1058, %v1059
        %v1088 = vsel %vm1073, %v1057, %v1058
        %v1089 = vsel %vm1073, %v1056, %v1057
        %v1090 = vsel %vm1073, %v1055, %v1056
        %v1091 = vsel %vm1073, %v1054, %v1055
        %v1092 = vsel %vm1073, %v1053, %v1054
        %v1093 = vsel %vm1073, %v1052, %v1053
        %v1094 = vsel %vm1073, %v1051, %v1052
        %v1095 = vsel %vm1073, %v1050, %v1051
        %v1096 = vsel %vm1073, %v1049, %v1050
        %v1097 = vsel %vm1073, %v1048, %v1049
        %v1098 = vsel %vm1073, %v1047, %v1048
        %v1099 = vsel %vm1073, %v1046, %v1047
        %v1100 = vsel %vm1073, %v1045, %v1046
        %v1101 = vsel %vm1073, %v1072, %v1045
        %1102 = vst [vmem:[#allocation2] sm:$0xff] %v1100
        %1103 = vst [vmem:[#allocation2 + $0x8] sm:$0xff] %v1099
        %1104 = vst [vmem:[#allocation2 + $0x10] sm:$0xff] %v1098
        %1105 = vst [vmem:[#allocation2 + $0x18] sm:$0xff] %v1097
        %1106 = vst [vmem:[#allocation2 + $0x20] sm:$0xff] %v1096
        %1107 = vst [vmem:[#allocation2 + $0x28] sm:$0xff] %v1095
        %1108 = vst [vmem:[#allocation2 + $0x30] sm:$0xff] %v1094
        %1109 = vst [vmem:[#allocation2 + $0x38] sm:$0xff] %v1093
        %1110 = vst [vmem:[#allocation2 + $0x40] sm:$0xff] %v1092
        %1111 = vst [vmem:[#allocation2 + $0x48] sm:$0xff] %v1091
        %1112 = vst [vmem:[#allocation2 + $0x50] sm:$0xff] %v1090
        %1113 = vst [vmem:[#allocation2 + $0x58] sm:$0xff] %v1089
        %1114 = vst [vmem:[#allocation2 + $0x60] sm:$0xff] %v1088
        %1115 = vst [vmem:[#allocation2 + $0x68] sm:$0xff] %v1087
        %1116 = vst [vmem:[#allocation2 + $0x70] sm:$0xff] %v1086
        %1117 = vst [vmem:[#allocation2 + $0x78] sm:$0xff] %v1085
        %1118 = vst [vmem:[#allocation2 + $0x80] sm:$0xff] %v1084
        %1119 = vst [vmem:[#allocation2 + $0x88] sm:$0xff] %v1083
        %1120 = vst [vmem:[#allocation2 + $0x90] sm:$0xff] %v1082
        %1121 = vst [vmem:[#allocation2 + $0x98] sm:$0xff] %v1081
        %1122 = vst [vmem:[#allocation2 + $0xa0] sm:$0xff] %v1080
        %1123 = vst [vmem:[#allocation2 + $0xa8] sm:$0xff] %v1079
        %1124 = vst [vmem:[#allocation2 + $0xb0] sm:$0xff] %v1078
        %1125 = vst [vmem:[#allocation2 + $0xb8] sm:$0xff] %v1077
        %1126 = vst [vmem:[#allocation2 + $0xc0] sm:$0xff] %v1076
        %1127 = vst [vmem:[#allocation2 + $0xc8] sm:$0xff] %v1075
        %1128 = vst [vmem:[#allocation2 + $0xd0] sm:$0xff] %v1074
        %1129 = vst [vmem:[#allocation2 + $0xd8] sm:$0xff] %v1101
        %v1130 = vld [vmem:[#allocation2] sm:$0xff]
        %v1131 = vld [vmem:[#allocation2 + $0x8] sm:$0xff]
        %v1132 = vld [vmem:[#allocation2 + $0x10] sm:$0xff]
        %v1133 = vld [vmem:[#allocation2 + $0x18] sm:$0xff]
        %v1134 = vld [vmem:[#allocation2 + $0x20] sm:$0xff]
        %v1135 = vld [vmem:[#allocation2 + $0x28] sm:$0xff]
        %v1136 = vld [vmem:[#allocation2 + $0x30] sm:$0xff]
        %v1137 = vld [vmem:[#allocation2 + $0x38] sm:$0xff]
        %v1138 = vld [vmem:[#allocation2 + $0x40] sm:$0xff]
        %v1139 = vld [vmem:[#allocation2 + $0x48] sm:$0xff]
        %v1140 = vld [vmem:[#allocation2 + $0x50] sm:$0xff]
        %v1141 = vld [vmem:[#allocation2 + $0x58] sm:$0xff]
        %v1142 = vld [vmem:[#allocation2 + $0x60] sm:$0xff]
        %v1143 = vld [vmem:[#allocation2 + $0x68] sm:$0xff]
        %v1144 = vld [vmem:[#allocation2 + $0x70] sm:$0xff]
        %v1145 = vld [vmem:[#allocation2 + $0x78] sm:$0xff]
        %v1146 = vld [vmem:[%s275 + $0x2] sm:$0x1]
        %v1147 = vlaneseq
        %v1148 = vshrl.u32 %v1147, 7
        %v1149 = vsub.s32 0, %v1148
        %v1150 = vrot.slane %v1146, %v1149
        %v1151 = vmul.f32 %v1130, %v1150
        %v1152 = vmul.f32 %v1131, %v1150
        %v1153 = vmul.f32 %v1132, %v1150
        %v1154 = vmul.f32 %v1133, %v1150
        %v1155 = vmul.f32 %v1134, %v1150
        %v1156 = vmul.f32 %v1135, %v1150
        %v1157 = vmul.f32 %v1136, %v1150
        %v1158 = vmul.f32 %v1137, %v1150
        %v1159 = vmul.f32 %v1138, %v1150
        %v1160 = vmul.f32 %v1139, %v1150
        %v1161 = vmul.f32 %v1140, %v1150
        %v1162 = vmul.f32 %v1141, %v1150
        %v1163 = vmul.f32 %v1142, %v1150
        %v1164 = vmul.f32 %v1143, %v1150
        %v1165 = vmul.f32 %v1144, %v1150
        %v1166 = vmul.f32 %v1145, %v1150
        %v1167 = vadd.f32 %v1001, %v1151
        %v1168 = vadd.f32 %v1002, %v1152
        %v1169 = vadd.f32 %v1003, %v1153
        %v1170 = vadd.f32 %v1004, %v1154
        %v1171 = vadd.f32 %v1005, %v1155
        %v1172 = vadd.f32 %v1006, %v1156
        %v1173 = vadd.f32 %v1007, %v1157
        %v1174 = vadd.f32 %v1008, %v1158
        %v1175 = vadd.f32 %v1009, %v1159
        %v1176 = vadd.f32 %v1010, %v1160
        %v1177 = vadd.f32 %v1011, %v1161
        %v1178 = vadd.f32 %v1012, %v1162
        %v1179 = vadd.f32 %v1013, %v1163
        %v1180 = vadd.f32 %v1014, %v1164
        %v1181 = vadd.f32 %v1015, %v1165
        %v1182 = vadd.f32 %v1016, %v1166
        %v1183 = vld [vmem:[#allocation2 + $0x80] sm:$0xff]
        %v1184 = vld [vmem:[#allocation2 + $0x88] sm:$0xff]
        %v1185 = vld [vmem:[%s275 + $0x9] sm:$0x1]
        %v1186 = vlaneseq
        %v1187 = vshrl.u32 %v1186, 7
        %v1188 = vsub.s32 0, %v1187
        %v1189 = vrot.slane %v1185, %v1188
        %v1190 = vmul.f32 %v1132, %v1189
        %v1191 = vmul.f32 %v1133, %v1189
        %v1192 = vmul.f32 %v1134, %v1189
        %v1193 = vmul.f32 %v1135, %v1189
        %v1194 = vmul.f32 %v1136, %v1189
        %v1195 = vmul.f32 %v1137, %v1189
        %v1196 = vmul.f32 %v1138, %v1189
        %v1197 = vmul.f32 %v1139, %v1189
        %v1198 = vmul.f32 %v1140, %v1189
        %v1199 = vmul.f32 %v1141, %v1189
        %v1200 = vmul.f32 %v1142, %v1189
        %v1201 = vmul.f32 %v1143, %v1189
        %v1202 = vmul.f32 %v1144, %v1189
        %v1203 = vmul.f32 %v1145, %v1189
        %v1204 = vmul.f32 %v1183, %v1189
        %v1205 = vmul.f32 %v1184, %v1189
        %v1206 = vadd.f32 %v1167, %v1190
        %v1207 = vadd.f32 %v1168, %v1191
        %v1208 = vadd.f32 %v1169, %v1192
        %v1209 = vadd.f32 %v1170, %v1193
        %v1210 = vadd.f32 %v1171, %v1194
        %v1211 = vadd.f32 %v1172, %v1195
        %v1212 = vadd.f32 %v1173, %v1196
        %v1213 = vadd.f32 %v1174, %v1197
        %v1214 = vadd.f32 %v1175, %v1198
        %v1215 = vadd.f32 %v1176, %v1199
        %v1216 = vadd.f32 %v1177, %v1200
        %v1217 = vadd.f32 %v1178, %v1201
        %v1218 = vadd.f32 %v1179, %v1202
        %v1219 = vadd.f32 %v1180, %v1203
        %v1220 = vadd.f32 %v1181, %v1204
        %v1221 = vadd.f32 %v1182, %v1205
        %v1222 = vld [vmem:[#allocation2 + $0x90] sm:$0xff]
        %v1223 = vld [vmem:[#allocation2 + $0x98] sm:$0xff]
        %v1224 = vld [vmem:[%s275 + $0x10] sm:$0x1]
        %v1225 = vlaneseq
        %v1226 = vshrl.u32 %v1225, 7
        %v1227 = vsub.s32 0, %v1226
        %v1228 = vrot.slane %v1224, %v1227
        %v1229 = vmul.f32 %v1134, %v1228
        %v1230 = vmul.f32 %v1135, %v1228
        %v1231 = vmul.f32 %v1136, %v1228
        %v1232 = vmul.f32 %v1137, %v1228
        %v1233 = vmul.f32 %v1138, %v1228
        %v1234 = vmul.f32 %v1139, %v1228
        %v1235 = vmul.f32 %v1140, %v1228
        %v1236 = vmul.f32 %v1141, %v1228
        %v1237 = vmul.f32 %v1142, %v1228
        %v1238 = vmul.f32 %v1143, %v1228
        %v1239 = vmul.f32 %v1144, %v1228
        %v1240 = vmul.f32 %v1145, %v1228
        %v1241 = vmul.f32 %v1183, %v1228
        %v1242 = vmul.f32 %v1184, %v1228
        %v1243 = vmul.f32 %v1222, %v1228
        %v1244 = vmul.f32 %v1223, %v1228
        %v1245 = vadd.f32 %v1206, %v1229
        %v1246 = vadd.f32 %v1207, %v1230
        %v1247 = vadd.f32 %v1208, %v1231
        %v1248 = vadd.f32 %v1209, %v1232
        %v1249 = vadd.f32 %v1210, %v1233
        %v1250 = vadd.f32 %v1211, %v1234
        %v1251 = vadd.f32 %v1212, %v1235
        %v1252 = vadd.f32 %v1213, %v1236
        %v1253 = vadd.f32 %v1214, %v1237
        %v1254 = vadd.f32 %v1215, %v1238
        %v1255 = vadd.f32 %v1216, %v1239
        %v1256 = vadd.f32 %v1217, %v1240
        %v1257 = vadd.f32 %v1218, %v1241
        %v1258 = vadd.f32 %v1219, %v1242
        %v1259 = vadd.f32 %v1220, %v1243
        %v1260 = vadd.f32 %v1221, %v1244
        %v1261 = vld [vmem:[#allocation2 + $0xa0] sm:$0xff]
        %v1262 = vld [vmem:[#allocation2 + $0xa8] sm:$0xff]
        %v1263 = vld [vmem:[%s275 + $0x17] sm:$0x1]
        %v1264 = vlaneseq
        %v1265 = vshrl.u32 %v1264, 7
        %v1266 = vsub.s32 0, %v1265
        %v1267 = vrot.slane %v1263, %v1266
        %v1268 = vmul.f32 %v1136, %v1267
        %v1269 = vmul.f32 %v1137, %v1267
        %v1270 = vmul.f32 %v1138, %v1267
        %v1271 = vmul.f32 %v1139, %v1267
        %v1272 = vmul.f32 %v1140, %v1267
        %v1273 = vmul.f32 %v1141, %v1267
        %v1274 = vmul.f32 %v1142, %v1267
        %v1275 = vmul.f32 %v1143, %v1267
        %v1276 = vmul.f32 %v1144, %v1267
        %v1277 = vmul.f32 %v1145, %v1267
        %v1278 = vmul.f32 %v1183, %v1267
        %v1279 = vmul.f32 %v1184, %v1267
        %v1280 = vmul.f32 %v1222, %v1267
        %v1281 = vmul.f32 %v1223, %v1267
        %v1282 = vmul.f32 %v1261, %v1267
        %v1283 = vmul.f32 %v1262, %v1267
        %v1284 = vadd.f32 %v1245, %v1268
        %v1285 = vadd.f32 %v1246, %v1269
        %v1286 = vadd.f32 %v1247, %v1270
        %v1287 = vadd.f32 %v1248, %v1271
        %v1288 = vadd.f32 %v1249, %v1272
        %v1289 = vadd.f32 %v1250, %v1273
        %v1290 = vadd.f32 %v1251, %v1274
        %v1291 = vadd.f32 %v1252, %v1275
        %v1292 = vadd.f32 %v1253, %v1276
        %v1293 = vadd.f32 %v1254, %v1277
        %v1294 = vadd.f32 %v1255, %v1278
        %v1295 = vadd.f32 %v1256, %v1279
        %v1296 = vadd.f32 %v1257, %v1280
        %v1297 = vadd.f32 %v1258, %v1281
        %v1298 = vadd.f32 %v1259, %v1282
        %v1299 = vadd.f32 %v1260, %v1283
        %v1300 = vld [vmem:[#allocation2 + $0xb0] sm:$0xff]
        %v1301 = vld [vmem:[#allocation2 + $0xb8] sm:$0xff]
        %v1302 = vld [vmem:[%s275 + $0x1e] sm:$0x1]
        %v1303 = vlaneseq
        %v1304 = vshrl.u32 %v1303, 7
        %v1305 = vsub.s32 0, %v1304
        %v1306 = vrot.slane %v1302, %v1305
        %v1307 = vmul.f32 %v1138, %v1306
        %v1308 = vmul.f32 %v1139, %v1306
        %v1309 = vmul.f32 %v1140, %v1306
        %v1310 = vmul.f32 %v1141, %v1306
        %v1311 = vmul.f32 %v1142, %v1306
        %v1312 = vmul.f32 %v1143, %v1306
        %v1313 = vmul.f32 %v1144, %v1306
        %v1314 = vmul.f32 %v1145, %v1306
        %v1315 = vmul.f32 %v1183, %v1306
        %v1316 = vmul.f32 %v1184, %v1306
        %v1317 = vmul.f32 %v1222, %v1306
        %v1318 = vmul.f32 %v1223, %v1306
        %v1319 = vmul.f32 %v1261, %v1306
        %v1320 = vmul.f32 %v1262, %v1306
        %v1321 = vmul.f32 %v1300, %v1306
        %v1322 = vmul.f32 %v1301, %v1306
        %v1323 = vadd.f32 %v1284, %v1307
        %v1324 = vadd.f32 %v1285, %v1308
        %v1325 = vadd.f32 %v1286, %v1309
        %v1326 = vadd.f32 %v1287, %v1310
        %v1327 = vadd.f32 %v1288, %v1311
        %v1328 = vadd.f32 %v1289, %v1312
        %v1329 = vadd.f32 %v1290, %v1313
        %v1330 = vadd.f32 %v1291, %v1314
        %v1331 = vadd.f32 %v1292, %v1315
        %v1332 = vadd.f32 %v1293, %v1316
        %v1333 = vadd.f32 %v1294, %v1317
        %v1334 = vadd.f32 %v1295, %v1318
        %v1335 = vadd.f32 %v1296, %v1319
        %v1336 = vadd.f32 %v1297, %v1320
        %v1337 = vadd.f32 %v1298, %v1321
        %v1338 = vadd.f32 %v1299, %v1322
        %v1339 = vld [vmem:[#allocation2 + $0xc0] sm:$0xff]
        %v1340 = vld [vmem:[#allocation2 + $0xc8] sm:$0xff]
        %v1341 = vld [vmem:[%s275 + $0x25] sm:$0x1]
        %v1342 = vlaneseq
        %v1343 = vshrl.u32 %v1342, 7
        %v1344 = vsub.s32 0, %v1343
        %v1345 = vrot.slane %v1341, %v1344
        %v1346 = vmul.f32 %v1140, %v1345
        %v1347 = vmul.f32 %v1141, %v1345
        %v1348 = vmul.f32 %v1142, %v1345
        %v1349 = vmul.f32 %v1143, %v1345
        %v1350 = vmul.f32 %v1144, %v1345
        %v1351 = vmul.f32 %v1145, %v1345
        %v1352 = vmul.f32 %v1183, %v1345
        %v1353 = vmul.f32 %v1184, %v1345
        %v1354 = vmul.f32 %v1222, %v1345
        %v1355 = vmul.f32 %v1223, %v1345
        %v1356 = vmul.f32 %v1261, %v1345
        %v1357 = vmul.f32 %v1262, %v1345
        %v1358 = vmul.f32 %v1300, %v1345
        %v1359 = vmul.f32 %v1301, %v1345
        %v1360 = vmul.f32 %v1339, %v1345
        %v1361 = vmul.f32 %v1340, %v1345
        %v1362 = vadd.f32 %v1323, %v1346
        %v1363 = vadd.f32 %v1324, %v1347
        %v1364 = vadd.f32 %v1325, %v1348
        %v1365 = vadd.f32 %v1326, %v1349
        %v1366 = vadd.f32 %v1327, %v1350
        %v1367 = vadd.f32 %v1328, %v1351
        %v1368 = vadd.f32 %v1329, %v1352
        %v1369 = vadd.f32 %v1330, %v1353
        %v1370 = vadd.f32 %v1331, %v1354
        %v1371 = vadd.f32 %v1332, %v1355
        %v1372 = vadd.f32 %v1333, %v1356
        %v1373 = vadd.f32 %v1334, %v1357
        %v1374 = vadd.f32 %v1335, %v1358
        %v1375 = vadd.f32 %v1336, %v1359
        %v1376 = vadd.f32 %v1337, %v1360
        %v1377 = vadd.f32 %v1338, %v1361
        %v1378 = vld [vmem:[#allocation2 + $0x60] sm:$0xff]
        %v1379 = vld [vmem:[#allocation2 + $0x68] sm:$0xff]
        %v1380 = vld [vmem:[#allocation2 + $0x70] sm:$0xff]
        %v1381 = vld [vmem:[#allocation2 + $0x78] sm:$0xff]
        %v1382 = vld [vmem:[#allocation2 + $0x80] sm:$0xff]
        %v1383 = vld [vmem:[#allocation2 + $0x88] sm:$0xff]
        %v1384 = vld [vmem:[#allocation2 + $0x90] sm:$0xff]
        %v1385 = vld [vmem:[#allocation2 + $0x98] sm:$0xff]
        %v1386 = vld [vmem:[#allocation2 + $0xa0] sm:$0xff]
        %v1387 = vld [vmem:[#allocation2 + $0xa8] sm:$0xff]
        %v1388 = vld [vmem:[#allocation2 + $0xb0] sm:$0xff]
        %v1389 = vld [vmem:[#allocation2 + $0xb8] sm:$0xff]
        %v1390 = vld [vmem:[#allocation2 + $0xc0] sm:$0xff]
        %v1391 = vld [vmem:[#allocation2 + $0xc8] sm:$0xff]
        %v1392 = vld [vmem:[#allocation2 + $0xd0] sm:$0xff]
        %v1393 = vld [vmem:[#allocation2 + $0xd8] sm:$0xff]
        %v1394 = vld [vmem:[%s275 + $0x2c] sm:$0x1]
        %v1395 = vlaneseq
        %v1396 = vshrl.u32 %v1395, 7
        %v1397 = vsub.s32 0, %v1396
        %v1398 = vrot.slane %v1394, %v1397
        %v1399 = vmul.f32 %v1378, %v1398
        %v1400 = vmul.f32 %v1379, %v1398
        %v1401 = vmul.f32 %v1380, %v1398
        %v1402 = vmul.f32 %v1381, %v1398
        %v1403 = vmul.f32 %v1382, %v1398
        %v1404 = vmul.f32 %v1383, %v1398
        %v1405 = vmul.f32 %v1384, %v1398
        %v1406 = vmul.f32 %v1385, %v1398
        %v1407 = vmul.f32 %v1386, %v1398
        %v1408 = vmul.f32 %v1387, %v1398
        %v1409 = vmul.f32 %v1388, %v1398
        %v1410 = vmul.f32 %v1389, %v1398
        %v1411 = vmul.f32 %v1390, %v1398
        %v1412 = vmul.f32 %v1391, %v1398
        %v1413 = vmul.f32 %v1392, %v1398
        %v1414 = vmul.f32 %v1393, %v1398
        %v1415 = vadd.f32 %v1362, %v1399
        %v1416 = vadd.f32 %v1363, %v1400
        %v1417 = vadd.f32 %v1364, %v1401
        %v1418 = vadd.f32 %v1365, %v1402
        %v1419 = vadd.f32 %v1366, %v1403
        %v1420 = vadd.f32 %v1367, %v1404
        %v1421 = vadd.f32 %v1368, %v1405
        %v1422 = vadd.f32 %v1369, %v1406
        %v1423 = vadd.f32 %v1370, %v1407
        %v1424 = vadd.f32 %v1371, %v1408
        %v1425 = vadd.f32 %v1372, %v1409
        %v1426 = vadd.f32 %v1373, %v1410
        %v1427 = vadd.f32 %v1374, %v1411
        %v1428 = vadd.f32 %v1375, %v1412
        %v1429 = vadd.f32 %v1376, %v1413
        %v1430 = vadd.f32 %v1377, %v1414
        %v1431 = vld [vmem:[%s267] sm:$0xff]
        %v1432 = vld [vmem:[%s267 + $0x8] sm:$0xff]
        %v1433 = vld [vmem:[%s267 + $0x10] sm:$0xff]
        %v1434 = vld [vmem:[%s267 + $0x18] sm:$0xff]
        %v1435 = vld [vmem:[%s267 + $0x20] sm:$0xff]
        %v1436 = vld [vmem:[%s267 + $0x28] sm:$0xff]
        %v1437 = vld [vmem:[%s267 + $0x30] sm:$0xff]
        %v1438 = vld [vmem:[%s267 + $0x38] sm:$0xff]
        %v1439 = vld [vmem:[%s267 + $0x40] sm:$0xff]
        %v1440 = vld [vmem:[%s267 + $0x48] sm:$0xff]
        %v1441 = vld [vmem:[%s267 + $0x50] sm:$0xff]
        %v1442 = vld [vmem:[%s267 + $0x58] sm:$0xff]
        %v1443 = vld [vmem:[%s267 + $0x60] sm:$0xff]
        %v1444 = vld [vmem:[%s267 + $0x68] sm:$0xff]
        %v1445 = vld [vmem:[%s267 + $0x70] sm:$0xff]
        %v1446 = vld [vmem:[%s267 + $0x78] sm:$0xff]
        %v1447 = vld [vmem:[%s267 + $0x80] sm:$0xff]
        %v1448 = vld [vmem:[%s267 + $0x88] sm:$0xff]
        %v1449 = vld [vmem:[%s267 + $0x90] sm:$0xff]
        %v1450 = vld [vmem:[%s267 + $0x98] sm:$0xff]
        %v1451 = vld [vmem:[%s267 + $0xa0] sm:$0xff]
        %v1452 = vld [vmem:[%s267 + $0xa8] sm:$0xff]
        %v1453 = vld [vmem:[%s267 + $0xb0] sm:$0xff]
        %v1454 = vld [vmem:[%s267 + $0xb8] sm:$0xff]
        %v1455 = vld [vmem:[%s267 + $0xc0] sm:$0xff]
        %v1456 = vld [vmem:[%s267 + $0xc8] sm:$0xff]
        %v1457 = vld [vmem:[%s267 + $0xd0] sm:$0xff]
        %v1458 = vld [vmem:[%s267 + $0xd8] sm:$0xff]
        %v1459 = vrot.slane %v1431, 3
        %v1460 = vrot.slane %v1432, 3
        %v1461 = vrot.slane %v1433, 3
        %v1462 = vrot.slane %v1434, 3
        %v1463 = vrot.slane %v1435, 3
        %v1464 = vrot.slane %v1436, 3
        %v1465 = vrot.slane %v1437, 3
        %v1466 = vrot.slane %v1438, 3
        %v1467 = vrot.slane %v1439, 3
        %v1468 = vrot.slane %v1440, 3
        %v1469 = vrot.slane %v1441, 3
        %v1470 = vrot.slane %v1442, 3
        %v1471 = vrot.slane %v1443, 3
        %v1472 = vrot.slane %v1444, 3
        %v1473 = vrot.slane %v1445, 3
        %v1474 = vrot.slane %v1446, 3
        %v1475 = vrot.slane %v1447, 3
        %v1476 = vrot.slane %v1448, 3
        %v1477 = vrot.slane %v1449, 3
        %v1478 = vrot.slane %v1450, 3
        %v1479 = vrot.slane %v1451, 3
        %v1480 = vrot.slane %v1452, 3
        %v1481 = vrot.slane %v1453, 3
        %v1482 = vrot.slane %v1454, 3
        %v1483 = vrot.slane %v1455, 3
        %v1484 = vrot.slane %v1456, 3
        %v1485 = vrot.slane %v1457, 3
        %v1486 = vrot.slane %v1458, 3
        %vm1487 = vcmp.lt.s32.totalorder %v658, 5
        %v1488 = vsel %vm1487, %v1485, %v1486
        %v1489 = vsel %vm1487, %v1484, %v1485
        %v1490 = vsel %vm1487, %v1483, %v1484
        %v1491 = vsel %vm1487, %v1482, %v1483
        %v1492 = vsel %vm1487, %v1481, %v1482
        %v1493 = vsel %vm1487, %v1480, %v1481
        %v1494 = vsel %vm1487, %v1479, %v1480
        %v1495 = vsel %vm1487, %v1478, %v1479
        %v1496 = vsel %vm1487, %v1477, %v1478
        %v1497 = vsel %vm1487, %v1476, %v1477
        %v1498 = vsel %vm1487, %v1475, %v1476
        %v1499 = vsel %vm1487, %v1474, %v1475
        %v1500 = vsel %vm1487, %v1473, %v1474
        %v1501 = vsel %vm1487, %v1472, %v1473
        %v1502 = vsel %vm1487, %v1471, %v1472
        %v1503 = vsel %vm1487, %v1470, %v1471
        %v1504 = vsel %vm1487, %v1469, %v1470
        %v1505 = vsel %vm1487, %v1468, %v1469
        %v1506 = vsel %vm1487, %v1467, %v1468
        %v1507 = vsel %vm1487, %v1466, %v1467
        %v1508 = vsel %vm1487, %v1465, %v1466
        %v1509 = vsel %vm1487, %v1464, %v1465
        %v1510 = vsel %vm1487, %v1463, %v1464
        %v1511 = vsel %vm1487, %v1462, %v1463
        %v1512 = vsel %vm1487, %v1461, %v1462
        %v1513 = vsel %vm1487, %v1460, %v1461
        %v1514 = vsel %vm1487, %v1459, %v1460
        %v1515 = vsel %vm1487, %v1486, %v1459
        %1516 = vst [vmem:[#allocation2] sm:$0xff] %v1514
        %1517 = vst [vmem:[#allocation2 + $0x8] sm:$0xff] %v1513
        %1518 = vst [vmem:[#allocation2 + $0x10] sm:$0xff] %v1512
        %1519 = vst [vmem:[#allocation2 + $0x18] sm:$0xff] %v1511
        %1520 = vst [vmem:[#allocation2 + $0x20] sm:$0xff] %v1510
        %1521 = vst [vmem:[#allocation2 + $0x28] sm:$0xff] %v1509
        %1522 = vst [vmem:[#allocation2 + $0x30] sm:$0xff] %v1508
        %1523 = vst [vmem:[#allocation2 + $0x38] sm:$0xff] %v1507
        %1524 = vst [vmem:[#allocation2 + $0x40] sm:$0xff] %v1506
        %1525 = vst [vmem:[#allocation2 + $0x48] sm:$0xff] %v1505
        %1526 = vst [vmem:[#allocation2 + $0x50] sm:$0xff] %v1504
        %1527 = vst [vmem:[#allocation2 + $0x58] sm:$0xff] %v1503
        %1528 = vst [vmem:[#allocation2 + $0x60] sm:$0xff] %v1502
        %1529 = vst [vmem:[#allocation2 + $0x68] sm:$0xff] %v1501
        %1530 = vst [vmem:[#allocation2 + $0x70] sm:$0xff] %v1500
        %1531 = vst [vmem:[#allocation2 + $0x78] sm:$0xff] %v1499
        %1532 = vst [vmem:[#allocation2 + $0x80] sm:$0xff] %v1498
        %1533 = vst [vmem:[#allocation2 + $0x88] sm:$0xff] %v1497
        %1534 = vst [vmem:[#allocation2 + $0x90] sm:$0xff] %v1496
        %1535 = vst [vmem:[#allocation2 + $0x98] sm:$0xff] %v1495
        %1536 = vst [vmem:[#allocation2 + $0xa0] sm:$0xff] %v1494
        %1537 = vst [vmem:[#allocation2 + $0xa8] sm:$0xff] %v1493
        %1538 = vst [vmem:[#allocation2 + $0xb0] sm:$0xff] %v1492
        %1539 = vst [vmem:[#allocation2 + $0xb8] sm:$0xff] %v1491
        %1540 = vst [vmem:[#allocation2 + $0xc0] sm:$0xff] %v1490
        %1541 = vst [vmem:[#allocation2 + $0xc8] sm:$0xff] %v1489
        %1542 = vst [vmem:[#allocation2 + $0xd0] sm:$0xff] %v1488
        %1543 = vst [vmem:[#allocation2 + $0xd8] sm:$0xff] %v1515
        %v1544 = vld [vmem:[#allocation2 + $0x30] sm:$0xff]
        %v1545 = vld [vmem:[#allocation2 + $0x38] sm:$0xff]
        %v1546 = vld [vmem:[#allocation2 + $0x40] sm:$0xff]
        %v1547 = vld [vmem:[#allocation2 + $0x48] sm:$0xff]
        %v1548 = vld [vmem:[#allocation2 + $0x50] sm:$0xff]
        %v1549 = vld [vmem:[#allocation2 + $0x58] sm:$0xff]
        %v1550 = vld [vmem:[#allocation2 + $0x60] sm:$0xff]
        %v1551 = vld [vmem:[#allocation2 + $0x68] sm:$0xff]
        %v1552 = vld [vmem:[#allocation2 + $0x70] sm:$0xff]
        %v1553 = vld [vmem:[#allocation2 + $0x78] sm:$0xff]
        %v1554 = vld [vmem:[#allocation2 + $0x80] sm:$0xff]
        %v1555 = vld [vmem:[#allocation2 + $0x88] sm:$0xff]
        %v1556 = vld [vmem:[#allocation2 + $0x90] sm:$0xff]
        %v1557 = vld [vmem:[#allocation2 + $0x98] sm:$0xff]
        %v1558 = vld [vmem:[#allocation2 + $0xa0] sm:$0xff]
        %v1559 = vld [vmem:[#allocation2 + $0xa8] sm:$0xff]
        %1560 = vst [vmem:[%s306] sm:$0xff] %v1544
        %1561 = vst [vmem:[%s306 + $0x8] sm:$0xff] %v1545
        %1562 = vst [vmem:[%s306 + $0x10] sm:$0xff] %v1546
        %1563 = vst [vmem:[%s306 + $0x18] sm:$0xff] %v1547
        %1564 = vst [vmem:[%s306 + $0x20] sm:$0xff] %v1548
        %1565 = vst [vmem:[%s306 + $0x28] sm:$0xff] %v1549
        %1566 = vst [vmem:[%s306 + $0x30] sm:$0xff] %v1550
        %1567 = vst [vmem:[%s306 + $0x38] sm:$0xff] %v1551
        %1568 = vst [vmem:[%s306 + $0x40] sm:$0xff] %v1552
        %1569 = vst [vmem:[%s306 + $0x48] sm:$0xff] %v1553
        %1570 = vst [vmem:[%s306 + $0x50] sm:$0xff] %v1554
        %1571 = vst [vmem:[%s306 + $0x58] sm:$0xff] %v1555
        %1572 = vst [vmem:[%s306 + $0x60] sm:$0xff] %v1556
        %1573 = vst [vmem:[%s306 + $0x68] sm:$0xff] %v1557
        %1574 = vst [vmem:[%s306 + $0x70] sm:$0xff] %v1558
        %1575 = vst [vmem:[%s306 + $0x78] sm:$0xff] %v1559
        %v1576 = vld [vmem:[#allocation2] sm:$0xff]
        %v1577 = vld [vmem:[#allocation2 + $0x8] sm:$0xff]
        %v1578 = vld [vmem:[#allocation2 + $0x10] sm:$0xff]
        %v1579 = vld [vmem:[#allocation2 + $0x18] sm:$0xff]
        %v1580 = vld [vmem:[#allocation2 + $0x20] sm:$0xff]
        %v1581 = vld [vmem:[#allocation2 + $0x28] sm:$0xff]
        %v1582 = vld [vmem:[#allocation2 + $0x30] sm:$0xff]
        %v1583 = vld [vmem:[#allocation2 + $0x38] sm:$0xff]
        %v1584 = vld [vmem:[#allocation2 + $0x40] sm:$0xff]
        %v1585 = vld [vmem:[#allocation2 + $0x48] sm:$0xff]
        %v1586 = vld [vmem:[#allocation2 + $0x50] sm:$0xff]
        %v1587 = vld [vmem:[#allocation2 + $0x58] sm:$0xff]
        %v1588 = vld [vmem:[#allocation2 + $0x60] sm:$0xff]
        %v1589 = vld [vmem:[#allocation2 + $0x68] sm:$0xff]
        %v1590 = vld [vmem:[#allocation2 + $0x70] sm:$0xff]
        %v1591 = vld [vmem:[#allocation2 + $0x78] sm:$0xff]
        %v1592 = vld [vmem:[%s275 + $0x3] sm:$0x1]
        %v1593 = vlaneseq
        %v1594 = vshrl.u32 %v1593, 7
        %v1595 = vsub.s32 0, %v1594
        %v1596 = vrot.slane %v1592, %v1595
        %v1597 = vmul.f32 %v1576, %v1596
        %v1598 = vmul.f32 %v1577, %v1596
        %v1599 = vmul.f32 %v1578, %v1596
        %v1600 = vmul.f32 %v1579, %v1596
        %v1601 = vmul.f32 %v1580, %v1596
        %v1602 = vmul.f32 %v1581, %v1596
        %v1603 = vmul.f32 %v1582, %v1596
        %v1604 = vmul.f32 %v1583, %v1596
        %v1605 = vmul.f32 %v1584, %v1596
        %v1606 = vmul.f32 %v1585, %v1596
        %v1607 = vmul.f32 %v1586, %v1596
        %v1608 = vmul.f32 %v1587, %v1596
        %v1609 = vmul.f32 %v1588, %v1596
        %v1610 = vmul.f32 %v1589, %v1596
        %v1611 = vmul.f32 %v1590, %v1596
        %v1612 = vmul.f32 %v1591, %v1596
        %v1613 = vadd.f32 %v1415, %v1597
        %v1614 = vadd.f32 %v1416, %v1598
        %v1615 = vadd.f32 %v1417, %v1599
        %v1616 = vadd.f32 %v1418, %v1600
        %v1617 = vadd.f32 %v1419, %v1601
        %v1618 = vadd.f32 %v1420, %v1602
        %v1619 = vadd.f32 %v1421, %v1603
        %v1620 = vadd.f32 %v1422, %v1604
        %v1621 = vadd.f32 %v1423, %v1605
        %v1622 = vadd.f32 %v1424, %v1606
        %v1623 = vadd.f32 %v1425, %v1607
        %v1624 = vadd.f32 %v1426, %v1608
        %v1625 = vadd.f32 %v1427, %v1609
        %v1626 = vadd.f32 %v1428, %v1610
        %v1627 = vadd.f32 %v1429, %v1611
        %v1628 = vadd.f32 %v1430, %v1612
        %v1629 = vld [vmem:[#allocation2 + $0x80] sm:$0xff]
        %v1630 = vld [vmem:[#allocation2 + $0x88] sm:$0xff]
        %v1631 = vld [vmem:[%s275 + $0xa] sm:$0x1]
        %v1632 = vlaneseq
        %v1633 = vshrl.u32 %v1632, 7
        %v1634 = vsub.s32 0, %v1633
        %v1635 = vrot.slane %v1631, %v1634
        %v1636 = vmul.f32 %v1578, %v1635
        %v1637 = vmul.f32 %v1579, %v1635
        %v1638 = vmul.f32 %v1580, %v1635
        %v1639 = vmul.f32 %v1581, %v1635
        %v1640 = vmul.f32 %v1582, %v1635
        %v1641 = vmul.f32 %v1583, %v1635
        %v1642 = vmul.f32 %v1584, %v1635
        %v1643 = vmul.f32 %v1585, %v1635
        %v1644 = vmul.f32 %v1586, %v1635
        %v1645 = vmul.f32 %v1587, %v1635
        %v1646 = vmul.f32 %v1588, %v1635
        %v1647 = vmul.f32 %v1589, %v1635
        %v1648 = vmul.f32 %v1590, %v1635
        %v1649 = vmul.f32 %v1591, %v1635
        %v1650 = vmul.f32 %v1629, %v1635
        %v1651 = vmul.f32 %v1630, %v1635
        %v1652 = vadd.f32 %v1613, %v1636
        %v1653 = vadd.f32 %v1614, %v1637
        %v1654 = vadd.f32 %v1615, %v1638
        %v1655 = vadd.f32 %v1616, %v1639
        %v1656 = vadd.f32 %v1617, %v1640
        %v1657 = vadd.f32 %v1618, %v1641
        %v1658 = vadd.f32 %v1619, %v1642
        %v1659 = vadd.f32 %v1620, %v1643
        %v1660 = vadd.f32 %v1621, %v1644
        %v1661 = vadd.f32 %v1622, %v1645
        %v1662 = vadd.f32 %v1623, %v1646
        %v1663 = vadd.f32 %v1624, %v1647
        %v1664 = vadd.f32 %v1625, %v1648
        %v1665 = vadd.f32 %v1626, %v1649
        %v1666 = vadd.f32 %v1627, %v1650
        %v1667 = vadd.f32 %v1628, %v1651
        %v1668 = vld [vmem:[#allocation2 + $0x90] sm:$0xff]
        %v1669 = vld [vmem:[#allocation2 + $0x98] sm:$0xff]
        %v1670 = vld [vmem:[%s275 + $0x11] sm:$0x1]
        %v1671 = vlaneseq
        %v1672 = vshrl.u32 %v1671, 7
        %v1673 = vsub.s32 0, %v1672
        %v1674 = vrot.slane %v1670, %v1673
        %v1675 = vmul.f32 %v1580, %v1674
        %v1676 = vmul.f32 %v1581, %v1674
        %v1677 = vmul.f32 %v1582, %v1674
        %v1678 = vmul.f32 %v1583, %v1674
        %v1679 = vmul.f32 %v1584, %v1674
        %v1680 = vmul.f32 %v1585, %v1674
        %v1681 = vmul.f32 %v1586, %v1674
        %v1682 = vmul.f32 %v1587, %v1674
        %v1683 = vmul.f32 %v1588, %v1674
        %v1684 = vmul.f32 %v1589, %v1674
        %v1685 = vmul.f32 %v1590, %v1674
        %v1686 = vmul.f32 %v1591, %v1674
        %v1687 = vmul.f32 %v1629, %v1674
        %v1688 = vmul.f32 %v1630, %v1674
        %v1689 = vmul.f32 %v1668, %v1674
        %v1690 = vmul.f32 %v1669, %v1674
        %v1691 = vadd.f32 %v1652, %v1675
        %v1692 = vadd.f32 %v1653, %v1676
        %v1693 = vadd.f32 %v1654, %v1677
        %v1694 = vadd.f32 %v1655, %v1678
        %v1695 = vadd.f32 %v1656, %v1679
        %v1696 = vadd.f32 %v1657, %v1680
        %v1697 = vadd.f32 %v1658, %v1681
        %v1698 = vadd.f32 %v1659, %v1682
        %v1699 = vadd.f32 %v1660, %v1683
        %v1700 = vadd.f32 %v1661, %v1684
        %v1701 = vadd.f32 %v1662, %v1685
        %v1702 = vadd.f32 %v1663, %v1686
        %v1703 = vadd.f32 %v1664, %v1687
        %v1704 = vadd.f32 %v1665, %v1688
        %v1705 = vadd.f32 %v1666, %v1689
        %v1706 = vadd.f32 %v1667, %v1690
        %v1707 = vld [vmem:[#allocation2 + $0xa0] sm:$0xff]
        %v1708 = vld [vmem:[#allocation2 + $0xa8] sm:$0xff]
        %v1709 = vld [vmem:[%s275 + $0x18] sm:$0x1]
        %v1710 = vlaneseq
        %v1711 = vshrl.u32 %v1710, 7
        %v1712 = vsub.s32 0, %v1711
        %v1713 = vrot.slane %v1709, %v1712
        %v1714 = vmul.f32 %v1582, %v1713
        %v1715 = vmul.f32 %v1583, %v1713
        %v1716 = vmul.f32 %v1584, %v1713
        %v1717 = vmul.f32 %v1585, %v1713
        %v1718 = vmul.f32 %v1586, %v1713
        %v1719 = vmul.f32 %v1587, %v1713
        %v1720 = vmul.f32 %v1588, %v1713
        %v1721 = vmul.f32 %v1589, %v1713
        %v1722 = vmul.f32 %v1590, %v1713
        %v1723 = vmul.f32 %v1591, %v1713
        %v1724 = vmul.f32 %v1629, %v1713
        %v1725 = vmul.f32 %v1630, %v1713
        %v1726 = vmul.f32 %v1668, %v1713
        %v1727 = vmul.f32 %v1669, %v1713
        %v1728 = vmul.f32 %v1707, %v1713
        %v1729 = vmul.f32 %v1708, %v1713
        %v1730 = vadd.f32 %v1691, %v1714
        %v1731 = vadd.f32 %v1692, %v1715
        %v1732 = vadd.f32 %v1693, %v1716
        %v1733 = vadd.f32 %v1694, %v1717
        %v1734 = vadd.f32 %v1695, %v1718
        %v1735 = vadd.f32 %v1696, %v1719
        %v1736 = vadd.f32 %v1697, %v1720
        %v1737 = vadd.f32 %v1698, %v1721
        %v1738 = vadd.f32 %v1699, %v1722
        %v1739 = vadd.f32 %v1700, %v1723
        %v1740 = vadd.f32 %v1701, %v1724
        %v1741 = vadd.f32 %v1702, %v1725
        %v1742 = vadd.f32 %v1703, %v1726
        %v1743 = vadd.f32 %v1704, %v1727
        %v1744 = vadd.f32 %v1705, %v1728
        %v1745 = vadd.f32 %v1706, %v1729
        %v1746 = vld [vmem:[#allocation2 + $0xb0] sm:$0xff]
        %v1747 = vld [vmem:[#allocation2 + $0xb8] sm:$0xff]
        %v1748 = vld [vmem:[%s275 + $0x1f] sm:$0x1]
        %v1749 = vlaneseq
        %v1750 = vshrl.u32 %v1749, 7
        %v1751 = vsub.s32 0, %v1750
        %v1752 = vrot.slane %v1748, %v1751
        %v1753 = vmul.f32 %v1584, %v1752
        %v1754 = vmul.f32 %v1585, %v1752
        %v1755 = vmul.f32 %v1586, %v1752
        %v1756 = vmul.f32 %v1587, %v1752
        %v1757 = vmul.f32 %v1588, %v1752
        %v1758 = vmul.f32 %v1589, %v1752
        %v1759 = vmul.f32 %v1590, %v1752
        %v1760 = vmul.f32 %v1591, %v1752
        %v1761 = vmul.f32 %v1629, %v1752
        %v1762 = vmul.f32 %v1630, %v1752
        %v1763 = vmul.f32 %v1668, %v1752
        %v1764 = vmul.f32 %v1669, %v1752
        %v1765 = vmul.f32 %v1707, %v1752
        %v1766 = vmul.f32 %v1708, %v1752
        %v1767 = vmul.f32 %v1746, %v1752
        %v1768 = vmul.f32 %v1747, %v1752
        %v1769 = vadd.f32 %v1730, %v1753
        %v1770 = vadd.f32 %v1731, %v1754
        %v1771 = vadd.f32 %v1732, %v1755
        %v1772 = vadd.f32 %v1733, %v1756
        %v1773 = vadd.f32 %v1734, %v1757
        %v1774 = vadd.f32 %v1735, %v1758
        %v1775 = vadd.f32 %v1736, %v1759
        %v1776 = vadd.f32 %v1737, %v1760
        %v1777 = vadd.f32 %v1738, %v1761
        %v1778 = vadd.f32 %v1739, %v1762
        %v1779 = vadd.f32 %v1740, %v1763
        %v1780 = vadd.f32 %v1741, %v1764
        %v1781 = vadd.f32 %v1742, %v1765
        %v1782 = vadd.f32 %v1743, %v1766
        %v1783 = vadd.f32 %v1744, %v1767
        %v1784 = vadd.f32 %v1745, %v1768
        %v1785 = vld [vmem:[#allocation2 + $0xc0] sm:$0xff]
        %v1786 = vld [vmem:[#allocation2 + $0xc8] sm:$0xff]
        %v1787 = vld [vmem:[%s275 + $0x26] sm:$0x1]
        %v1788 = vlaneseq
        %v1789 = vshrl.u32 %v1788, 7
        %v1790 = vsub.s32 0, %v1789
        %v1791 = vrot.slane %v1787, %v1790
        %v1792 = vmul.f32 %v1586, %v1791
        %v1793 = vmul.f32 %v1587, %v1791
        %v1794 = vmul.f32 %v1588, %v1791
        %v1795 = vmul.f32 %v1589, %v1791
        %v1796 = vmul.f32 %v1590, %v1791
        %v1797 = vmul.f32 %v1591, %v1791
        %v1798 = vmul.f32 %v1629, %v1791
        %v1799 = vmul.f32 %v1630, %v1791
        %v1800 = vmul.f32 %v1668, %v1791
        %v1801 = vmul.f32 %v1669, %v1791
        %v1802 = vmul.f32 %v1707, %v1791
        %v1803 = vmul.f32 %v1708, %v1791
        %v1804 = vmul.f32 %v1746, %v1791
        %v1805 = vmul.f32 %v1747, %v1791
        %v1806 = vmul.f32 %v1785, %v1791
        %v1807 = vmul.f32 %v1786, %v1791
        %v1808 = vadd.f32 %v1769, %v1792
        %v1809 = vadd.f32 %v1770, %v1793
        %v1810 = vadd.f32 %v1771, %v1794
        %v1811 = vadd.f32 %v1772, %v1795
        %v1812 = vadd.f32 %v1773, %v1796
        %v1813 = vadd.f32 %v1774, %v1797
        %v1814 = vadd.f32 %v1775, %v1798
        %v1815 = vadd.f32 %v1776, %v1799
        %v1816 = vadd.f32 %v1777, %v1800
        %v1817 = vadd.f32 %v1778, %v1801
        %v1818 = vadd.f32 %v1779, %v1802
        %v1819 = vadd.f32 %v1780, %v1803
        %v1820 = vadd.f32 %v1781, %v1804
        %v1821 = vadd.f32 %v1782, %v1805
        %v1822 = vadd.f32 %v1783, %v1806
        %v1823 = vadd.f32 %v1784, %v1807
        %v1824 = vld [vmem:[#allocation2 + $0x60] sm:$0xff]
        %v1825 = vld [vmem:[#allocation2 + $0x68] sm:$0xff]
        %v1826 = vld [vmem:[#allocation2 + $0x70] sm:$0xff]
        %v1827 = vld [vmem:[#allocation2 + $0x78] sm:$0xff]
        %v1828 = vld [vmem:[#allocation2 + $0x80] sm:$0xff]
        %v1829 = vld [vmem:[#allocation2 + $0x88] sm:$0xff]
        %v1830 = vld [vmem:[#allocation2 + $0x90] sm:$0xff]
        %v1831 = vld [vmem:[#allocation2 + $0x98] sm:$0xff]
        %v1832 = vld [vmem:[#allocation2 + $0xa0] sm:$0xff]
        %v1833 = vld [vmem:[#allocation2 + $0xa8] sm:$0xff]
        %v1834 = vld [vmem:[#allocation2 + $0xb0] sm:$0xff]
        %v1835 = vld [vmem:[#allocation2 + $0xb8] sm:$0xff]
        %v1836 = vld [vmem:[#allocation2 + $0xc0] sm:$0xff]
        %v1837 = vld [vmem:[#allocation2 + $0xc8] sm:$0xff]
        %v1838 = vld [vmem:[#allocation2 + $0xd0] sm:$0xff]
        %v1839 = vld [vmem:[#allocation2 + $0xd8] sm:$0xff]
        %v1840 = vld [vmem:[%s275 + $0x2d] sm:$0x1]
        %v1841 = vlaneseq
        %v1842 = vshrl.u32 %v1841, 7
        %v1843 = vsub.s32 0, %v1842
        %v1844 = vrot.slane %v1840, %v1843
        %v1845 = vmul.f32 %v1824, %v1844
        %v1846 = vmul.f32 %v1825, %v1844
        %v1847 = vmul.f32 %v1826, %v1844
        %v1848 = vmul.f32 %v1827, %v1844
        %v1849 = vmul.f32 %v1828, %v1844
        %v1850 = vmul.f32 %v1829, %v1844
        %v1851 = vmul.f32 %v1830, %v1844
        %v1852 = vmul.f32 %v1831, %v1844
        %v1853 = vmul.f32 %v1832, %v1844
        %v1854 = vmul.f32 %v1833, %v1844
        %v1855 = vmul.f32 %v1834, %v1844
        %v1856 = vmul.f32 %v1835, %v1844
        %v1857 = vmul.f32 %v1836, %v1844
        %v1858 = vmul.f32 %v1837, %v1844
        %v1859 = vmul.f32 %v1838, %v1844
        %v1860 = vmul.f32 %v1839, %v1844
        %v1861 = vadd.f32 %v1808, %v1845
        %v1862 = vadd.f32 %v1809, %v1846
        %v1863 = vadd.f32 %v1810, %v1847
        %v1864 = vadd.f32 %v1811, %v1848
        %v1865 = vadd.f32 %v1812, %v1849
        %v1866 = vadd.f32 %v1813, %v1850
        %v1867 = vadd.f32 %v1814, %v1851
        %v1868 = vadd.f32 %v1815, %v1852
        %v1869 = vadd.f32 %v1816, %v1853
        %v1870 = vadd.f32 %v1817, %v1854
        %v1871 = vadd.f32 %v1818, %v1855
        %v1872 = vadd.f32 %v1819, %v1856
        %v1873 = vadd.f32 %v1820, %v1857
        %v1874 = vadd.f32 %v1821, %v1858
        %v1875 = vadd.f32 %v1822, %v1859
        %v1876 = vadd.f32 %v1823, %v1860
        %v1877 = vld [vmem:[%s267] sm:$0xff]
        %v1878 = vld [vmem:[%s267 + $0x8] sm:$0xff]
        %v1879 = vld [vmem:[%s267 + $0x10] sm:$0xff]
        %v1880 = vld [vmem:[%s267 + $0x18] sm:$0xff]
        %v1881 = vld [vmem:[%s267 + $0x20] sm:$0xff]
        %v1882 = vld [vmem:[%s267 + $0x28] sm:$0xff]
        %v1883 = vld [vmem:[%s267 + $0x30] sm:$0xff]
        %v1884 = vld [vmem:[%s267 + $0x38] sm:$0xff]
        %v1885 = vld [vmem:[%s267 + $0x40] sm:$0xff]
        %v1886 = vld [vmem:[%s267 + $0x48] sm:$0xff]
        %v1887 = vld [vmem:[%s267 + $0x50] sm:$0xff]
        %v1888 = vld [vmem:[%s267 + $0x58] sm:$0xff]
        %v1889 = vld [vmem:[%s267 + $0x60] sm:$0xff]
        %v1890 = vld [vmem:[%s267 + $0x68] sm:$0xff]
        %v1891 = vld [vmem:[%s267 + $0x70] sm:$0xff]
        %v1892 = vld [vmem:[%s267 + $0x78] sm:$0xff]
        %v1893 = vld [vmem:[%s267 + $0x80] sm:$0xff]
        %v1894 = vld [vmem:[%s267 + $0x88] sm:$0xff]
        %v1895 = vld [vmem:[%s267 + $0x90] sm:$0xff]
        %v1896 = vld [vmem:[%s267 + $0x98] sm:$0xff]
        %v1897 = vld [vmem:[%s267 + $0xa0] sm:$0xff]
        %v1898 = vld [vmem:[%s267 + $0xa8] sm:$0xff]
        %v1899 = vld [vmem:[%s267 + $0xb0] sm:$0xff]
        %v1900 = vld [vmem:[%s267 + $0xb8] sm:$0xff]
        %v1901 = vld [vmem:[%s267 + $0xc0] sm:$0xff]
        %v1902 = vld [vmem:[%s267 + $0xc8] sm:$0xff]
        %v1903 = vld [vmem:[%s267 + $0xd0] sm:$0xff]
        %v1904 = vld [vmem:[%s267 + $0xd8] sm:$0xff]
        %v1905 = vrot.slane %v1877, 4
        %v1906 = vrot.slane %v1878, 4
        %v1907 = vrot.slane %v1879, 4
        %v1908 = vrot.slane %v1880, 4
        %v1909 = vrot.slane %v1881, 4
        %v1910 = vrot.slane %v1882, 4
        %v1911 = vrot.slane %v1883, 4
        %v1912 = vrot.slane %v1884, 4
        %v1913 = vrot.slane %v1885, 4
        %v1914 = vrot.slane %v1886, 4
        %v1915 = vrot.slane %v1887, 4
        %v1916 = vrot.slane %v1888, 4
        %v1917 = vrot.slane %v1889, 4
        %v1918 = vrot.slane %v1890, 4
        %v1919 = vrot.slane %v1891, 4
        %v1920 = vrot.slane %v1892, 4
        %v1921 = vrot.slane %v1893, 4
        %v1922 = vrot.slane %v1894, 4
        %v1923 = vrot.slane %v1895, 4
        %v1924 = vrot.slane %v1896, 4
        %v1925 = vrot.slane %v1897, 4
        %v1926 = vrot.slane %v1898, 4
        %v1927 = vrot.slane %v1899, 4
        %v1928 = vrot.slane %v1900, 4
        %v1929 = vrot.slane %v1901, 4
        %v1930 = vrot.slane %v1902, 4
        %v1931 = vrot.slane %v1903, 4
        %v1932 = vrot.slane %v1904, 4
        %vm1933 = vcmp.lt.s32.totalorder %v658, 4
        %v1934 = vsel %vm1933, %v1931, %v1932
        %v1935 = vsel %vm1933, %v1930, %v1931
        %v1936 = vsel %vm1933, %v1929, %v1930
        %v1937 = vsel %vm1933, %v1928, %v1929
        %v1938 = vsel %vm1933, %v1927, %v1928
        %v1939 = vsel %vm1933, %v1926, %v1927
        %v1940 = vsel %vm1933, %v1925, %v1926
        %v1941 = vsel %vm1933, %v1924, %v1925
        %v1942 = vsel %vm1933, %v1923, %v1924
        %v1943 = vsel %vm1933, %v1922, %v1923
        %v1944 = vsel %vm1933, %v1921, %v1922
        %v1945 = vsel %vm1933, %v1920, %v1921
        %v1946 = vsel %vm1933, %v1919, %v1920
        %v1947 = vsel %vm1933, %v1918, %v1919
        %v1948 = vsel %vm1933, %v1917, %v1918
        %v1949 = vsel %vm1933, %v1916, %v1917
        %v1950 = vsel %vm1933, %v1915, %v1916
        %v1951 = vsel %vm1933, %v1914, %v1915
        %v1952 = vsel %vm1933, %v1913, %v1914
        %v1953 = vsel %vm1933, %v1912, %v1913
        %v1954 = vsel %vm1933, %v1911, %v1912
        %v1955 = vsel %vm1933, %v1910, %v1911
        %v1956 = vsel %vm1933, %v1909, %v1910
        %v1957 = vsel %vm1933, %v1908, %v1909
        %v1958 = vsel %vm1933, %v1907, %v1908
        %v1959 = vsel %vm1933, %v1906, %v1907
        %v1960 = vsel %vm1933, %v1905, %v1906
        %v1961 = vsel %vm1933, %v1932, %v1905
        %1962 = vst [vmem:[#allocation2] sm:$0xff] %v1960
        %1963 = vst [vmem:[#allocation2 + $0x8] sm:$0xff] %v1959
        %1964 = vst [vmem:[#allocation2 + $0x10] sm:$0xff] %v1958
        %1965 = vst [vmem:[#allocation2 + $0x18] sm:$0xff] %v1957
        %1966 = vst [vmem:[#allocation2 + $0x20] sm:$0xff] %v1956
        %1967 = vst [vmem:[#allocation2 + $0x28] sm:$0xff] %v1955
        %1968 = vst [vmem:[#allocation2 + $0x30] sm:$0xff] %v1954
        %1969 = vst [vmem:[#allocation2 + $0x38] sm:$0xff] %v1953
        %1970 = vst [vmem:[#allocation2 + $0x40] sm:$0xff] %v1952
        %1971 = vst [vmem:[#allocation2 + $0x48] sm:$0xff] %v1951
        %1972 = vst [vmem:[#allocation2 + $0x50] sm:$0xff] %v1950
        %1973 = vst [vmem:[#allocation2 + $0x58] sm:$0xff] %v1949
        %1974 = vst [vmem:[#allocation2 + $0x60] sm:$0xff] %v1948
        %1975 = vst [vmem:[#allocation2 + $0x68] sm:$0xff] %v1947
        %1976 = vst [vmem:[#allocation2 + $0x70] sm:$0xff] %v1946
        %1977 = vst [vmem:[#allocation2 + $0x78] sm:$0xff] %v1945
        %1978 = vst [vmem:[#allocation2 + $0x80] sm:$0xff] %v1944
        %1979 = vst [vmem:[#allocation2 + $0x88] sm:$0xff] %v1943
        %1980 = vst [vmem:[#allocation2 + $0x90] sm:$0xff] %v1942
        %1981 = vst [vmem:[#allocation2 + $0x98] sm:$0xff] %v1941
        %1982 = vst [vmem:[#allocation2 + $0xa0] sm:$0xff] %v1940
        %1983 = vst [vmem:[#allocation2 + $0xa8] sm:$0xff] %v1939
        %1984 = vst [vmem:[#allocation2 + $0xb0] sm:$0xff] %v1938
        %1985 = vst [vmem:[#allocation2 + $0xb8] sm:$0xff] %v1937
        %1986 = vst [vmem:[#allocation2 + $0xc0] sm:$0xff] %v1936
        %1987 = vst [vmem:[#allocation2 + $0xc8] sm:$0xff] %v1935
        %1988 = vst [vmem:[#allocation2 + $0xd0] sm:$0xff] %v1934
        %1989 = vst [vmem:[#allocation2 + $0xd8] sm:$0xff] %v1961
        %v1990 = vld [vmem:[#allocation2] sm:$0xff]
        %v1991 = vld [vmem:[#allocation2 + $0x8] sm:$0xff]
        %v1992 = vld [vmem:[#allocation2 + $0x10] sm:$0xff]
        %v1993 = vld [vmem:[#allocation2 + $0x18] sm:$0xff]
        %v1994 = vld [vmem:[#allocation2 + $0x20] sm:$0xff]
        %v1995 = vld [vmem:[#allocation2 + $0x28] sm:$0xff]
        %v1996 = vld [vmem:[#allocation2 + $0x30] sm:$0xff]
        %v1997 = vld [vmem:[#allocation2 + $0x38] sm:$0xff]
        %v1998 = vld [vmem:[#allocation2 + $0x40] sm:$0xff]
        %v1999 = vld [vmem:[#allocation2 + $0x48] sm:$0xff]
        %v2000 = vld [vmem:[#allocation2 + $0x50] sm:$0xff]
        %v2001 = vld [vmem:[#allocation2 + $0x58] sm:$0xff]
        %v2002 = vld [vmem:[#allocation2 + $0x60] sm:$0xff]
        %v2003 = vld [vmem:[#allocation2 + $0x68] sm:$0xff]
        %v2004 = vld [vmem:[#allocation2 + $0x70] sm:$0xff]
        %v2005 = vld [vmem:[#allocation2 + $0x78] sm:$0xff]
        %v2006 = vld [vmem:[%s275 + $0x4] sm:$0x1]
        %v2007 = vlaneseq
        %v2008 = vshrl.u32 %v2007, 7
        %v2009 = vsub.s32 0, %v2008
        %v2010 = vrot.slane %v2006, %v2009
        %v2011 = vmul.f32 %v1990, %v2010
        %v2012 = vmul.f32 %v1991, %v2010
        %v2013 = vmul.f32 %v1992, %v2010
        %v2014 = vmul.f32 %v1993, %v2010
        %v2015 = vmul.f32 %v1994, %v2010
        %v2016 = vmul.f32 %v1995, %v2010
        %v2017 = vmul.f32 %v1996, %v2010
        %v2018 = vmul.f32 %v1997, %v2010
        %v2019 = vmul.f32 %v1998, %v2010
        %v2020 = vmul.f32 %v1999, %v2010
        %v2021 = vmul.f32 %v2000, %v2010
        %v2022 = vmul.f32 %v2001, %v2010
        %v2023 = vmul.f32 %v2002, %v2010
        %v2024 = vmul.f32 %v2003, %v2010
        %v2025 = vmul.f32 %v2004, %v2010
        %v2026 = vmul.f32 %v2005, %v2010
        %v2027 = vadd.f32 %v1861, %v2011
        %v2028 = vadd.f32 %v1862, %v2012
        %v2029 = vadd.f32 %v1863, %v2013
        %v2030 = vadd.f32 %v1864, %v2014
        %v2031 = vadd.f32 %v1865, %v2015
        %v2032 = vadd.f32 %v1866, %v2016
        %v2033 = vadd.f32 %v1867, %v2017
        %v2034 = vadd.f32 %v1868, %v2018
        %v2035 = vadd.f32 %v1869, %v2019
        %v2036 = vadd.f32 %v1870, %v2020
        %v2037 = vadd.f32 %v1871, %v2021
        %v2038 = vadd.f32 %v1872, %v2022
        %v2039 = vadd.f32 %v1873, %v2023
        %v2040 = vadd.f32 %v1874, %v2024
        %v2041 = vadd.f32 %v1875, %v2025
        %v2042 = vadd.f32 %v1876, %v2026
        %v2043 = vld [vmem:[#allocation2 + $0x80] sm:$0xff]
        %v2044 = vld [vmem:[#allocation2 + $0x88] sm:$0xff]
        %v2045 = vld [vmem:[%s275 + $0xb] sm:$0x1]
        %v2046 = vlaneseq
        %v2047 = vshrl.u32 %v2046, 7
        %v2048 = vsub.s32 0, %v2047
        %v2049 = vrot.slane %v2045, %v2048
        %v2050 = vmul.f32 %v1992, %v2049
        %v2051 = vmul.f32 %v1993, %v2049
        %v2052 = vmul.f32 %v1994, %v2049
        %v2053 = vmul.f32 %v1995, %v2049
        %v2054 = vmul.f32 %v1996, %v2049
        %v2055 = vmul.f32 %v1997, %v2049
        %v2056 = vmul.f32 %v1998, %v2049
        %v2057 = vmul.f32 %v1999, %v2049
        %v2058 = vmul.f32 %v2000, %v2049
        %v2059 = vmul.f32 %v2001, %v2049
        %v2060 = vmul.f32 %v2002, %v2049
        %v2061 = vmul.f32 %v2003, %v2049
        %v2062 = vmul.f32 %v2004, %v2049
        %v2063 = vmul.f32 %v2005, %v2049
        %v2064 = vmul.f32 %v2043, %v2049
        %v2065 = vmul.f32 %v2044, %v2049
        %v2066 = vadd.f32 %v2027, %v2050
        %v2067 = vadd.f32 %v2028, %v2051
        %v2068 = vadd.f32 %v2029, %v2052
        %v2069 = vadd.f32 %v2030, %v2053
        %v2070 = vadd.f32 %v2031, %v2054
        %v2071 = vadd.f32 %v2032, %v2055
        %v2072 = vadd.f32 %v2033, %v2056
        %v2073 = vadd.f32 %v2034, %v2057
        %v2074 = vadd.f32 %v2035, %v2058
        %v2075 = vadd.f32 %v2036, %v2059
        %v2076 = vadd.f32 %v2037, %v2060
        %v2077 = vadd.f32 %v2038, %v2061
        %v2078 = vadd.f32 %v2039, %v2062
        %v2079 = vadd.f32 %v2040, %v2063
        %v2080 = vadd.f32 %v2041, %v2064
        %v2081 = vadd.f32 %v2042, %v2065
        %v2082 = vld [vmem:[#allocation2 + $0x90] sm:$0xff]
        %v2083 = vld [vmem:[#allocation2 + $0x98] sm:$0xff]
        %v2084 = vld [vmem:[%s275 + $0x12] sm:$0x1]
        %v2085 = vlaneseq
        %v2086 = vshrl.u32 %v2085, 7
        %v2087 = vsub.s32 0, %v2086
        %v2088 = vrot.slane %v2084, %v2087
        %v2089 = vmul.f32 %v1994, %v2088
        %v2090 = vmul.f32 %v1995, %v2088
        %v2091 = vmul.f32 %v1996, %v2088
        %v2092 = vmul.f32 %v1997, %v2088
        %v2093 = vmul.f32 %v1998, %v2088
        %v2094 = vmul.f32 %v1999, %v2088
        %v2095 = vmul.f32 %v2000, %v2088
        %v2096 = vmul.f32 %v2001, %v2088
        %v2097 = vmul.f32 %v2002, %v2088
        %v2098 = vmul.f32 %v2003, %v2088
        %v2099 = vmul.f32 %v2004, %v2088
        %v2100 = vmul.f32 %v2005, %v2088
        %v2101 = vmul.f32 %v2043, %v2088
        %v2102 = vmul.f32 %v2044, %v2088
        %v2103 = vmul.f32 %v2082, %v2088
        %v2104 = vmul.f32 %v2083, %v2088
        %v2105 = vadd.f32 %v2066, %v2089
        %v2106 = vadd.f32 %v2067, %v2090
        %v2107 = vadd.f32 %v2068, %v2091
        %v2108 = vadd.f32 %v2069, %v2092
        %v2109 = vadd.f32 %v2070, %v2093
        %v2110 = vadd.f32 %v2071, %v2094
        %v2111 = vadd.f32 %v2072, %v2095
        %v2112 = vadd.f32 %v2073, %v2096
        %v2113 = vadd.f32 %v2074, %v2097
        %v2114 = vadd.f32 %v2075, %v2098
        %v2115 = vadd.f32 %v2076, %v2099
        %v2116 = vadd.f32 %v2077, %v2100
        %v2117 = vadd.f32 %v2078, %v2101
        %v2118 = vadd.f32 %v2079, %v2102
        %v2119 = vadd.f32 %v2080, %v2103
        %v2120 = vadd.f32 %v2081, %v2104
        %v2121 = vld [vmem:[#allocation2 + $0xa0] sm:$0xff]
        %v2122 = vld [vmem:[#allocation2 + $0xa8] sm:$0xff]
        %v2123 = vld [vmem:[%s275 + $0x19] sm:$0x1]
        %v2124 = vlaneseq
        %v2125 = vshrl.u32 %v2124, 7
        %v2126 = vsub.s32 0, %v2125
        %v2127 = vrot.slane %v2123, %v2126
        %v2128 = vmul.f32 %v1996, %v2127
        %v2129 = vmul.f32 %v1997, %v2127
        %v2130 = vmul.f32 %v1998, %v2127
        %v2131 = vmul.f32 %v1999, %v2127
        %v2132 = vmul.f32 %v2000, %v2127
        %v2133 = vmul.f32 %v2001, %v2127
        %v2134 = vmul.f32 %v2002, %v2127
        %v2135 = vmul.f32 %v2003, %v2127
        %v2136 = vmul.f32 %v2004, %v2127
        %v2137 = vmul.f32 %v2005, %v2127
        %v2138 = vmul.f32 %v2043, %v2127
        %v2139 = vmul.f32 %v2044, %v2127
        %v2140 = vmul.f32 %v2082, %v2127
        %v2141 = vmul.f32 %v2083, %v2127
        %v2142 = vmul.f32 %v2121, %v2127
        %v2143 = vmul.f32 %v2122, %v2127
        %v2144 = vadd.f32 %v2105, %v2128
        %v2145 = vadd.f32 %v2106, %v2129
        %v2146 = vadd.f32 %v2107, %v2130
        %v2147 = vadd.f32 %v2108, %v2131
        %v2148 = vadd.f32 %v2109, %v2132
        %v2149 = vadd.f32 %v2110, %v2133
        %v2150 = vadd.f32 %v2111, %v2134
        %v2151 = vadd.f32 %v2112, %v2135
        %v2152 = vadd.f32 %v2113, %v2136
        %v2153 = vadd.f32 %v2114, %v2137
        %v2154 = vadd.f32 %v2115, %v2138
        %v2155 = vadd.f32 %v2116, %v2139
        %v2156 = vadd.f32 %v2117, %v2140
        %v2157 = vadd.f32 %v2118, %v2141
        %v2158 = vadd.f32 %v2119, %v2142
        %v2159 = vadd.f32 %v2120, %v2143
        %v2160 = vld [vmem:[#allocation2 + $0xb0] sm:$0xff]
        %v2161 = vld [vmem:[#allocation2 + $0xb8] sm:$0xff]
        %v2162 = vld [vmem:[%s275 + $0x20] sm:$0x1]
        %v2163 = vlaneseq
        %v2164 = vshrl.u32 %v2163, 7
        %v2165 = vsub.s32 0, %v2164
        %v2166 = vrot.slane %v2162, %v2165
        %v2167 = vmul.f32 %v1998, %v2166
        %v2168 = vmul.f32 %v1999, %v2166
        %v2169 = vmul.f32 %v2000, %v2166
        %v2170 = vmul.f32 %v2001, %v2166
        %v2171 = vmul.f32 %v2002, %v2166
        %v2172 = vmul.f32 %v2003, %v2166
        %v2173 = vmul.f32 %v2004, %v2166
        %v2174 = vmul.f32 %v2005, %v2166
        %v2175 = vmul.f32 %v2043, %v2166
        %v2176 = vmul.f32 %v2044, %v2166
        %v2177 = vmul.f32 %v2082, %v2166
        %v2178 = vmul.f32 %v2083, %v2166
        %v2179 = vmul.f32 %v2121, %v2166
        %v2180 = vmul.f32 %v2122, %v2166
        %v2181 = vmul.f32 %v2160, %v2166
        %v2182 = vmul.f32 %v2161, %v2166
        %v2183 = vadd.f32 %v2144, %v2167
        %v2184 = vadd.f32 %v2145, %v2168
        %v2185 = vadd.f32 %v2146, %v2169
        %v2186 = vadd.f32 %v2147, %v2170
        %v2187 = vadd.f32 %v2148, %v2171
        %v2188 = vadd.f32 %v2149, %v2172
        %v2189 = vadd.f32 %v2150, %v2173
        %v2190 = vadd.f32 %v2151, %v2174
        %v2191 = vadd.f32 %v2152, %v2175
        %v2192 = vadd.f32 %v2153, %v2176
        %v2193 = vadd.f32 %v2154, %v2177
        %v2194 = vadd.f32 %v2155, %v2178
        %v2195 = vadd.f32 %v2156, %v2179
        %v2196 = vadd.f32 %v2157, %v2180
        %v2197 = vadd.f32 %v2158, %v2181
        %v2198 = vadd.f32 %v2159, %v2182
        %v2199 = vld [vmem:[#allocation2 + $0xc0] sm:$0xff]
        %v2200 = vld [vmem:[#allocation2 + $0xc8] sm:$0xff]
        %v2201 = vld [vmem:[%s275 + $0x27] sm:$0x1]
        %v2202 = vlaneseq
        %v2203 = vshrl.u32 %v2202, 7
        %v2204 = vsub.s32 0, %v2203
        %v2205 = vrot.slane %v2201, %v2204
        %v2206 = vmul.f32 %v2000, %v2205
        %v2207 = vmul.f32 %v2001, %v2205
        %v2208 = vmul.f32 %v2002, %v2205
        %v2209 = vmul.f32 %v2003, %v2205
        %v2210 = vmul.f32 %v2004, %v2205
        %v2211 = vmul.f32 %v2005, %v2205
        %v2212 = vmul.f32 %v2043, %v2205
        %v2213 = vmul.f32 %v2044, %v2205
        %v2214 = vmul.f32 %v2082, %v2205
        %v2215 = vmul.f32 %v2083, %v2205
        %v2216 = vmul.f32 %v2121, %v2205
        %v2217 = vmul.f32 %v2122, %v2205
        %v2218 = vmul.f32 %v2160, %v2205
        %v2219 = vmul.f32 %v2161, %v2205
        %v2220 = vmul.f32 %v2199, %v2205
        %v2221 = vmul.f32 %v2200, %v2205
        %v2222 = vadd.f32 %v2183, %v2206
        %v2223 = vadd.f32 %v2184, %v2207
        %v2224 = vadd.f32 %v2185, %v2208
        %v2225 = vadd.f32 %v2186, %v2209
        %v2226 = vadd.f32 %v2187, %v2210
        %v2227 = vadd.f32 %v2188, %v2211
        %v2228 = vadd.f32 %v2189, %v2212
        %v2229 = vadd.f32 %v2190, %v2213
        %v2230 = vadd.f32 %v2191, %v2214
        %v2231 = vadd.f32 %v2192, %v2215
        %v2232 = vadd.f32 %v2193, %v2216
        %v2233 = vadd.f32 %v2194, %v2217
        %v2234 = vadd.f32 %v2195, %v2218
        %v2235 = vadd.f32 %v2196, %v2219
        %v2236 = vadd.f32 %v2197, %v2220
        %v2237 = vadd.f32 %v2198, %v2221
        %v2238 = vld [vmem:[#allocation2 + $0x60] sm:$0xff]
        %v2239 = vld [vmem:[#allocation2 + $0x68] sm:$0xff]
        %v2240 = vld [vmem:[#allocation2 + $0x70] sm:$0xff]
        %v2241 = vld [vmem:[#allocation2 + $0x78] sm:$0xff]
        %v2242 = vld [vmem:[#allocation2 + $0x80] sm:$0xff]
        %v2243 = vld [vmem:[#allocation2 + $0x88] sm:$0xff]
        %v2244 = vld [vmem:[#allocation2 + $0x90] sm:$0xff]
        %v2245 = vld [vmem:[#allocation2 + $0x98] sm:$0xff]
        %v2246 = vld [vmem:[#allocation2 + $0xa0] sm:$0xff]
        %v2247 = vld [vmem:[#allocation2 + $0xa8] sm:$0xff]
        %v2248 = vld [vmem:[#allocation2 + $0xb0] sm:$0xff]
        %v2249 = vld [vmem:[#allocation2 + $0xb8] sm:$0xff]
        %v2250 = vld [vmem:[#allocation2 + $0xc0] sm:$0xff]
        %v2251 = vld [vmem:[#allocation2 + $0xc8] sm:$0xff]
        %v2252 = vld [vmem:[#allocation2 + $0xd0] sm:$0xff]
        %v2253 = vld [vmem:[#allocation2 + $0xd8] sm:$0xff]
        %v2254 = vld [vmem:[%s275 + $0x2e] sm:$0x1]
        %v2255 = vlaneseq
        %v2256 = vshrl.u32 %v2255, 7
        %v2257 = vsub.s32 0, %v2256
        %v2258 = vrot.slane %v2254, %v2257
        %v2259 = vmul.f32 %v2238, %v2258
        %v2260 = vmul.f32 %v2239, %v2258
        %v2261 = vmul.f32 %v2240, %v2258
        %v2262 = vmul.f32 %v2241, %v2258
        %v2263 = vmul.f32 %v2242, %v2258
        %v2264 = vmul.f32 %v2243, %v2258
        %v2265 = vmul.f32 %v2244, %v2258
        %v2266 = vmul.f32 %v2245, %v2258
        %v2267 = vmul.f32 %v2246, %v2258
        %v2268 = vmul.f32 %v2247, %v2258
        %v2269 = vmul.f32 %v2248, %v2258
        %v2270 = vmul.f32 %v2249, %v2258
        %v2271 = vmul.f32 %v2250, %v2258
        %v2272 = vmul.f32 %v2251, %v2258
        %v2273 = vmul.f32 %v2252, %v2258
        %v2274 = vmul.f32 %v2253, %v2258
        %v2275 = vadd.f32 %v2222, %v2259
        %v2276 = vadd.f32 %v2223, %v2260
        %v2277 = vadd.f32 %v2224, %v2261
        %v2278 = vadd.f32 %v2225, %v2262
        %v2279 = vadd.f32 %v2226, %v2263
        %v2280 = vadd.f32 %v2227, %v2264
        %v2281 = vadd.f32 %v2228, %v2265
        %v2282 = vadd.f32 %v2229, %v2266
        %v2283 = vadd.f32 %v2230, %v2267
        %v2284 = vadd.f32 %v2231, %v2268
        %v2285 = vadd.f32 %v2232, %v2269
        %v2286 = vadd.f32 %v2233, %v2270
        %v2287 = vadd.f32 %v2234, %v2271
        %v2288 = vadd.f32 %v2235, %v2272
        %v2289 = vadd.f32 %v2236, %v2273
        %v2290 = vadd.f32 %v2237, %v2274
        %v2291 = vld [vmem:[%s267] sm:$0xff]
        %v2292 = vld [vmem:[%s267 + $0x8] sm:$0xff]
        %v2293 = vld [vmem:[%s267 + $0x10] sm:$0xff]
        %v2294 = vld [vmem:[%s267 + $0x18] sm:$0xff]
        %v2295 = vld [vmem:[%s267 + $0x20] sm:$0xff]
        %v2296 = vld [vmem:[%s267 + $0x28] sm:$0xff]
        %v2297 = vld [vmem:[%s267 + $0x30] sm:$0xff]
        %v2298 = vld [vmem:[%s267 + $0x38] sm:$0xff]
        %v2299 = vld [vmem:[%s267 + $0x40] sm:$0xff]
        %v2300 = vld [vmem:[%s267 + $0x48] sm:$0xff]
        %v2301 = vld [vmem:[%s267 + $0x50] sm:$0xff]
        %v2302 = vld [vmem:[%s267 + $0x58] sm:$0xff]
        %v2303 = vld [vmem:[%s267 + $0x60] sm:$0xff]
        %v2304 = vld [vmem:[%s267 + $0x68] sm:$0xff]
        %v2305 = vld [vmem:[%s267 + $0x70] sm:$0xff]
        %v2306 = vld [vmem:[%s267 + $0x78] sm:$0xff]
        %v2307 = vld [vmem:[%s267 + $0x80] sm:$0xff]
        %v2308 = vld [vmem:[%s267 + $0x88] sm:$0xff]
        %v2309 = vld [vmem:[%s267 + $0x90] sm:$0xff]
        %v2310 = vld [vmem:[%s267 + $0x98] sm:$0xff]
        %v2311 = vld [vmem:[%s267 + $0xa0] sm:$0xff]
        %v2312 = vld [vmem:[%s267 + $0xa8] sm:$0xff]
        %v2313 = vld [vmem:[%s267 + $0xb0] sm:$0xff]
        %v2314 = vld [vmem:[%s267 + $0xb8] sm:$0xff]
        %v2315 = vld [vmem:[%s267 + $0xc0] sm:$0xff]
        %v2316 = vld [vmem:[%s267 + $0xc8] sm:$0xff]
        %v2317 = vld [vmem:[%s267 + $0xd0] sm:$0xff]
        %v2318 = vld [vmem:[%s267 + $0xd8] sm:$0xff]
        %v2319 = vrot.slane %v2291, 5
        %v2320 = vrot.slane %v2292, 5
        %v2321 = vrot.slane %v2293, 5
        %v2322 = vrot.slane %v2294, 5
        %v2323 = vrot.slane %v2295, 5
        %v2324 = vrot.slane %v2296, 5
        %v2325 = vrot.slane %v2297, 5
        %v2326 = vrot.slane %v2298, 5
        %v2327 = vrot.slane %v2299, 5
        %v2328 = vrot.slane %v2300, 5
        %v2329 = vrot.slane %v2301, 5
        %v2330 = vrot.slane %v2302, 5
        %v2331 = vrot.slane %v2303, 5
        %v2332 = vrot.slane %v2304, 5
        %v2333 = vrot.slane %v2305, 5
        %v2334 = vrot.slane %v2306, 5
        %v2335 = vrot.slane %v2307, 5
        %v2336 = vrot.slane %v2308, 5
        %v2337 = vrot.slane %v2309, 5
        %v2338 = vrot.slane %v2310, 5
        %v2339 = vrot.slane %v2311, 5
        %v2340 = vrot.slane %v2312, 5
        %v2341 = vrot.slane %v2313, 5
        %v2342 = vrot.slane %v2314, 5
        %v2343 = vrot.slane %v2315, 5
        %v2344 = vrot.slane %v2316, 5
        %v2345 = vrot.slane %v2317, 5
        %v2346 = vrot.slane %v2318, 5
        %vm2347 = vcmp.lt.s32.totalorder %v658, 3
        %v2348 = vsel %vm2347, %v2345, %v2346
        %v2349 = vsel %vm2347, %v2344, %v2345
        %v2350 = vsel %vm2347, %v2343, %v2344
        %v2351 = vsel %vm2347, %v2342, %v2343
        %v2352 = vsel %vm2347, %v2341, %v2342
        %v2353 = vsel %vm2347, %v2340, %v2341
        %v2354 = vsel %vm2347, %v2339, %v2340
        %v2355 = vsel %vm2347, %v2338, %v2339
        %v2356 = vsel %vm2347, %v2337, %v2338
        %v2357 = vsel %vm2347, %v2336, %v2337
        %v2358 = vsel %vm2347, %v2335, %v2336
        %v2359 = vsel %vm2347, %v2334, %v2335
        %v2360 = vsel %vm2347, %v2333, %v2334
        %v2361 = vsel %vm2347, %v2332, %v2333
        %v2362 = vsel %vm2347, %v2331, %v2332
        %v2363 = vsel %vm2347, %v2330, %v2331
        %v2364 = vsel %vm2347, %v2329, %v2330
        %v2365 = vsel %vm2347, %v2328, %v2329
        %v2366 = vsel %vm2347, %v2327, %v2328
        %v2367 = vsel %vm2347, %v2326, %v2327
        %v2368 = vsel %vm2347, %v2325, %v2326
        %v2369 = vsel %vm2347, %v2324, %v2325
        %v2370 = vsel %vm2347, %v2323, %v2324
        %v2371 = vsel %vm2347, %v2322, %v2323
        %v2372 = vsel %vm2347, %v2321, %v2322
        %v2373 = vsel %vm2347, %v2320, %v2321
        %v2374 = vsel %vm2347, %v2319, %v2320
        %v2375 = vsel %vm2347, %v2346, %v2319
        %2376 = vst [vmem:[#allocation2] sm:$0xff] %v2374
        %2377 = vst [vmem:[#allocation2 + $0x8] sm:$0xff] %v2373
        %2378 = vst [vmem:[#allocation2 + $0x10] sm:$0xff] %v2372
        %2379 = vst [vmem:[#allocation2 + $0x18] sm:$0xff] %v2371
        %2380 = vst [vmem:[#allocation2 + $0x20] sm:$0xff] %v2370
        %2381 = vst [vmem:[#allocation2 + $0x28] sm:$0xff] %v2369
        %2382 = vst [vmem:[#allocation2 + $0x30] sm:$0xff] %v2368
        %2383 = vst [vmem:[#allocation2 + $0x38] sm:$0xff] %v2367
        %2384 = vst [vmem:[#allocation2 + $0x40] sm:$0xff] %v2366
        %2385 = vst [vmem:[#allocation2 + $0x48] sm:$0xff] %v2365
        %2386 = vst [vmem:[#allocation2 + $0x50] sm:$0xff] %v2364
        %2387 = vst [vmem:[#allocation2 + $0x58] sm:$0xff] %v2363
        %2388 = vst [vmem:[#allocation2 + $0x60] sm:$0xff] %v2362
        %2389 = vst [vmem:[#allocation2 + $0x68] sm:$0xff] %v2361
        %2390 = vst [vmem:[#allocation2 + $0x70] sm:$0xff] %v2360
        %2391 = vst [vmem:[#allocation2 + $0x78] sm:$0xff] %v2359
        %2392 = vst [vmem:[#allocation2 + $0x80] sm:$0xff] %v2358
        %2393 = vst [vmem:[#allocation2 + $0x88] sm:$0xff] %v2357
        %2394 = vst [vmem:[#allocation2 + $0x90] sm:$0xff] %v2356
        %2395 = vst [vmem:[#allocation2 + $0x98] sm:$0xff] %v2355
        %2396 = vst [vmem:[#allocation2 + $0xa0] sm:$0xff] %v2354
        %2397 = vst [vmem:[#allocation2 + $0xa8] sm:$0xff] %v2353
        %2398 = vst [vmem:[#allocation2 + $0xb0] sm:$0xff] %v2352
        %2399 = vst [vmem:[#allocation2 + $0xb8] sm:$0xff] %v2351
        %2400 = vst [vmem:[#allocation2 + $0xc0] sm:$0xff] %v2350
        %2401 = vst [vmem:[#allocation2 + $0xc8] sm:$0xff] %v2349
        %2402 = vst [vmem:[#allocation2 + $0xd0] sm:$0xff] %v2348
        %2403 = vst [vmem:[#allocation2 + $0xd8] sm:$0xff] %v2375
        %v2404 = vld [vmem:[#allocation2] sm:$0xff]
        %v2405 = vld [vmem:[#allocation2 + $0x8] sm:$0xff]
        %v2406 = vld [vmem:[#allocation2 + $0x10] sm:$0xff]
        %v2407 = vld [vmem:[#allocation2 + $0x18] sm:$0xff]
        %v2408 = vld [vmem:[#allocation2 + $0x20] sm:$0xff]
        %v2409 = vld [vmem:[#allocation2 + $0x28] sm:$0xff]
        %v2410 = vld [vmem:[#allocation2 + $0x30] sm:$0xff]
        %v2411 = vld [vmem:[#allocation2 + $0x38] sm:$0xff]
        %v2412 = vld [vmem:[#allocation2 + $0x40] sm:$0xff]
        %v2413 = vld [vmem:[#allocation2 + $0x48] sm:$0xff]
        %v2414 = vld [vmem:[#allocation2 + $0x50] sm:$0xff]
        %v2415 = vld [vmem:[#allocation2 + $0x58] sm:$0xff]
        %v2416 = vld [vmem:[#allocation2 + $0x60] sm:$0xff]
        %v2417 = vld [vmem:[#allocation2 + $0x68] sm:$0xff]
        %v2418 = vld [vmem:[#allocation2 + $0x70] sm:$0xff]
        %v2419 = vld [vmem:[#allocation2 + $0x78] sm:$0xff]
        %v2420 = vld [vmem:[%s275 + $0x5] sm:$0x1]
        %v2421 = vlaneseq
        %v2422 = vshrl.u32 %v2421, 7
        %v2423 = vsub.s32 0, %v2422
        %v2424 = vrot.slane %v2420, %v2423
        %v2425 = vmul.f32 %v2404, %v2424
        %v2426 = vmul.f32 %v2405, %v2424
        %v2427 = vmul.f32 %v2406, %v2424
        %v2428 = vmul.f32 %v2407, %v2424
        %v2429 = vmul.f32 %v2408, %v2424
        %v2430 = vmul.f32 %v2409, %v2424
        %v2431 = vmul.f32 %v2410, %v2424
        %v2432 = vmul.f32 %v2411, %v2424
        %v2433 = vmul.f32 %v2412, %v2424
        %v2434 = vmul.f32 %v2413, %v2424
        %v2435 = vmul.f32 %v2414, %v2424
        %v2436 = vmul.f32 %v2415, %v2424
        %v2437 = vmul.f32 %v2416, %v2424
        %v2438 = vmul.f32 %v2417, %v2424
        %v2439 = vmul.f32 %v2418, %v2424
        %v2440 = vmul.f32 %v2419, %v2424
        %v2441 = vadd.f32 %v2275, %v2425
        %v2442 = vadd.f32 %v2276, %v2426
        %v2443 = vadd.f32 %v2277, %v2427
        %v2444 = vadd.f32 %v2278, %v2428
        %v2445 = vadd.f32 %v2279, %v2429
        %v2446 = vadd.f32 %v2280, %v2430
        %v2447 = vadd.f32 %v2281, %v2431
        %v2448 = vadd.f32 %v2282, %v2432
        %v2449 = vadd.f32 %v2283, %v2433
        %v2450 = vadd.f32 %v2284, %v2434
        %v2451 = vadd.f32 %v2285, %v2435
        %v2452 = vadd.f32 %v2286, %v2436
        %v2453 = vadd.f32 %v2287, %v2437
        %v2454 = vadd.f32 %v2288, %v2438
        %v2455 = vadd.f32 %v2289, %v2439
        %v2456 = vadd.f32 %v2290, %v2440
        %v2457 = vld [vmem:[#allocation2 + $0x80] sm:$0xff]
        %v2458 = vld [vmem:[#allocation2 + $0x88] sm:$0xff]
        %v2459 = vld [vmem:[%s275 + $0xc] sm:$0x1]
        %v2460 = vlaneseq
        %v2461 = vshrl.u32 %v2460, 7
        %v2462 = vsub.s32 0, %v2461
        %v2463 = vrot.slane %v2459, %v2462
        %v2464 = vmul.f32 %v2406, %v2463
        %v2465 = vmul.f32 %v2407, %v2463
        %v2466 = vmul.f32 %v2408, %v2463
        %v2467 = vmul.f32 %v2409, %v2463
        %v2468 = vmul.f32 %v2410, %v2463
        %v2469 = vmul.f32 %v2411, %v2463
        %v2470 = vmul.f32 %v2412, %v2463
        %v2471 = vmul.f32 %v2413, %v2463
        %v2472 = vmul.f32 %v2414, %v2463
        %v2473 = vmul.f32 %v2415, %v2463
        %v2474 = vmul.f32 %v2416, %v2463
        %v2475 = vmul.f32 %v2417, %v2463
        %v2476 = vmul.f32 %v2418, %v2463
        %v2477 = vmul.f32 %v2419, %v2463
        %v2478 = vmul.f32 %v2457, %v2463
        %v2479 = vmul.f32 %v2458, %v2463
        %v2480 = vadd.f32 %v2441, %v2464
        %v2481 = vadd.f32 %v2442, %v2465
        %v2482 = vadd.f32 %v2443, %v2466
        %v2483 = vadd.f32 %v2444, %v2467
        %v2484 = vadd.f32 %v2445, %v2468
        %v2485 = vadd.f32 %v2446, %v2469
        %v2486 = vadd.f32 %v2447, %v2470
        %v2487 = vadd.f32 %v2448, %v2471
        %v2488 = vadd.f32 %v2449, %v2472
        %v2489 = vadd.f32 %v2450, %v2473
        %v2490 = vadd.f32 %v2451, %v2474
        %v2491 = vadd.f32 %v2452, %v2475
        %v2492 = vadd.f32 %v2453, %v2476
        %v2493 = vadd.f32 %v2454, %v2477
        %v2494 = vadd.f32 %v2455, %v2478
        %v2495 = vadd.f32 %v2456, %v2479
        %v2496 = vld [vmem:[#allocation2 + $0x90] sm:$0xff]
        %v2497 = vld [vmem:[#allocation2 + $0x98] sm:$0xff]
        %v2498 = vld [vmem:[%s275 + $0x13] sm:$0x1]
        %v2499 = vlaneseq
        %v2500 = vshrl.u32 %v2499, 7
        %v2501 = vsub.s32 0, %v2500
        %v2502 = vrot.slane %v2498, %v2501
        %v2503 = vmul.f32 %v2408, %v2502
        %v2504 = vmul.f32 %v2409, %v2502
        %v2505 = vmul.f32 %v2410, %v2502
        %v2506 = vmul.f32 %v2411, %v2502
        %v2507 = vmul.f32 %v2412, %v2502
        %v2508 = vmul.f32 %v2413, %v2502
        %v2509 = vmul.f32 %v2414, %v2502
        %v2510 = vmul.f32 %v2415, %v2502
        %v2511 = vmul.f32 %v2416, %v2502
        %v2512 = vmul.f32 %v2417, %v2502
        %v2513 = vmul.f32 %v2418, %v2502
        %v2514 = vmul.f32 %v2419, %v2502
        %v2515 = vmul.f32 %v2457, %v2502
        %v2516 = vmul.f32 %v2458, %v2502
        %v2517 = vmul.f32 %v2496, %v2502
        %v2518 = vmul.f32 %v2497, %v2502
        %v2519 = vadd.f32 %v2480, %v2503
        %v2520 = vadd.f32 %v2481, %v2504
        %v2521 = vadd.f32 %v2482, %v2505
        %v2522 = vadd.f32 %v2483, %v2506
        %v2523 = vadd.f32 %v2484, %v2507
        %v2524 = vadd.f32 %v2485, %v2508
        %v2525 = vadd.f32 %v2486, %v2509
        %v2526 = vadd.f32 %v2487, %v2510
        %v2527 = vadd.f32 %v2488, %v2511
        %v2528 = vadd.f32 %v2489, %v2512
        %v2529 = vadd.f32 %v2490, %v2513
        %v2530 = vadd.f32 %v2491, %v2514
        %v2531 = vadd.f32 %v2492, %v2515
        %v2532 = vadd.f32 %v2493, %v2516
        %v2533 = vadd.f32 %v2494, %v2517
        %v2534 = vadd.f32 %v2495, %v2518
        %v2535 = vld [vmem:[#allocation2 + $0xa0] sm:$0xff]
        %v2536 = vld [vmem:[#allocation2 + $0xa8] sm:$0xff]
        %v2537 = vld [vmem:[%s275 + $0x1a] sm:$0x1]
        %v2538 = vlaneseq
        %v2539 = vshrl.u32 %v2538, 7
        %v2540 = vsub.s32 0, %v2539
        %v2541 = vrot.slane %v2537, %v2540
        %v2542 = vmul.f32 %v2410, %v2541
        %v2543 = vmul.f32 %v2411, %v2541
        %v2544 = vmul.f32 %v2412, %v2541
        %v2545 = vmul.f32 %v2413, %v2541
        %v2546 = vmul.f32 %v2414, %v2541
        %v2547 = vmul.f32 %v2415, %v2541
        %v2548 = vmul.f32 %v2416, %v2541
        %v2549 = vmul.f32 %v2417, %v2541
        %v2550 = vmul.f32 %v2418, %v2541
        %v2551 = vmul.f32 %v2419, %v2541
        %v2552 = vmul.f32 %v2457, %v2541
        %v2553 = vmul.f32 %v2458, %v2541
        %v2554 = vmul.f32 %v2496, %v2541
        %v2555 = vmul.f32 %v2497, %v2541
        %v2556 = vmul.f32 %v2535, %v2541
        %v2557 = vmul.f32 %v2536, %v2541
        %v2558 = vadd.f32 %v2519, %v2542
        %v2559 = vadd.f32 %v2520, %v2543
        %v2560 = vadd.f32 %v2521, %v2544
        %v2561 = vadd.f32 %v2522, %v2545
        %v2562 = vadd.f32 %v2523, %v2546
        %v2563 = vadd.f32 %v2524, %v2547
        %v2564 = vadd.f32 %v2525, %v2548
        %v2565 = vadd.f32 %v2526, %v2549
        %v2566 = vadd.f32 %v2527, %v2550
        %v2567 = vadd.f32 %v2528, %v2551
        %v2568 = vadd.f32 %v2529, %v2552
        %v2569 = vadd.f32 %v2530, %v2553
        %v2570 = vadd.f32 %v2531, %v2554
        %v2571 = vadd.f32 %v2532, %v2555
        %v2572 = vadd.f32 %v2533, %v2556
        %v2573 = vadd.f32 %v2534, %v2557
        %v2574 = vld [vmem:[#allocation2 + $0xb0] sm:$0xff]
        %v2575 = vld [vmem:[#allocation2 + $0xb8] sm:$0xff]
        %v2576 = vld [vmem:[%s275 + $0x21] sm:$0x1]
        %v2577 = vlaneseq
        %v2578 = vshrl.u32 %v2577, 7
        %v2579 = vsub.s32 0, %v2578
        %v2580 = vrot.slane %v2576, %v2579
        %v2581 = vmul.f32 %v2412, %v2580
        %v2582 = vmul.f32 %v2413, %v2580
        %v2583 = vmul.f32 %v2414, %v2580
        %v2584 = vmul.f32 %v2415, %v2580
        %v2585 = vmul.f32 %v2416, %v2580
        %v2586 = vmul.f32 %v2417, %v2580
        %v2587 = vmul.f32 %v2418, %v2580
        %v2588 = vmul.f32 %v2419, %v2580
        %v2589 = vmul.f32 %v2457, %v2580
        %v2590 = vmul.f32 %v2458, %v2580
        %v2591 = vmul.f32 %v2496, %v2580
        %v2592 = vmul.f32 %v2497, %v2580
        %v2593 = vmul.f32 %v2535, %v2580
        %v2594 = vmul.f32 %v2536, %v2580
        %v2595 = vmul.f32 %v2574, %v2580
        %v2596 = vmul.f32 %v2575, %v2580
        %v2597 = vadd.f32 %v2558, %v2581
        %v2598 = vadd.f32 %v2559, %v2582
        %v2599 = vadd.f32 %v2560, %v2583
        %v2600 = vadd.f32 %v2561, %v2584
        %v2601 = vadd.f32 %v2562, %v2585
        %v2602 = vadd.f32 %v2563, %v2586
        %v2603 = vadd.f32 %v2564, %v2587
        %v2604 = vadd.f32 %v2565, %v2588
        %v2605 = vadd.f32 %v2566, %v2589
        %v2606 = vadd.f32 %v2567, %v2590
        %v2607 = vadd.f32 %v2568, %v2591
        %v2608 = vadd.f32 %v2569, %v2592
        %v2609 = vadd.f32 %v2570, %v2593
        %v2610 = vadd.f32 %v2571, %v2594
        %v2611 = vadd.f32 %v2572, %v2595
        %v2612 = vadd.f32 %v2573, %v2596
        %v2613 = vld [vmem:[#allocation2 + $0xc0] sm:$0xff]
        %v2614 = vld [vmem:[#allocation2 + $0xc8] sm:$0xff]
        %v2615 = vld [vmem:[%s275 + $0x28] sm:$0x1]
        %v2616 = vlaneseq
        %v2617 = vshrl.u32 %v2616, 7
        %v2618 = vsub.s32 0, %v2617
        %v2619 = vrot.slane %v2615, %v2618
        %v2620 = vmul.f32 %v2414, %v2619
        %v2621 = vmul.f32 %v2415, %v2619
        %v2622 = vmul.f32 %v2416, %v2619
        %v2623 = vmul.f32 %v2417, %v2619
        %v2624 = vmul.f32 %v2418, %v2619
        %v2625 = vmul.f32 %v2419, %v2619
        %v2626 = vmul.f32 %v2457, %v2619
        %v2627 = vmul.f32 %v2458, %v2619
        %v2628 = vmul.f32 %v2496, %v2619
        %v2629 = vmul.f32 %v2497, %v2619
        %v2630 = vmul.f32 %v2535, %v2619
        %v2631 = vmul.f32 %v2536, %v2619
        %v2632 = vmul.f32 %v2574, %v2619
        %v2633 = vmul.f32 %v2575, %v2619
        %v2634 = vmul.f32 %v2613, %v2619
        %v2635 = vmul.f32 %v2614, %v2619
        %v2636 = vadd.f32 %v2597, %v2620
        %v2637 = vadd.f32 %v2598, %v2621
        %v2638 = vadd.f32 %v2599, %v2622
        %v2639 = vadd.f32 %v2600, %v2623
        %v2640 = vadd.f32 %v2601, %v2624
        %v2641 = vadd.f32 %v2602, %v2625
        %v2642 = vadd.f32 %v2603, %v2626
        %v2643 = vadd.f32 %v2604, %v2627
        %v2644 = vadd.f32 %v2605, %v2628
        %v2645 = vadd.f32 %v2606, %v2629
        %v2646 = vadd.f32 %v2607, %v2630
        %v2647 = vadd.f32 %v2608, %v2631
        %v2648 = vadd.f32 %v2609, %v2632
        %v2649 = vadd.f32 %v2610, %v2633
        %v2650 = vadd.f32 %v2611, %v2634
        %v2651 = vadd.f32 %v2612, %v2635
        %v2652 = vld [vmem:[#allocation2 + $0x60] sm:$0xff]
        %v2653 = vld [vmem:[#allocation2 + $0x68] sm:$0xff]
        %v2654 = vld [vmem:[#allocation2 + $0x70] sm:$0xff]
        %v2655 = vld [vmem:[#allocation2 + $0x78] sm:$0xff]
        %v2656 = vld [vmem:[#allocation2 + $0x80] sm:$0xff]
        %v2657 = vld [vmem:[#allocation2 + $0x88] sm:$0xff]
        %v2658 = vld [vmem:[#allocation2 + $0x90] sm:$0xff]
        %v2659 = vld [vmem:[#allocation2 + $0x98] sm:$0xff]
        %v2660 = vld [vmem:[#allocation2 + $0xa0] sm:$0xff]
        %v2661 = vld [vmem:[#allocation2 + $0xa8] sm:$0xff]
        %v2662 = vld [vmem:[#allocation2 + $0xb0] sm:$0xff]
        %v2663 = vld [vmem:[#allocation2 + $0xb8] sm:$0xff]
        %v2664 = vld [vmem:[#allocation2 + $0xc0] sm:$0xff]
        %v2665 = vld [vmem:[#allocation2 + $0xc8] sm:$0xff]
        %v2666 = vld [vmem:[#allocation2 + $0xd0] sm:$0xff]
        %v2667 = vld [vmem:[#allocation2 + $0xd8] sm:$0xff]
        %v2668 = vld [vmem:[%s275 + $0x2f] sm:$0x1]
        %v2669 = vlaneseq
        %v2670 = vshrl.u32 %v2669, 7
        %v2671 = vsub.s32 0, %v2670
        %v2672 = vrot.slane %v2668, %v2671
        %v2673 = vmul.f32 %v2652, %v2672
        %v2674 = vmul.f32 %v2653, %v2672
        %v2675 = vmul.f32 %v2654, %v2672
        %v2676 = vmul.f32 %v2655, %v2672
        %v2677 = vmul.f32 %v2656, %v2672
        %v2678 = vmul.f32 %v2657, %v2672
        %v2679 = vmul.f32 %v2658, %v2672
        %v2680 = vmul.f32 %v2659, %v2672
        %v2681 = vmul.f32 %v2660, %v2672
        %v2682 = vmul.f32 %v2661, %v2672
        %v2683 = vmul.f32 %v2662, %v2672
        %v2684 = vmul.f32 %v2663, %v2672
        %v2685 = vmul.f32 %v2664, %v2672
        %v2686 = vmul.f32 %v2665, %v2672
        %v2687 = vmul.f32 %v2666, %v2672
        %v2688 = vmul.f32 %v2667, %v2672
        %v2689 = vadd.f32 %v2636, %v2673
        %v2690 = vadd.f32 %v2637, %v2674
        %v2691 = vadd.f32 %v2638, %v2675
        %v2692 = vadd.f32 %v2639, %v2676
        %v2693 = vadd.f32 %v2640, %v2677
        %v2694 = vadd.f32 %v2641, %v2678
        %v2695 = vadd.f32 %v2642, %v2679
        %v2696 = vadd.f32 %v2643, %v2680
        %v2697 = vadd.f32 %v2644, %v2681
        %v2698 = vadd.f32 %v2645, %v2682
        %v2699 = vadd.f32 %v2646, %v2683
        %v2700 = vadd.f32 %v2647, %v2684
        %v2701 = vadd.f32 %v2648, %v2685
        %v2702 = vadd.f32 %v2649, %v2686
        %v2703 = vadd.f32 %v2650, %v2687
        %v2704 = vadd.f32 %v2651, %v2688
        %v2705 = vld [vmem:[%s267] sm:$0xff]
        %v2706 = vld [vmem:[%s267 + $0x8] sm:$0xff]
        %v2707 = vld [vmem:[%s267 + $0x10] sm:$0xff]
        %v2708 = vld [vmem:[%s267 + $0x18] sm:$0xff]
        %v2709 = vld [vmem:[%s267 + $0x20] sm:$0xff]
        %v2710 = vld [vmem:[%s267 + $0x28] sm:$0xff]
        %v2711 = vld [vmem:[%s267 + $0x30] sm:$0xff]
        %v2712 = vld [vmem:[%s267 + $0x38] sm:$0xff]
        %v2713 = vld [vmem:[%s267 + $0x40] sm:$0xff]
        %v2714 = vld [vmem:[%s267 + $0x48] sm:$0xff]
        %v2715 = vld [vmem:[%s267 + $0x50] sm:$0xff]
        %v2716 = vld [vmem:[%s267 + $0x58] sm:$0xff]
        %v2717 = vld [vmem:[%s267 + $0x60] sm:$0xff]
        %v2718 = vld [vmem:[%s267 + $0x68] sm:$0xff]
        %v2719 = vld [vmem:[%s267 + $0x70] sm:$0xff]
        %v2720 = vld [vmem:[%s267 + $0x78] sm:$0xff]
        %v2721 = vld [vmem:[%s267 + $0x80] sm:$0xff]
        %v2722 = vld [vmem:[%s267 + $0x88] sm:$0xff]
        %v2723 = vld [vmem:[%s267 + $0x90] sm:$0xff]
        %v2724 = vld [vmem:[%s267 + $0x98] sm:$0xff]
        %v2725 = vld [vmem:[%s267 + $0xa0] sm:$0xff]
        %v2726 = vld [vmem:[%s267 + $0xa8] sm:$0xff]
        %v2727 = vld [vmem:[%s267 + $0xb0] sm:$0xff]
        %v2728 = vld [vmem:[%s267 + $0xb8] sm:$0xff]
        %v2729 = vld [vmem:[%s267 + $0xc0] sm:$0xff]
        %v2730 = vld [vmem:[%s267 + $0xc8] sm:$0xff]
        %v2731 = vld [vmem:[%s267 + $0xd0] sm:$0xff]
        %v2732 = vld [vmem:[%s267 + $0xd8] sm:$0xff]
        %v2733 = vrot.slane %v2705, 6
        %v2734 = vrot.slane %v2706, 6
        %v2735 = vrot.slane %v2707, 6
        %v2736 = vrot.slane %v2708, 6
        %v2737 = vrot.slane %v2709, 6
        %v2738 = vrot.slane %v2710, 6
        %v2739 = vrot.slane %v2711, 6
        %v2740 = vrot.slane %v2712, 6
        %v2741 = vrot.slane %v2713, 6
        %v2742 = vrot.slane %v2714, 6
        %v2743 = vrot.slane %v2715, 6
        %v2744 = vrot.slane %v2716, 6
        %v2745 = vrot.slane %v2717, 6
        %v2746 = vrot.slane %v2718, 6
        %v2747 = vrot.slane %v2719, 6
        %v2748 = vrot.slane %v2720, 6
        %v2749 = vrot.slane %v2721, 6
        %v2750 = vrot.slane %v2722, 6
        %v2751 = vrot.slane %v2723, 6
        %v2752 = vrot.slane %v2724, 6
        %v2753 = vrot.slane %v2725, 6
        %v2754 = vrot.slane %v2726, 6
        %v2755 = vrot.slane %v2727, 6
        %v2756 = vrot.slane %v2728, 6
        %v2757 = vrot.slane %v2729, 6
        %v2758 = vrot.slane %v2730, 6
        %v2759 = vrot.slane %v2731, 6
        %v2760 = vrot.slane %v2732, 6
        %vm2761 = vcmp.lt.s32.totalorder %v658, 2
        %v2762 = vsel %vm2761, %v2759, %v2760
        %v2763 = vsel %vm2761, %v2758, %v2759
        %v2764 = vsel %vm2761, %v2757, %v2758
        %v2765 = vsel %vm2761, %v2756, %v2757
        %v2766 = vsel %vm2761, %v2755, %v2756
        %v2767 = vsel %vm2761, %v2754, %v2755
        %v2768 = vsel %vm2761, %v2753, %v2754
        %v2769 = vsel %vm2761, %v2752, %v2753
        %v2770 = vsel %vm2761, %v2751, %v2752
        %v2771 = vsel %vm2761, %v2750, %v2751
        %v2772 = vsel %vm2761, %v2749, %v2750
        %v2773 = vsel %vm2761, %v2748, %v2749
        %v2774 = vsel %vm2761, %v2747, %v2748
        %v2775 = vsel %vm2761, %v2746, %v2747
        %v2776 = vsel %vm2761, %v2745, %v2746
        %v2777 = vsel %vm2761, %v2744, %v2745
        %v2778 = vsel %vm2761, %v2743, %v2744
        %v2779 = vsel %vm2761, %v2742, %v2743
        %v2780 = vsel %vm2761, %v2741, %v2742
        %v2781 = vsel %vm2761, %v2740, %v2741
        %v2782 = vsel %vm2761, %v2739, %v2740
        %v2783 = vsel %vm2761, %v2738, %v2739
        %v2784 = vsel %vm2761, %v2737, %v2738
        %v2785 = vsel %vm2761, %v2736, %v2737
        %v2786 = vsel %vm2761, %v2735, %v2736
        %v2787 = vsel %vm2761, %v2734, %v2735
        %v2788 = vsel %vm2761, %v2733, %v2734
        %v2789 = vsel %vm2761, %v2760, %v2733
        %2790 = vst [vmem:[#allocation2] sm:$0xff] %v2788
        %2791 = vst [vmem:[#allocation2 + $0x8] sm:$0xff] %v2787
        %2792 = vst [vmem:[#allocation2 + $0x10] sm:$0xff] %v2786
        %2793 = vst [vmem:[#allocation2 + $0x18] sm:$0xff] %v2785
        %2794 = vst [vmem:[#allocation2 + $0x20] sm:$0xff] %v2784
        %2795 = vst [vmem:[#allocation2 + $0x28] sm:$0xff] %v2783
        %2796 = vst [vmem:[#allocation2 + $0x30] sm:$0xff] %v2782
        %2797 = vst [vmem:[#allocation2 + $0x38] sm:$0xff] %v2781
        %2798 = vst [vmem:[#allocation2 + $0x40] sm:$0xff] %v2780
        %2799 = vst [vmem:[#allocation2 + $0x48] sm:$0xff] %v2779
        %2800 = vst [vmem:[#allocation2 + $0x50] sm:$0xff] %v2778
        %2801 = vst [vmem:[#allocation2 + $0x58] sm:$0xff] %v2777
        %2802 = vst [vmem:[#allocation2 + $0x60] sm:$0xff] %v2776
        %2803 = vst [vmem:[#allocation2 + $0x68] sm:$0xff] %v2775
        %2804 = vst [vmem:[#allocation2 + $0x70] sm:$0xff] %v2774
        %2805 = vst [vmem:[#allocation2 + $0x78] sm:$0xff] %v2773
        %2806 = vst [vmem:[#allocation2 + $0x80] sm:$0xff] %v2772
        %2807 = vst [vmem:[#allocation2 + $0x88] sm:$0xff] %v2771
        %2808 = vst [vmem:[#allocation2 + $0x90] sm:$0xff] %v2770
        %2809 = vst [vmem:[#allocation2 + $0x98] sm:$0xff] %v2769
        %2810 = vst [vmem:[#allocation2 + $0xa0] sm:$0xff] %v2768
        %2811 = vst [vmem:[#allocation2 + $0xa8] sm:$0xff] %v2767
        %2812 = vst [vmem:[#allocation2 + $0xb0] sm:$0xff] %v2766
        %2813 = vst [vmem:[#allocation2 + $0xb8] sm:$0xff] %v2765
        %2814 = vst [vmem:[#allocation2 + $0xc0] sm:$0xff] %v2764
        %2815 = vst [vmem:[#allocation2 + $0xc8] sm:$0xff] %v2763
        %2816 = vst [vmem:[#allocation2 + $0xd0] sm:$0xff] %v2762
        %2817 = vst [vmem:[#allocation2 + $0xd8] sm:$0xff] %v2789
        %v2818 = vld [vmem:[#allocation2] sm:$0xff]
        %v2819 = vld [vmem:[#allocation2 + $0x8] sm:$0xff]
        %v2820 = vld [vmem:[#allocation2 + $0x10] sm:$0xff]
        %v2821 = vld [vmem:[#allocation2 + $0x18] sm:$0xff]
        %v2822 = vld [vmem:[#allocation2 + $0x20] sm:$0xff]
        %v2823 = vld [vmem:[#allocation2 + $0x28] sm:$0xff]
        %v2824 = vld [vmem:[#allocation2 + $0x30] sm:$0xff]
        %v2825 = vld [vmem:[#allocation2 + $0x38] sm:$0xff]
        %v2826 = vld [vmem:[#allocation2 + $0x40] sm:$0xff]
        %v2827 = vld [vmem:[#allocation2 + $0x48] sm:$0xff]
        %v2828 = vld [vmem:[#allocation2 + $0x50] sm:$0xff]
        %v2829 = vld [vmem:[#allocation2 + $0x58] sm:$0xff]
        %v2830 = vld [vmem:[#allocation2 + $0x60] sm:$0xff]
        %v2831 = vld [vmem:[#allocation2 + $0x68] sm:$0xff]
        %v2832 = vld [vmem:[#allocation2 + $0x70] sm:$0xff]
        %v2833 = vld [vmem:[#allocation2 + $0x78] sm:$0xff]
        %v2834 = vld [vmem:[%s275 + $0x6] sm:$0x1]
        %v2835 = vlaneseq
        %v2836 = vshrl.u32 %v2835, 7
        %v2837 = vsub.s32 0, %v2836
        %v2838 = vrot.slane %v2834, %v2837
        %v2839 = vmul.f32 %v2818, %v2838
        %v2840 = vmul.f32 %v2819, %v2838
        %v2841 = vmul.f32 %v2820, %v2838
        %v2842 = vmul.f32 %v2821, %v2838
        %v2843 = vmul.f32 %v2822, %v2838
        %v2844 = vmul.f32 %v2823, %v2838
        %v2845 = vmul.f32 %v2824, %v2838
        %v2846 = vmul.f32 %v2825, %v2838
        %v2847 = vmul.f32 %v2826, %v2838
        %v2848 = vmul.f32 %v2827, %v2838
        %v2849 = vmul.f32 %v2828, %v2838
        %v2850 = vmul.f32 %v2829, %v2838
        %v2851 = vmul.f32 %v2830, %v2838
        %v2852 = vmul.f32 %v2831, %v2838
        %v2853 = vmul.f32 %v2832, %v2838
        %v2854 = vmul.f32 %v2833, %v2838
        %v2855 = vadd.f32 %v2689, %v2839
        %v2856 = vadd.f32 %v2690, %v2840
        %v2857 = vadd.f32 %v2691, %v2841
        %v2858 = vadd.f32 %v2692, %v2842
        %v2859 = vadd.f32 %v2693, %v2843
        %v2860 = vadd.f32 %v2694, %v2844
        %v2861 = vadd.f32 %v2695, %v2845
        %v2862 = vadd.f32 %v2696, %v2846
        %v2863 = vadd.f32 %v2697, %v2847
        %v2864 = vadd.f32 %v2698, %v2848
        %v2865 = vadd.f32 %v2699, %v2849
        %v2866 = vadd.f32 %v2700, %v2850
        %v2867 = vadd.f32 %v2701, %v2851
        %v2868 = vadd.f32 %v2702, %v2852
        %v2869 = vadd.f32 %v2703, %v2853
        %v2870 = vadd.f32 %v2704, %v2854
        %v2871 = vld [vmem:[#allocation2 + $0x80] sm:$0xff]
        %v2872 = vld [vmem:[#allocation2 + $0x88] sm:$0xff]
        %v2873 = vld [vmem:[%s275 + $0xd] sm:$0x1]
        %v2874 = vlaneseq
        %v2875 = vshrl.u32 %v2874, 7
        %v2876 = vsub.s32 0, %v2875
        %v2877 = vrot.slane %v2873, %v2876
        %v2878 = vmul.f32 %v2820, %v2877
        %v2879 = vmul.f32 %v2821, %v2877
        %v2880 = vmul.f32 %v2822, %v2877
        %v2881 = vmul.f32 %v2823, %v2877
        %v2882 = vmul.f32 %v2824, %v2877
        %v2883 = vmul.f32 %v2825, %v2877
        %v2884 = vmul.f32 %v2826, %v2877
        %v2885 = vmul.f32 %v2827, %v2877
        %v2886 = vmul.f32 %v2828, %v2877
        %v2887 = vmul.f32 %v2829, %v2877
        %v2888 = vmul.f32 %v2830, %v2877
        %v2889 = vmul.f32 %v2831, %v2877
        %v2890 = vmul.f32 %v2832, %v2877
        %v2891 = vmul.f32 %v2833, %v2877
        %v2892 = vmul.f32 %v2871, %v2877
        %v2893 = vmul.f32 %v2872, %v2877
        %v2894 = vadd.f32 %v2855, %v2878
        %v2895 = vadd.f32 %v2856, %v2879
        %v2896 = vadd.f32 %v2857, %v2880
        %v2897 = vadd.f32 %v2858, %v2881
        %v2898 = vadd.f32 %v2859, %v2882
        %v2899 = vadd.f32 %v2860, %v2883
        %v2900 = vadd.f32 %v2861, %v2884
        %v2901 = vadd.f32 %v2862, %v2885
        %v2902 = vadd.f32 %v2863, %v2886
        %v2903 = vadd.f32 %v2864, %v2887
        %v2904 = vadd.f32 %v2865, %v2888
        %v2905 = vadd.f32 %v2866, %v2889
        %v2906 = vadd.f32 %v2867, %v2890
        %v2907 = vadd.f32 %v2868, %v2891
        %v2908 = vadd.f32 %v2869, %v2892
        %v2909 = vadd.f32 %v2870, %v2893
        %v2910 = vld [vmem:[#allocation2 + $0x90] sm:$0xff]
        %v2911 = vld [vmem:[#allocation2 + $0x98] sm:$0xff]
        %v2912 = vld [vmem:[%s275 + $0x14] sm:$0x1]
        %v2913 = vlaneseq
        %v2914 = vshrl.u32 %v2913, 7
        %v2915 = vsub.s32 0, %v2914
        %v2916 = vrot.slane %v2912, %v2915
        %v2917 = vmul.f32 %v2822, %v2916
        %v2918 = vmul.f32 %v2823, %v2916
        %v2919 = vmul.f32 %v2824, %v2916
        %v2920 = vmul.f32 %v2825, %v2916
        %v2921 = vmul.f32 %v2826, %v2916
        %v2922 = vmul.f32 %v2827, %v2916
        %v2923 = vmul.f32 %v2828, %v2916
        %v2924 = vmul.f32 %v2829, %v2916
        %v2925 = vmul.f32 %v2830, %v2916
        %v2926 = vmul.f32 %v2831, %v2916
        %v2927 = vmul.f32 %v2832, %v2916
        %v2928 = vmul.f32 %v2833, %v2916
        %v2929 = vmul.f32 %v2871, %v2916
        %v2930 = vmul.f32 %v2872, %v2916
        %v2931 = vmul.f32 %v2910, %v2916
        %v2932 = vmul.f32 %v2911, %v2916
        %v2933 = vadd.f32 %v2894, %v2917
        %v2934 = vadd.f32 %v2895, %v2918
        %v2935 = vadd.f32 %v2896, %v2919
        %v2936 = vadd.f32 %v2897, %v2920
        %v2937 = vadd.f32 %v2898, %v2921
        %v2938 = vadd.f32 %v2899, %v2922
        %v2939 = vadd.f32 %v2900, %v2923
        %v2940 = vadd.f32 %v2901, %v2924
        %v2941 = vadd.f32 %v2902, %v2925
        %v2942 = vadd.f32 %v2903, %v2926
        %v2943 = vadd.f32 %v2904, %v2927
        %v2944 = vadd.f32 %v2905, %v2928
        %v2945 = vadd.f32 %v2906, %v2929
        %v2946 = vadd.f32 %v2907, %v2930
        %v2947 = vadd.f32 %v2908, %v2931
        %v2948 = vadd.f32 %v2909, %v2932
        %v2949 = vld [vmem:[#allocation2 + $0xa0] sm:$0xff]
        %v2950 = vld [vmem:[#allocation2 + $0xa8] sm:$0xff]
        %v2951 = vld [vmem:[%s275 + $0x1b] sm:$0x1]
        %v2952 = vlaneseq
        %v2953 = vshrl.u32 %v2952, 7
        %v2954 = vsub.s32 0, %v2953
        %v2955 = vrot.slane %v2951, %v2954
        %v2956 = vmul.f32 %v2824, %v2955
        %v2957 = vmul.f32 %v2825, %v2955
        %v2958 = vmul.f32 %v2826, %v2955
        %v2959 = vmul.f32 %v2827, %v2955
        %v2960 = vmul.f32 %v2828, %v2955
        %v2961 = vmul.f32 %v2829, %v2955
        %v2962 = vmul.f32 %v2830, %v2955
        %v2963 = vmul.f32 %v2831, %v2955
        %v2964 = vmul.f32 %v2832, %v2955
        %v2965 = vmul.f32 %v2833, %v2955
        %v2966 = vmul.f32 %v2871, %v2955
        %v2967 = vmul.f32 %v2872, %v2955
        %v2968 = vmul.f32 %v2910, %v2955
        %v2969 = vmul.f32 %v2911, %v2955
        %v2970 = vmul.f32 %v2949, %v2955
        %v2971 = vmul.f32 %v2950, %v2955
        %v2972 = vadd.f32 %v2933, %v2956
        %v2973 = vadd.f32 %v2934, %v2957
        %v2974 = vadd.f32 %v2935, %v2958
        %v2975 = vadd.f32 %v2936, %v2959
        %v2976 = vadd.f32 %v2937, %v2960
        %v2977 = vadd.f32 %v2938, %v2961
        %v2978 = vadd.f32 %v2939, %v2962
        %v2979 = vadd.f32 %v2940, %v2963
        %v2980 = vadd.f32 %v2941, %v2964
        %v2981 = vadd.f32 %v2942, %v2965
        %v2982 = vadd.f32 %v2943, %v2966
        %v2983 = vadd.f32 %v2944, %v2967
        %v2984 = vadd.f32 %v2945, %v2968
        %v2985 = vadd.f32 %v2946, %v2969
        %v2986 = vadd.f32 %v2947, %v2970
        %v2987 = vadd.f32 %v2948, %v2971
        %v2988 = vld [vmem:[#allocation2 + $0xb0] sm:$0xff]
        %v2989 = vld [vmem:[#allocation2 + $0xb8] sm:$0xff]
        %v2990 = vld [vmem:[%s275 + $0x22] sm:$0x1]
        %v2991 = vlaneseq
        %v2992 = vshrl.u32 %v2991, 7
        %v2993 = vsub.s32 0, %v2992
        %v2994 = vrot.slane %v2990, %v2993
        %v2995 = vmul.f32 %v2826, %v2994
        %v2996 = vmul.f32 %v2827, %v2994
        %v2997 = vmul.f32 %v2828, %v2994
        %v2998 = vmul.f32 %v2829, %v2994
        %v2999 = vmul.f32 %v2830, %v2994
        %v3000 = vmul.f32 %v2831, %v2994
        %v3001 = vmul.f32 %v2832, %v2994
        %v3002 = vmul.f32 %v2833, %v2994
        %v3003 = vmul.f32 %v2871, %v2994
        %v3004 = vmul.f32 %v2872, %v2994
        %v3005 = vmul.f32 %v2910, %v2994
        %v3006 = vmul.f32 %v2911, %v2994
        %v3007 = vmul.f32 %v2949, %v2994
        %v3008 = vmul.f32 %v2950, %v2994
        %v3009 = vmul.f32 %v2988, %v2994
        %v3010 = vmul.f32 %v2989, %v2994
        %v3011 = vadd.f32 %v2972, %v2995
        %v3012 = vadd.f32 %v2973, %v2996
        %v3013 = vadd.f32 %v2974, %v2997
        %v3014 = vadd.f32 %v2975, %v2998
        %v3015 = vadd.f32 %v2976, %v2999
        %v3016 = vadd.f32 %v2977, %v3000
        %v3017 = vadd.f32 %v2978, %v3001
        %v3018 = vadd.f32 %v2979, %v3002
        %v3019 = vadd.f32 %v2980, %v3003
        %v3020 = vadd.f32 %v2981, %v3004
        %v3021 = vadd.f32 %v2982, %v3005
        %v3022 = vadd.f32 %v2983, %v3006
        %v3023 = vadd.f32 %v2984, %v3007
        %v3024 = vadd.f32 %v2985, %v3008
        %v3025 = vadd.f32 %v2986, %v3009
        %v3026 = vadd.f32 %v2987, %v3010
        %v3027 = vld [vmem:[#allocation2 + $0xc0] sm:$0xff]
        %v3028 = vld [vmem:[#allocation2 + $0xc8] sm:$0xff]
        %v3029 = vld [vmem:[%s275 + $0x29] sm:$0x1]
        %v3030 = vlaneseq
        %v3031 = vshrl.u32 %v3030, 7
        %v3032 = vsub.s32 0, %v3031
        %v3033 = vrot.slane %v3029, %v3032
        %v3034 = vmul.f32 %v2828, %v3033
        %v3035 = vmul.f32 %v2829, %v3033
        %v3036 = vmul.f32 %v2830, %v3033
        %v3037 = vmul.f32 %v2831, %v3033
        %v3038 = vmul.f32 %v2832, %v3033
        %v3039 = vmul.f32 %v2833, %v3033
        %v3040 = vmul.f32 %v2871, %v3033
        %v3041 = vmul.f32 %v2872, %v3033
        %v3042 = vmul.f32 %v2910, %v3033
        %v3043 = vmul.f32 %v2911, %v3033
        %v3044 = vmul.f32 %v2949, %v3033
        %v3045 = vmul.f32 %v2950, %v3033
        %v3046 = vmul.f32 %v2988, %v3033
        %v3047 = vmul.f32 %v2989, %v3033
        %v3048 = vmul.f32 %v3027, %v3033
        %v3049 = vmul.f32 %v3028, %v3033
        %v3050 = vadd.f32 %v3011, %v3034
        %v3051 = vadd.f32 %v3012, %v3035
        %v3052 = vadd.f32 %v3013, %v3036
        %v3053 = vadd.f32 %v3014, %v3037
        %v3054 = vadd.f32 %v3015, %v3038
        %v3055 = vadd.f32 %v3016, %v3039
        %v3056 = vadd.f32 %v3017, %v3040
        %v3057 = vadd.f32 %v3018, %v3041
        %v3058 = vadd.f32 %v3019, %v3042
        %v3059 = vadd.f32 %v3020, %v3043
        %v3060 = vadd.f32 %v3021, %v3044
        %v3061 = vadd.f32 %v3022, %v3045
        %v3062 = vadd.f32 %v3023, %v3046
        %v3063 = vadd.f32 %v3024, %v3047
        %v3064 = vadd.f32 %v3025, %v3048
        %v3065 = vadd.f32 %v3026, %v3049
        %v3066 = vld [vmem:[#allocation2 + $0x60] sm:$0xff]
        %v3067 = vld [vmem:[#allocation2 + $0x68] sm:$0xff]
        %v3068 = vld [vmem:[#allocation2 + $0x70] sm:$0xff]
        %v3069 = vld [vmem:[#allocation2 + $0x78] sm:$0xff]
        %v3070 = vld [vmem:[#allocation2 + $0x80] sm:$0xff]
        %v3071 = vld [vmem:[#allocation2 + $0x88] sm:$0xff]
        %v3072 = vld [vmem:[#allocation2 + $0x90] sm:$0xff]
        %v3073 = vld [vmem:[#allocation2 + $0x98] sm:$0xff]
        %v3074 = vld [vmem:[#allocation2 + $0xa0] sm:$0xff]
        %v3075 = vld [vmem:[#allocation2 + $0xa8] sm:$0xff]
        %v3076 = vld [vmem:[#allocation2 + $0xb0] sm:$0xff]
        %v3077 = vld [vmem:[#allocation2 + $0xb8] sm:$0xff]
        %v3078 = vld [vmem:[#allocation2 + $0xc0] sm:$0xff]
        %v3079 = vld [vmem:[#allocation2 + $0xc8] sm:$0xff]
        %v3080 = vld [vmem:[#allocation2 + $0xd0] sm:$0xff]
        %v3081 = vld [vmem:[#allocation2 + $0xd8] sm:$0xff]
        %v3082 = vld [vmem:[%s275 + $0x30] sm:$0x1]
        %v3083 = vlaneseq
        %v3084 = vshrl.u32 %v3083, 7
        %v3085 = vsub.s32 0, %v3084
        %v3086 = vrot.slane %v3082, %v3085
        %v3087 = vmul.f32 %v3066, %v3086
        %v3088 = vmul.f32 %v3067, %v3086
        %v3089 = vmul.f32 %v3068, %v3086
        %v3090 = vmul.f32 %v3069, %v3086
        %v3091 = vmul.f32 %v3070, %v3086
        %v3092 = vmul.f32 %v3071, %v3086
        %v3093 = vmul.f32 %v3072, %v3086
        %v3094 = vmul.f32 %v3073, %v3086
        %v3095 = vmul.f32 %v3074, %v3086
        %v3096 = vmul.f32 %v3075, %v3086
        %v3097 = vmul.f32 %v3076, %v3086
        %v3098 = vmul.f32 %v3077, %v3086
        %v3099 = vmul.f32 %v3078, %v3086
        %v3100 = vmul.f32 %v3079, %v3086
        %v3101 = vmul.f32 %v3080, %v3086
        %v3102 = vmul.f32 %v3081, %v3086
        %v3103 = vadd.f32 %v3050, %v3087
        %v3104 = vadd.f32 %v3051, %v3088
        %v3105 = vadd.f32 %v3052, %v3089
        %v3106 = vadd.f32 %v3053, %v3090
        %v3107 = vadd.f32 %v3054, %v3091
        %v3108 = vadd.f32 %v3055, %v3092
        %v3109 = vadd.f32 %v3056, %v3093
        %v3110 = vadd.f32 %v3057, %v3094
        %v3111 = vadd.f32 %v3058, %v3095
        %v3112 = vadd.f32 %v3059, %v3096
        %v3113 = vadd.f32 %v3060, %v3097
        %v3114 = vadd.f32 %v3061, %v3098
        %v3115 = vadd.f32 %v3062, %v3099
        %v3116 = vadd.f32 %v3063, %v3100
        %v3117 = vadd.f32 %v3064, %v3101
        %v3118 = vadd.f32 %v3065, %v3102
        %v3119 = vld [vmem:[%s3] sm:$0xff]
        %v3120 = vld [vmem:[%s3 + $0x8] sm:$0xff]
        %v3121 = vld [vmem:[%s3 + $0x10] sm:$0xff]
        %v3122 = vld [vmem:[%s3 + $0x18] sm:$0xff]
        %v3123 = vld [vmem:[%s3 + $0x20] sm:$0xff]
        %v3124 = vld [vmem:[%s3 + $0x28] sm:$0xff]
        %v3125 = vld [vmem:[%s3 + $0x30] sm:$0xff]
        %v3126 = vld [vmem:[%s3 + $0x38] sm:$0xff]
        %v3127 = vld [vmem:[%s3 + $0x40] sm:$0xff]
        %v3128 = vld [vmem:[%s3 + $0x48] sm:$0xff]
        %v3129 = vld [vmem:[%s3 + $0x50] sm:$0xff]
        %v3130 = vld [vmem:[%s3 + $0x58] sm:$0xff]
        %v3131 = vld [vmem:[%s3 + $0x60] sm:$0xff]
        %v3132 = vld [vmem:[%s3 + $0x68] sm:$0xff]
        %v3133 = vld [vmem:[%s3 + $0x70] sm:$0xff]
        %v3134 = vld [vmem:[%s3 + $0x78] sm:$0xff]
        %3136 = vset.pattern.permute.xlu0 0
        %3137 = vperm.xlu0 %3136, %v3119
        %v3138 = vpop.permute.xlu0 %3137
        %3141 = vset.pattern.permute.xlu0 0
        %3142 = vperm.xlu0 %3141, %v3120
        %v3143 = vpop.permute.xlu0 %3142
        %3146 = vset.pattern.permute.xlu0 0
        %3147 = vperm.xlu0 %3146, %v3121
        %v3148 = vpop.permute.xlu0 %3147
        %3151 = vset.pattern.permute.xlu0 0
        %3152 = vperm.xlu0 %3151, %v3122
        %v3153 = vpop.permute.xlu0 %3152
        %3156 = vset.pattern.permute.xlu0 0
        %3157 = vperm.xlu0 %3156, %v3123
        %v3158 = vpop.permute.xlu0 %3157
        %3161 = vset.pattern.permute.xlu0 0
        %3162 = vperm.xlu0 %3161, %v3124
        %v3163 = vpop.permute.xlu0 %3162
        %3166 = vset.pattern.permute.xlu0 0
        %3167 = vperm.xlu0 %3166, %v3125
        %v3168 = vpop.permute.xlu0 %3167
        %3171 = vset.pattern.permute.xlu0 0
        %3172 = vperm.xlu0 %3171, %v3126
        %v3173 = vpop.permute.xlu0 %3172
        %3176 = vset.pattern.permute.xlu0 0
        %3177 = vperm.xlu0 %3176, %v3127
        %v3178 = vpop.permute.xlu0 %3177
        %3181 = vset.pattern.permute.xlu0 0
        %3182 = vperm.xlu0 %3181, %v3128
        %v3183 = vpop.permute.xlu0 %3182
        %3186 = vset.pattern.permute.xlu0 0
        %3187 = vperm.xlu0 %3186, %v3129
        %v3188 = vpop.permute.xlu0 %3187
        %3191 = vset.pattern.permute.xlu0 0
        %3192 = vperm.xlu0 %3191, %v3130
        %v3193 = vpop.permute.xlu0 %3192
        %3196 = vset.pattern.permute.xlu0 0
        %3197 = vperm.xlu0 %3196, %v3131
        %v3198 = vpop.permute.xlu0 %3197
        %3201 = vset.pattern.permute.xlu0 0
        %3202 = vperm.xlu0 %3201, %v3132
        %v3203 = vpop.permute.xlu0 %3202
        %3206 = vset.pattern.permute.xlu0 0
        %3207 = vperm.xlu0 %3206, %v3133
        %v3208 = vpop.permute.xlu0 %3207
        %3211 = vset.pattern.permute.xlu0 0
        %3212 = vperm.xlu0 %3211, %v3134
        %v3213 = vpop.permute.xlu0 %3212
        %v3215 = vmul.f32 %v3103, %v3138
        %v3216 = vmul.f32 %v3104, %v3143
        %v3217 = vmul.f32 %v3105, %v3148
        %v3218 = vmul.f32 %v3106, %v3153
        %v3219 = vmul.f32 %v3107, %v3158
        %v3220 = vmul.f32 %v3108, %v3163
        %v3221 = vmul.f32 %v3109, %v3168
        %v3222 = vmul.f32 %v3110, %v3173
        %v3223 = vmul.f32 %v3111, %v3178
        %v3224 = vmul.f32 %v3112, %v3183
        %v3225 = vmul.f32 %v3113, %v3188
        %v3226 = vmul.f32 %v3114, %v3193
        %v3227 = vmul.f32 %v3115, %v3198
        %v3228 = vmul.f32 %v3116, %v3203
        %v3229 = vmul.f32 %v3117, %v3208
        %v3230 = vmul.f32 %v3118, %v3213
        %v3231 = vld [vmem:[%s306] sm:$0xff]
        %v3232 = vld [vmem:[%s306 + $0x8] sm:$0xff]
        %v3233 = vld [vmem:[%s306 + $0x10] sm:$0xff]
        %v3234 = vld [vmem:[%s306 + $0x18] sm:$0xff]
        %v3235 = vld [vmem:[%s306 + $0x20] sm:$0xff]
        %v3236 = vld [vmem:[%s306 + $0x28] sm:$0xff]
        %v3237 = vld [vmem:[%s306 + $0x30] sm:$0xff]
        %v3238 = vld [vmem:[%s306 + $0x38] sm:$0xff]
        %v3239 = vld [vmem:[%s306 + $0x40] sm:$0xff]
        %v3240 = vld [vmem:[%s306 + $0x48] sm:$0xff]
        %v3241 = vld [vmem:[%s306 + $0x50] sm:$0xff]
        %v3242 = vld [vmem:[%s306 + $0x58] sm:$0xff]
        %v3243 = vld [vmem:[%s306 + $0x60] sm:$0xff]
        %v3244 = vld [vmem:[%s306 + $0x68] sm:$0xff]
        %v3245 = vld [vmem:[%s306 + $0x70] sm:$0xff]
        %v3246 = vld [vmem:[%s306 + $0x78] sm:$0xff]
        %v3247 = vadd.f32 %v3215, %v3231
        %v3248 = vadd.f32 %v3216, %v3232
        %v3249 = vadd.f32 %v3217, %v3233
        %v3250 = vadd.f32 %v3218, %v3234
        %v3251 = vadd.f32 %v3219, %v3235
        %v3252 = vadd.f32 %v3220, %v3236
        %v3253 = vadd.f32 %v3221, %v3237
        %v3254 = vadd.f32 %v3222, %v3238
        %v3255 = vadd.f32 %v3223, %v3239
        %v3256 = vadd.f32 %v3224, %v3240
        %v3257 = vadd.f32 %v3225, %v3241
        %v3258 = vadd.f32 %v3226, %v3242
        %v3259 = vadd.f32 %v3227, %v3243
        %v3260 = vadd.f32 %v3228, %v3244
        %v3261 = vadd.f32 %v3229, %v3245
        %v3262 = vadd.f32 %v3230, %v3246
        %3263 = vst [vmem:[%s306] sm:$0xff] %v3247
        %3264 = vst [vmem:[%s306 + $0x8] sm:$0xff] %v3248
        %3265 = vst [vmem:[%s306 + $0x10] sm:$0xff] %v3249
        %3266 = vst [vmem:[%s306 + $0x18] sm:$0xff] %v3250
        %3267 = vst [vmem:[%s306 + $0x20] sm:$0xff] %v3251
        %3268 = vst [vmem:[%s306 + $0x28] sm:$0xff] %v3252
        %3269 = vst [vmem:[%s306 + $0x30] sm:$0xff] %v3253
        %3270 = vst [vmem:[%s306 + $0x38] sm:$0xff] %v3254
        %3271 = vst [vmem:[%s306 + $0x40] sm:$0xff] %v3255
        %3272 = vst [vmem:[%s306 + $0x48] sm:$0xff] %v3256
        %3273 = vst [vmem:[%s306 + $0x50] sm:$0xff] %v3257
        %3274 = vst [vmem:[%s306 + $0x58] sm:$0xff] %v3258
        %3275 = vst [vmem:[%s306 + $0x60] sm:$0xff] %v3259
        %3276 = vst [vmem:[%s306 + $0x68] sm:$0xff] %v3260
        %3277 = vst [vmem:[%s306 + $0x70] sm:$0xff] %v3261
        %3278 = vst [vmem:[%s306 + $0x78] sm:$0xff] %v3262
        %s3279 = sand.u32 %s128, 1
        %s3280 = scalar_lea.sflag [#allocation5], %s3279
        %s3281 = sand.u32 %s128, 1
        %s3282 = smul.addr %s3281, 128
        %s3283 = scalar_lea.vmem [#allocation7], %s3282
        // Predicated region
        $region79: #{tpu_custom_call.1} parent=69 // pred_check
          %p3284 = pneg %p138
        $region80: #{tpu_custom_call.1} parent=69 // pred_check_branch
          %3286 = sbr.rel (%p3284) target = $region82
        $region81: #{tpu_custom_call.1} parent=69 // pred_region
          %s3288 = ssub.s32 2048, 2048
          %3289 = vsyncadd %s3280, %s3288
          %s3290 = smul.addr %s21, 128
          %s3291 = scalar_lea.hbm %s4, %s3290
          %s3292 = sshll.u32 %s3283, 4
          %s3293 = int_to_ptr.vmem [resolvable:$true] %s3292
          %3298 = dma.vmem_to_hbm [thread:$0]  %s3293, 2048, %s3291, %s3280, 128, 256, 8
        $region82: #{tpu_custom_call.1} parent=69 // pred_fallthru
          _
      $region70: #{tpu_custom_call.1} parent=5 // pred_fallthru
        _
      %p3299 = scmp.le.s32.totalorder 2, %s16
      // Predicated region
      $region83: #{tpu_custom_call.1} parent=5 // pred_check
        %p3300 = pneg %p3299
      $region84: #{tpu_custom_call.1} parent=5 // pred_check_branch
        %3302 = sbr.rel (%p3300) target = $region86
      $region85: #{tpu_custom_call.1} parent=5 // pred_region
        %s3303 = ssub.s32 %s16, 2
        // Predicated region
        $region87: #{tpu_custom_call.1} parent=85 // pred_check
          %p3304 = pneg %p144
        $region88: #{tpu_custom_call.1} parent=85 // pred_check_branch
          %3306 = sbr.rel (%p3304) target = $region90
        $region89: #{tpu_custom_call.1} parent=85 // pred_region
          %s3307 = sand.u32 %s129, 1
          %s3308 = scalar_lea.sflag [#allocation5], %s3307
          %s3309 = sand.u32 %s129, 1
          %s3310 = smul.addr %s3309, 128
          %s3311 = scalar_lea.vmem [#allocation7], %s3310
          %3312 = dma.done %s3308, 2048
        $region90: #{tpu_custom_call.1} parent=85 // pred_fallthru
          _
      $region86: #{tpu_custom_call.1} parent=5 // pred_fallthru
        _
    $region6: #{tpu_custom_call.1} parent=1 // loop_footer
      %s20 = sadd.s32 1, %s16
    $region7: #{tpu_custom_call.1} parent=1 // loop_footer_branch
      %15 = sbr.rel target = $region3
    $region8: #{tpu_custom_call.1} parent=1 // loop_exit
      _
    %3313 = vsyncpa [#allocation4], 1
    %s3314 = scalar_lea.sflag [#allocation4], 1
    %3315 = vsyncpa %s3314, 1
    %3316 = vsyncpa [#allocation5], 1
    %s3317 = scalar_lea.sflag [#allocation5], 1
    %3318 = vsyncpa %s3317, 1

</llo_original>
